<compile_context>
chip_gen: v5e
topology: v5e:2x2
jax: 0.10.0
libtpu: 0.0.40
codegen_flags: <defaults>
</compile_context>

<pallas_src>
import math

import jax
import jax.numpy as jnp
from jax.experimental import pallas as pl
from jax.experimental.pallas import tpu as pltpu

# ---------------------------------------------------------------------------
# Config consistent with the module's __init__ arithmetic
# ---------------------------------------------------------------------------
SEQ_LEN    = 48
PRED_LEN   = 12
D_MODEL    = 32            # divisible by 4
ENC_IN     = 5             # channel 0 = endogenous, channels 1.. = exogenous
C_OUT      = 5
D_FF       = 16
N_HEADS    = 8
STRIDE     = 4
PATCH_LEN  = 8
MOVING_AVG = 25
SHORT_LEN  = 36
PATCH_NUM  = (SEQ_LEN + STRIDE * 2 - PATCH_LEN) // STRIDE   # 12
D3         = D_MODEL // 4 * 3                               # 24
D4         = D_MODEL // 4                                   # 8
BN_EPS     = 1e-5
EMB_HALF   = PATCH_NUM * D3                                 # 288 (per-branch embed width)

PARAM_ORDER = (
    'm_embed', 'pos_flat', 'w_conv_s', 'w_conv_t', 'b_conv',
    'w_ex1', 'b_ex1', 'w_ex2e', 'b_ex2', 'w_ex3', 'b_ex3', 'a_ex', 'c_ex',
    'w_lt', 'b_lt', 'a_lt', 'c_lt',
    'w_dt', 'b_dt', 'a_dec', 'c_dec', 'w_dv', 'b_dv',
)


# ---------------------------------------------------------------------------
# Init-time helpers (host/XLA side, computed once)
# ---------------------------------------------------------------------------
def positional_embedding(num_pos, d):
    position = jnp.arange(num_pos, dtype=jnp.float32)[:, None]
    div_term = jnp.exp(jnp.arange(0, d, 2, dtype=jnp.float32)
                       * -(math.log(10000.0) / d))
    pe = jnp.zeros((num_pos, d), jnp.float32)
    pe = pe.at[:, 0::2].set(jnp.sin(position * div_term))
    pe = pe.at[:, 1::2].set(jnp.cos(position * div_term))
    return pe


def _moving_avg_matrix():
    """series_decomp trend as a matrix:  trend = series @ A  (replicate-padded,
    kernel=MOVING_AVG, stride 1).  A[s, t] = (1/k) * #{j : clip(t+j-half,0,L-1)==s}."""
    half = (MOVING_AVG - 1) // 2
    t = jnp.arange(SEQ_LEN)
    j = jnp.arange(MOVING_AVG)
    src = jnp.clip(t[None, :] + j[:, None] - half, 0, SEQ_LEN - 1)        # [k, L]
    onehot = jax.nn.one_hot(src, SEQ_LEN, dtype=jnp.float32)              # [k, L(t), L(s)]
    return jnp.sum(onehot, axis=0).T / MOVING_AVG                         # [L(s), L(t)]


def _patch_embed_matrix(w_pe):
    """ReplicationPad1d((0, stride)) + unfold(patch_len, stride) + Linear(patch_len->D3)
    folded into one matrix U:  emb_flat = series @ U,  U[s, p*D3+d]."""
    src = jnp.minimum(jnp.arange(PATCH_NUM)[:, None] * STRIDE
                      + jnp.arange(PATCH_LEN)[None, :], SEQ_LEN - 1)      # [P, K]
    sel = jax.nn.one_hot(src, SEQ_LEN, dtype=jnp.float32)                 # [P, K, L]
    u = jnp.einsum('pks,kd->spd', sel, w_pe)                              # [L, P, D3]
    return u.reshape(SEQ_LEN, PATCH_NUM * D3)


# ---------------------------------------------------------------------------
# The fused kernel
# ---------------------------------------------------------------------------
def light_time_kernel(
    # data
    x_ref, xen_ref,
    # endogenous branch params
    m_ref, pos_ref, wcs_ref, wct_ref, bconv_ref,
    # exogenous branch params
    wex1_ref, bex1_ref, wex2_ref, bex2_ref, wex3_ref, bex3_ref, aex_ref, cex_ref,
    # Linear_Time params
    wlt_ref, blt_ref, alt_ref, clt_ref,
    # decoder params
    wdt_ref, bdt_ref, adec_ref, cdec_ref, wdv_ref, bdv_ref,
    # output
    out_ref,
    # VMEM scratch
    pad_s_ref, pad_t_ref, enc_ref,
):
    f32 = jnp.float32

    # --- instance normalisation over time (Non-stationary style) -------------
    x = x_ref[...]                                    # [1, L, C]
    mean = jnp.mean(x, axis=1, keepdims=True)         # [1, 1, C]
    xc = x - mean
    var = jnp.mean(xc * xc, axis=1, keepdims=True)    # unbiased=False
    std = jnp.sqrt(var + 1e-5)                        # [1, 1, C]

    # --- endogenous branch: decomp + patchify + value_embedding (one matmul) -
    x_en = (xen_ref[...] - mean[:, :, 0:1]) / std[:, :, 0:1]          # [1, 1, L]
    emb = jnp.einsum('bct,tm->bcm', x_en, m_ref[...],
                     preferred_element_type=f32) + pos_ref[...]       # [1, 1, 2*P*D3]

    # scatter patch embeddings into zero-padded single-channel conv inputs
    pad_s_ref[...] = jnp.zeros(pad_s_ref.shape, f32)
    pad_t_ref[...] = jnp.zeros(pad_t_ref.shape, f32)
    for p in range(PATCH_NUM):
        lo = p * D3
        pad_s_ref[:, 2 + p:3 + p, 2:2 + D3] = emb[:, :, lo:lo + D3]
        pad_t_ref[:, 2 + p:3 + p, 2:2 + D3] = emb[:, :, EMB_HALF + lo:EMB_HALF + lo + D3]

    # --- seasonal_conv + trend_conv (5x5, stride 1, pad 2), summed ------------
    ws = wcs_ref[...]                                 # [5, 5]
    wt = wct_ref[...]                                 # [5, 5]
    sp = pad_s_ref[...]                               # [1, P+4, D3+4]
    tp = pad_t_ref[...]
    acc = jnp.zeros((1, PATCH_NUM, D3), f32)
    for i in range(5):
        for j in range(5):
            acc = (acc
                   + ws[i:i + 1, j:j + 1] * sp[:, i:i + PATCH_NUM, j:j + D3]
                   + wt[i:i + 1, j:j + 1] * tp[:, i:i + PATCH_NUM, j:j + D3])
    enc = acc + bconv_ref[...]                        # [1, P, D3]   (+ b_s + b_t)

    # --- Linear_Time: Linear(P->H) + BatchNorm1d(D3) + ReLU  (kept as [1,D3,H]) ---
    enc_t = jnp.swapaxes(enc, 1, 2)                   # [1, D3, P]
    lt = jnp.einsum('bdp,ph->bdh', enc_t, wlt_ref[...],
                    preferred_element_type=f32) + blt_ref[...]
    lt = lt * alt_ref[...][None] + clt_ref[...][None]
    en_dh = jnp.maximum(lt, 0.0)                      # [1, D3, H]

    # --- exogenous encoder ----------------------------------------------------
    x_ex = xc[:, SEQ_LEN - SHORT_LEN:, 1:] / std[:, :, 1:]            # [1, 36, C-1]
    r1 = jnp.einsum('btc,cf->btf', x_ex, wex1_ref[...],
                    preferred_element_type=f32) + bex1_ref[...]
    r1 = jnp.maximum(r1, 0.0)                         # [1, 36, D_FF]
    r1t = jnp.swapaxes(r1, 1, 2)                      # [1, D_FF, 36]
    r2 = jnp.einsum('bft,th->bfh', r1t, wex2_ref[...],    # ::3 subsample folded in wex2e
                    preferred_element_type=f32) + bex2_ref[...]
    r2 = jnp.maximum(r2, 0.0)                         # [1, D_FF, H]
    r2t = jnp.swapaxes(r2, 1, 2)                      # [1, H, D_FF]
    r3 = jnp.einsum('bhf,fd->bhd', r2t, wex3_ref[...],
                    preferred_element_type=f32) + bex3_ref[...]       # [1, H, D4]
    r3 = r3 * aex_ref[...][None] + cex_ref[...][None]                 # BN over heads
    ex_dh = jnp.swapaxes(jnp.maximum(r3, 0.0), 1, 2)                  # [1, D4, H]

    # --- concat endo/exo tokens along d_model via VMEM scratch (no HBM trip) --
    enc_ref[:, :D3, :] = en_dh
    enc_ref[:, D3:, :] = ex_dh
    enc_all = enc_ref[...]                            # [1, D_MODEL, H]

    # --- decoder: TimeExpend + BN + ReLU + varShrink, then de-normalisation ---
    t = jnp.einsum('bdh,hp->bdp', enc_all, wdt_ref[...],
                   preferred_element_type=f32) + bdt_ref[...]         # [1, D_MODEL, PRED]
    t = t * adec_ref[...][None] + cdec_ref[...][None]
    t = jnp.maximum(t, 0.0)
    tt = jnp.swapaxes(t, 1, 2)                        # [1, PRED, D_MODEL]
    o = jnp.einsum('bpd,dc->bpc', tt, wdv_ref[...],
                   preferred_element_type=f32) + bdv_ref[...]         # [1, PRED, C_OUT]
    out_ref[...] = o * std + mean


# ---------------------------------------------------------------------------
# Wrapper: one pallas_call, grid over batch (parallel -> v7x dual-TC)
# ---------------------------------------------------------------------------
def light_time_forward(x, params):
    B = x.shape[0]
    # only out-of-kernel op: tiny time-on-lane view of the endogenous channel
    x_en_row = x[:, :, 0][:, None, :]                 # [B, 1, L]

    plist = [params[k] for k in PARAM_ORDER]
    in_specs = [
        pl.BlockSpec((1, SEQ_LEN, ENC_IN), lambda b: (b, 0, 0)),
        pl.BlockSpec((1, 1, SEQ_LEN), lambda b: (b, 0, 0)),
    ]
    for arr in plist:
        in_specs.append(pl.BlockSpec(arr.shape, lambda b, n=arr.ndim: (0,) * n))

    return pl.pallas_call(
        light_time_kernel,
        out_shape=jax.ShapeDtypeStruct((B, PRED_LEN, C_OUT), jnp.float32),
        grid=(B,),
        in_specs=in_specs,
        out_specs=pl.BlockSpec((1, PRED_LEN, C_OUT), lambda b: (b, 0, 0)),
        scratch_shapes=[
            pltpu.VMEM((1, PATCH_NUM + 4, D3 + 4), jnp.float32),   # zero-padded seasonal conv input
            pltpu.VMEM((1, PATCH_NUM + 4, D3 + 4), jnp.float32),   # zero-padded trend conv input
            pltpu.VMEM((1, D_MODEL, N_HEADS), jnp.float32),        # concatenated encoder tokens
        ],
        compiler_params=pltpu.CompilerParams(dimension_semantics=("parallel",)),
    )(x, x_en_row, *plist)


# ---------------------------------------------------------------------------
# Deterministic parameter init (fresh-module shapes; eval-mode BN folded to a,c;
# decomp/patchify/value-embed and the ::3 subsample folded into matrices)
# ---------------------------------------------------------------------------
def init_params(key):
    keys = iter(jax.random.split(key, 32))

    def nrm(shape, scale):
        return jax.random.normal(next(keys), shape, jnp.float32) * scale

    def linear(fan_in, fan_out):
        s = 1.0 / math.sqrt(fan_in)
        w = jax.random.uniform(next(keys), (fan_in, fan_out), jnp.float32, -s, s)
        b = jax.random.uniform(next(keys), (fan_out,), jnp.float32, -s, s)
        return w, b

    def bn_fold(n):
        # eval-mode BatchNorm1d with running_mean=0, running_var=1 -> y = a*x + c
        gamma = 1.0 + 0.05 * jax.random.normal(next(keys), (n,), jnp.float32)
        beta = 0.05 * jax.random.normal(next(keys), (n,), jnp.float32)
        a = gamma / jnp.sqrt(1.0 + BN_EPS)
        return a.reshape(n, 1), beta.reshape(n, 1)

    p = {}
    # 5x5 single-channel convs (seasonal_conv / trend_conv)
    p['w_conv_s'] = nrm((5, 5), 0.2)
    b_conv_s = nrm((1,), 0.2)
    p['w_conv_t'] = nrm((5, 5), 0.2)
    b_conv_t = nrm((1,), 0.2)
    p['b_conv'] = (b_conv_s + b_conv_t).reshape(1, 1)   # branch outputs are summed

    # value embeddings: Linear(patch_len -> D3, bias=False), one per branch
    w_pe_s, _ = linear(PATCH_LEN, D3)
    w_pe_t, _ = linear(PATCH_LEN, D3)

    # fold series_decomp + ReplicationPad1d + unfold + value_embedding into one matmul
    a_trend = _moving_avg_matrix()
    a_season = jnp.eye(SEQ_LEN, dtype=jnp.float32) - a_trend
    p['m_embed'] = jnp.concatenate(
        [a_season @ _patch_embed_matrix(w_pe_s),
         a_trend @ _patch_embed_matrix(w_pe_t)], axis=1)              # [L, 2*P*D3]
    pos = positional_embedding(PATCH_NUM, D3)                         # fixed sinusoidal
    p['pos_flat'] = jnp.tile(pos.reshape(1, PATCH_NUM * D3), (1, 2))  # [1, 2*P*D3]

    # exogenous encoder
    p['w_ex1'], b_ex1 = linear(ENC_IN - 1, D_FF)                      # ex_varMix
    w_ex2, b_ex2 = linear(SHORT_LEN // 3, N_HEADS)                    # ex_timeShrink
    p['w_ex2e'] = jnp.zeros((SHORT_LEN, N_HEADS), jnp.float32).at[::3].set(w_ex2)
    p['w_ex3'], b_ex3 = linear(D_FF, D4)                              # ex_dModel
    p['b_ex1'] = b_ex1.reshape(1, -1)
    p['b_ex2'] = b_ex2.reshape(1, -1)
    p['b_ex3'] = b_ex3.reshape(1, -1)
    p['a_ex'], p['c_ex'] = bn_fold(N_HEADS)                           # ex_batchNormal

    # Linear_Time
    p['w_lt'], b_lt = linear(PATCH_NUM, N_HEADS)
    p['b_lt'] = b_lt.reshape(1, -1)
    p['a_lt'], p['c_lt'] = bn_fold(D3)

    # decoder
    p['w_dt'], b_dt = linear(N_HEADS, PRED_LEN)                       # decoder_TimeExpend
    p['b_dt'] = b_dt.reshape(1, -1)
    p['a_dec'], p['c_dec'] = bn_fold(D_MODEL)                         # decoder_batchNormal
    p['w_dv'], b_dv = linear(D_MODEL, C_OUT)                          # decoder_varShrink
    p['b_dv'] = b_dv.reshape(1, -1)
    return p


# ---------------------------------------------------------------------------
if __name__ == "__main__":
    key = jax.random.PRNGKey(0)
    k_x, k_p = jax.random.split(key)

    B = 2
    x_enc = jax.random.normal(k_x, (B, SEQ_LEN, ENC_IN), jnp.float32)
    # (x_mark_enc, x_dec, x_mark_dec of the PyTorch signature are unused in forecast)

    params = init_params(k_p)
    fwd = jax.jit(light_time_forward)
    out = jax.block_until_ready(fwd(x_enc, params))

    assert out.shape == (B, PRED_LEN, C_OUT), out.shape
    assert bool(jnp.all(jnp.isfinite(out)))
    print("KERNEL_OK")
</pallas_src>

<mosaic_0001>
module attributes {stable_mosaic.version = 11 : i64} {
  func.func @light_time_kernel(%arg0: i32, %arg1: memref<1x48x5xf32, #tpu.memory_space<vmem>>, %arg2: memref<1x1x48xf32, #tpu.memory_space<vmem>>, %arg3: memref<48x576xf32, #tpu.memory_space<vmem>>, %arg4: memref<1x576xf32, #tpu.memory_space<vmem>>, %arg5: memref<5x5xf32, #tpu.memory_space<vmem>>, %arg6: memref<5x5xf32, #tpu.memory_space<vmem>>, %arg7: memref<1x1xf32, #tpu.memory_space<vmem>>, %arg8: memref<4x16xf32, #tpu.memory_space<vmem>>, %arg9: memref<1x16xf32, #tpu.memory_space<vmem>>, %arg10: memref<36x8xf32, #tpu.memory_space<vmem>>, %arg11: memref<1x8xf32, #tpu.memory_space<vmem>>, %arg12: memref<16x8xf32, #tpu.memory_space<vmem>>, %arg13: memref<1x8xf32, #tpu.memory_space<vmem>>, %arg14: memref<8x1xf32, #tpu.memory_space<vmem>>, %arg15: memref<8x1xf32, #tpu.memory_space<vmem>>, %arg16: memref<12x8xf32, #tpu.memory_space<vmem>>, %arg17: memref<1x8xf32, #tpu.memory_space<vmem>>, %arg18: memref<24x1xf32, #tpu.memory_space<vmem>>, %arg19: memref<24x1xf32, #tpu.memory_space<vmem>>, %arg20: memref<8x12xf32, #tpu.memory_space<vmem>>, %arg21: memref<1x12xf32, #tpu.memory_space<vmem>>, %arg22: memref<32x1xf32, #tpu.memory_space<vmem>>, %arg23: memref<32x1xf32, #tpu.memory_space<vmem>>, %arg24: memref<32x5xf32, #tpu.memory_space<vmem>>, %arg25: memref<1x5xf32, #tpu.memory_space<vmem>>, %arg26: memref<1x12x5xf32, #tpu.memory_space<vmem>>, %arg27: memref<1x16x28xf32, #tpu.memory_space<vmem>>, %arg28: memref<1x16x28xf32, #tpu.memory_space<vmem>>, %arg29: memref<1x32x8xf32, #tpu.memory_space<vmem>>) attributes {dimension_semantics = [#tpu.dimension_semantics<parallel>], iteration_bounds = array<i64: 2>, scalar_prefetch = 0 : i64, scratch_operands = 3 : i64, tpu.core_type = #tpu.core_type<tc>, window_params = [{transform_indices = @transform_0, window_bounds = array<i64: 1, 48, 5>}, {transform_indices = @transform_1, window_bounds = array<i64: 1, 1, 48>}, {pipeline_mode = #tpu.pipeline_mode<synchronous>, transform_indices = @transform_2, window_bounds = array<i64: 48, 576>}, {pipeline_mode = #tpu.pipeline_mode<synchronous>, transform_indices = @transform_3, window_bounds = array<i64: 1, 576>}, {pipeline_mode = #tpu.pipeline_mode<synchronous>, transform_indices = @transform_4, window_bounds = array<i64: 5, 5>}, {pipeline_mode = #tpu.pipeline_mode<synchronous>, transform_indices = @transform_5, window_bounds = array<i64: 5, 5>}, {pipeline_mode = #tpu.pipeline_mode<synchronous>, transform_indices = @transform_6, window_bounds = array<i64: 1, 1>}, {pipeline_mode = #tpu.pipeline_mode<synchronous>, transform_indices = @transform_7, window_bounds = array<i64: 4, 16>}, {pipeline_mode = #tpu.pipeline_mode<synchronous>, transform_indices = @transform_8, window_bounds = array<i64: 1, 16>}, {pipeline_mode = #tpu.pipeline_mode<synchronous>, transform_indices = @transform_9, window_bounds = array<i64: 36, 8>}, {pipeline_mode = #tpu.pipeline_mode<synchronous>, transform_indices = @transform_10, window_bounds = array<i64: 1, 8>}, {pipeline_mode = #tpu.pipeline_mode<synchronous>, transform_indices = @transform_11, window_bounds = array<i64: 16, 8>}, {pipeline_mode = #tpu.pipeline_mode<synchronous>, transform_indices = @transform_12, window_bounds = array<i64: 1, 8>}, {pipeline_mode = #tpu.pipeline_mode<synchronous>, transform_indices = @transform_13, window_bounds = array<i64: 8, 1>}, {pipeline_mode = #tpu.pipeline_mode<synchronous>, transform_indices = @transform_14, window_bounds = array<i64: 8, 1>}, {pipeline_mode = #tpu.pipeline_mode<synchronous>, transform_indices = @transform_15, window_bounds = array<i64: 12, 8>}, {pipeline_mode = #tpu.pipeline_mode<synchronous>, transform_indices = @transform_16, window_bounds = array<i64: 1, 8>}, {pipeline_mode = #tpu.pipeline_mode<synchronous>, transform_indices = @transform_17, window_bounds = array<i64: 24, 1>}, {pipeline_mode = #tpu.pipeline_mode<synchronous>, transform_indices = @transform_18, window_bounds = array<i64: 24, 1>}, {pipeline_mode = #tpu.pipeline_mode<synchronous>, transform_indices = @transform_19, window_bounds = array<i64: 8, 12>}, {pipeline_mode = #tpu.pipeline_mode<synchronous>, transform_indices = @transform_20, window_bounds = array<i64: 1, 12>}, {pipeline_mode = #tpu.pipeline_mode<synchronous>, transform_indices = @transform_21, window_bounds = array<i64: 32, 1>}, {pipeline_mode = #tpu.pipeline_mode<synchronous>, transform_indices = @transform_22, window_bounds = array<i64: 32, 1>}, {pipeline_mode = #tpu.pipeline_mode<synchronous>, transform_indices = @transform_23, window_bounds = array<i64: 32, 5>}, {pipeline_mode = #tpu.pipeline_mode<synchronous>, transform_indices = @transform_24, window_bounds = array<i64: 1, 5>}, {transform_indices = @transform_25, window_bounds = array<i64: 1, 12, 5>}]} {
    %c0 = arith.constant 0 : index
    %c0_0 = arith.constant 0 : index
    %c0_1 = arith.constant 0 : index
    %0 = vector.load %arg1[%c0, %c0_0, %c0_1] : memref<1x48x5xf32, #tpu.memory_space<vmem>>, vector<1x48x5xf32>
    %cst = arith.constant dense<0.000000e+00> : vector<1x5xf32>
    %1 = vector.multi_reduction <add>, %0, %cst [1] : vector<1x48x5xf32> to vector<1x5xf32>
    %2 = vector.shape_cast %1 : vector<1x5xf32> to vector<1x1x5xf32>
    %cst_2 = arith.constant 4.800000e+01 : f32
    %3 = vector.broadcast %cst_2 : f32 to vector<1x1x5xf32>
    %4 = arith.divf %2, %3 : vector<1x1x5xf32>
    %5 = vector.broadcast %4 : vector<1x1x5xf32> to vector<1x48x5xf32>
    %6 = arith.subf %0, %5 : vector<1x48x5xf32>
    %7 = arith.mulf %6, %6 : vector<1x48x5xf32>
    %cst_3 = arith.constant dense<0.000000e+00> : vector<1x5xf32>
    %8 = vector.multi_reduction <add>, %7, %cst_3 [1] : vector<1x48x5xf32> to vector<1x5xf32>
    %9 = vector.shape_cast %8 : vector<1x5xf32> to vector<1x1x5xf32>
    %cst_4 = arith.constant 4.800000e+01 : f32
    %10 = vector.broadcast %cst_4 : f32 to vector<1x1x5xf32>
    %11 = arith.divf %9, %10 : vector<1x1x5xf32>
    %cst_5 = arith.constant 9.99999974E-6 : f32
    %12 = vector.broadcast %cst_5 : f32 to vector<1x1x5xf32>
    %13 = arith.addf %11, %12 : vector<1x1x5xf32>
    %14 = math.sqrt %13 : vector<1x1x5xf32>
    %c0_6 = arith.constant 0 : index
    %c0_7 = arith.constant 0 : index
    %c0_8 = arith.constant 0 : index
    %15 = vector.load %arg2[%c0_6, %c0_7, %c0_8] : memref<1x1x48xf32, #tpu.memory_space<vmem>>, vector<1x1x48xf32>
    %16 = vector.extract_strided_slice %4 {offsets = [0, 0, 0], sizes = [1, 1, 1], strides = [1, 1, 1]} : vector<1x1x5xf32> to vector<1x1x1xf32>
    %17 = vector.broadcast %16 : vector<1x1x1xf32> to vector<1x1x48xf32>
    %18 = arith.subf %15, %17 : vector<1x1x48xf32>
    %19 = vector.extract_strided_slice %14 {offsets = [0, 0, 0], sizes = [1, 1, 1], strides = [1, 1, 1]} : vector<1x1x5xf32> to vector<1x1x1xf32>
    %20 = vector.broadcast %19 : vector<1x1x1xf32> to vector<1x1x48xf32>
    %21 = arith.divf %18, %20 : vector<1x1x48xf32>
    %c0_9 = arith.constant 0 : index
    %c0_10 = arith.constant 0 : index
    %22 = vector.load %arg3[%c0_9, %c0_10] : memref<48x576xf32, #tpu.memory_space<vmem>>, vector<48x576xf32>
    "tpu.trace_start"() <{level = 10 : i32, message = "bct,tm->bcm"}> : () -> ()
    %cst_11 = arith.constant dense<0.000000e+00> : vector<1x1x576xf32>
    %23 = tpu.matmul %21, %22, %cst_11 {dimension_numbers = #tpu.dot_dimension_numbers<[2], [0], [0, 1], [1], [0, 0, 0, 1, 1, 1], [], []>} : vector<1x1x48xf32>, vector<48x576xf32>, vector<1x1x576xf32> -> vector<1x1x576xf32>
    "tpu.trace_stop"() : () -> ()
    %c0_12 = arith.constant 0 : index
    %c0_13 = arith.constant 0 : index
    %24 = vector.load %arg4[%c0_12, %c0_13] : memref<1x576xf32, #tpu.memory_space<vmem>>, vector<1x576xf32>
    %25 = vector.shape_cast %24 : vector<1x576xf32> to vector<1x1x576xf32>
    %26 = arith.addf %23, %25 : vector<1x1x576xf32>
    %cst_14 = arith.constant 0.000000e+00 : f32
    %27 = vector.broadcast %cst_14 : f32 to vector<1x16x28xf32>
    %c0_15 = arith.constant 0 : index
    %c0_16 = arith.constant 0 : index
    %c0_17 = arith.constant 0 : index
    %28 = vector.load %arg27[%c0_15, %c0_16, %c0_17] : memref<1x16x28xf32, #tpu.memory_space<vmem>>, vector<1x16x28xf32>
    tpu.vector_store %arg27[%c0_15, %c0_16, %c0_17], %27 {strides = array<i32>} : memref<1x16x28xf32, #tpu.memory_space<vmem>>, vector<1x16x28xf32>,
    %cst_18 = arith.constant 0.000000e+00 : f32
    %29 = vector.broadcast %cst_18 : f32 to vector<1x16x28xf32>
    %c0_19 = arith.constant 0 : index
    %c0_20 = arith.constant 0 : index
    %c0_21 = arith.constant 0 : index
    %30 = vector.load %arg28[%c0_19, %c0_20, %c0_21] : memref<1x16x28xf32, #tpu.memory_space<vmem>>, vector<1x16x28xf32>
    tpu.vector_store %arg28[%c0_19, %c0_20, %c0_21], %29 {strides = array<i32>} : memref<1x16x28xf32, #tpu.memory_space<vmem>>, vector<1x16x28xf32>,
    %31 = vector.extract_strided_slice %26 {offsets = [0, 0, 0], sizes = [1, 1, 24], strides = [1, 1, 1]} : vector<1x1x576xf32> to vector<1x1x24xf32>
    %c0_22 = arith.constant 0 : index
    %c2 = arith.constant 2 : index
    %c2_23 = arith.constant 2 : index
    %32 = vector.load %arg27[%c0_22, %c2, %c2_23] : memref<1x16x28xf32, #tpu.memory_space<vmem>>, vector<1x1x24xf32>
    tpu.vector_store %arg27[%c0_22, %c2, %c2_23], %31 {strides = array<i32>} : memref<1x16x28xf32, #tpu.memory_space<vmem>>, vector<1x1x24xf32>,
    %33 = vector.extract_strided_slice %26 {offsets = [0, 0, 288], sizes = [1, 1, 24], strides = [1, 1, 1]} : vector<1x1x576xf32> to vector<1x1x24xf32>
    %c0_24 = arith.constant 0 : index
    %c2_25 = arith.constant 2 : index
    %c2_26 = arith.constant 2 : index
    %34 = vector.load %arg28[%c0_24, %c2_25, %c2_26] : memref<1x16x28xf32, #tpu.memory_space<vmem>>, vector<1x1x24xf32>
    tpu.vector_store %arg28[%c0_24, %c2_25, %c2_26], %33 {strides = array<i32>} : memref<1x16x28xf32, #tpu.memory_space<vmem>>, vector<1x1x24xf32>,
    %35 = vector.extract_strided_slice %26 {offsets = [0, 0, 24], sizes = [1, 1, 24], strides = [1, 1, 1]} : vector<1x1x576xf32> to vector<1x1x24xf32>
    %c0_27 = arith.constant 0 : index
    %c3 = arith.constant 3 : index
    %c2_28 = arith.constant 2 : index
    %36 = vector.load %arg27[%c0_27, %c3, %c2_28] : memref<1x16x28xf32, #tpu.memory_space<vmem>>, vector<1x1x24xf32>
    tpu.vector_store %arg27[%c0_27, %c3, %c2_28], %35 {strides = array<i32>} : memref<1x16x28xf32, #tpu.memory_space<vmem>>, vector<1x1x24xf32>,
    %37 = vector.extract_strided_slice %26 {offsets = [0, 0, 312], sizes = [1, 1, 24], strides = [1, 1, 1]} : vector<1x1x576xf32> to vector<1x1x24xf32>
    %c0_29 = arith.constant 0 : index
    %c3_30 = arith.constant 3 : index
    %c2_31 = arith.constant 2 : index
    %38 = vector.load %arg28[%c0_29, %c3_30, %c2_31] : memref<1x16x28xf32, #tpu.memory_space<vmem>>, vector<1x1x24xf32>
    tpu.vector_store %arg28[%c0_29, %c3_30, %c2_31], %37 {strides = array<i32>} : memref<1x16x28xf32, #tpu.memory_space<vmem>>, vector<1x1x24xf32>,
    %39 = vector.extract_strided_slice %26 {offsets = [0, 0, 48], sizes = [1, 1, 24], strides = [1, 1, 1]} : vector<1x1x576xf32> to vector<1x1x24xf32>
    %c0_32 = arith.constant 0 : index
    %c4 = arith.constant 4 : index
    %c2_33 = arith.constant 2 : index
    %40 = vector.load %arg27[%c0_32, %c4, %c2_33] : memref<1x16x28xf32, #tpu.memory_space<vmem>>, vector<1x1x24xf32>
    tpu.vector_store %arg27[%c0_32, %c4, %c2_33], %39 {strides = array<i32>} : memref<1x16x28xf32, #tpu.memory_space<vmem>>, vector<1x1x24xf32>,
    %41 = vector.extract_strided_slice %26 {offsets = [0, 0, 336], sizes = [1, 1, 24], strides = [1, 1, 1]} : vector<1x1x576xf32> to vector<1x1x24xf32>
    %c0_34 = arith.constant 0 : index
    %c4_35 = arith.constant 4 : index
    %c2_36 = arith.constant 2 : index
    %42 = vector.load %arg28[%c0_34, %c4_35, %c2_36] : memref<1x16x28xf32, #tpu.memory_space<vmem>>, vector<1x1x24xf32>
    tpu.vector_store %arg28[%c0_34, %c4_35, %c2_36], %41 {strides = array<i32>} : memref<1x16x28xf32, #tpu.memory_space<vmem>>, vector<1x1x24xf32>,
    %43 = vector.extract_strided_slice %26 {offsets = [0, 0, 72], sizes = [1, 1, 24], strides = [1, 1, 1]} : vector<1x1x576xf32> to vector<1x1x24xf32>
    %c0_37 = arith.constant 0 : index
    %c5 = arith.constant 5 : index
    %c2_38 = arith.constant 2 : index
    %44 = vector.load %arg27[%c0_37, %c5, %c2_38] : memref<1x16x28xf32, #tpu.memory_space<vmem>>, vector<1x1x24xf32>
    tpu.vector_store %arg27[%c0_37, %c5, %c2_38], %43 {strides = array<i32>} : memref<1x16x28xf32, #tpu.memory_space<vmem>>, vector<1x1x24xf32>,
    %45 = vector.extract_strided_slice %26 {offsets = [0, 0, 360], sizes = [1, 1, 24], strides = [1, 1, 1]} : vector<1x1x576xf32> to vector<1x1x24xf32>
    %c0_39 = arith.constant 0 : index
    %c5_40 = arith.constant 5 : index
    %c2_41 = arith.constant 2 : index
    %46 = vector.load %arg28[%c0_39, %c5_40, %c2_41] : memref<1x16x28xf32, #tpu.memory_space<vmem>>, vector<1x1x24xf32>
    tpu.vector_store %arg28[%c0_39, %c5_40, %c2_41], %45 {strides = array<i32>} : memref<1x16x28xf32, #tpu.memory_space<vmem>>, vector<1x1x24xf32>,
    %47 = vector.extract_strided_slice %26 {offsets = [0, 0, 96], sizes = [1, 1, 24], strides = [1, 1, 1]} : vector<1x1x576xf32> to vector<1x1x24xf32>
    %c0_42 = arith.constant 0 : index
    %c6 = arith.constant 6 : index
    %c2_43 = arith.constant 2 : index
    %48 = vector.load %arg27[%c0_42, %c6, %c2_43] : memref<1x16x28xf32, #tpu.memory_space<vmem>>, vector<1x1x24xf32>
    tpu.vector_store %arg27[%c0_42, %c6, %c2_43], %47 {strides = array<i32>} : memref<1x16x28xf32, #tpu.memory_space<vmem>>, vector<1x1x24xf32>,
    %49 = vector.extract_strided_slice %26 {offsets = [0, 0, 384], sizes = [1, 1, 24], strides = [1, 1, 1]} : vector<1x1x576xf32> to vector<1x1x24xf32>
    %c0_44 = arith.constant 0 : index
    %c6_45 = arith.constant 6 : index
    %c2_46 = arith.constant 2 : index
    %50 = vector.load %arg28[%c0_44, %c6_45, %c2_46] : memref<1x16x28xf32, #tpu.memory_space<vmem>>, vector<1x1x24xf32>
    tpu.vector_store %arg28[%c0_44, %c6_45, %c2_46], %49 {strides = array<i32>} : memref<1x16x28xf32, #tpu.memory_space<vmem>>, vector<1x1x24xf32>,
    %51 = vector.extract_strided_slice %26 {offsets = [0, 0, 120], sizes = [1, 1, 24], strides = [1, 1, 1]} : vector<1x1x576xf32> to vector<1x1x24xf32>
    %c0_47 = arith.constant 0 : index
    %c7 = arith.constant 7 : index
    %c2_48 = arith.constant 2 : index
    %52 = vector.load %arg27[%c0_47, %c7, %c2_48] : memref<1x16x28xf32, #tpu.memory_space<vmem>>, vector<1x1x24xf32>
    tpu.vector_store %arg27[%c0_47, %c7, %c2_48], %51 {strides = array<i32>} : memref<1x16x28xf32, #tpu.memory_space<vmem>>, vector<1x1x24xf32>,
    %53 = vector.extract_strided_slice %26 {offsets = [0, 0, 408], sizes = [1, 1, 24], strides = [1, 1, 1]} : vector<1x1x576xf32> to vector<1x1x24xf32>
    %c0_49 = arith.constant 0 : index
    %c7_50 = arith.constant 7 : index
    %c2_51 = arith.constant 2 : index
    %54 = vector.load %arg28[%c0_49, %c7_50, %c2_51] : memref<1x16x28xf32, #tpu.memory_space<vmem>>, vector<1x1x24xf32>
    tpu.vector_store %arg28[%c0_49, %c7_50, %c2_51], %53 {strides = array<i32>} : memref<1x16x28xf32, #tpu.memory_space<vmem>>, vector<1x1x24xf32>,
    %55 = vector.extract_strided_slice %26 {offsets = [0, 0, 144], sizes = [1, 1, 24], strides = [1, 1, 1]} : vector<1x1x576xf32> to vector<1x1x24xf32>
    %c0_52 = arith.constant 0 : index
    %c8 = arith.constant 8 : index
    %c2_53 = arith.constant 2 : index
    %56 = vector.load %arg27[%c0_52, %c8, %c2_53] : memref<1x16x28xf32, #tpu.memory_space<vmem>>, vector<1x1x24xf32>
    tpu.vector_store %arg27[%c0_52, %c8, %c2_53], %55 {strides = array<i32>} : memref<1x16x28xf32, #tpu.memory_space<vmem>>, vector<1x1x24xf32>,
    %57 = vector.extract_strided_slice %26 {offsets = [0, 0, 432], sizes = [1, 1, 24], strides = [1, 1, 1]} : vector<1x1x576xf32> to vector<1x1x24xf32>
    %c0_54 = arith.constant 0 : index
    %c8_55 = arith.constant 8 : index
    %c2_56 = arith.constant 2 : index
    %58 = vector.load %arg28[%c0_54, %c8_55, %c2_56] : memref<1x16x28xf32, #tpu.memory_space<vmem>>, vector<1x1x24xf32>
    tpu.vector_store %arg28[%c0_54, %c8_55, %c2_56], %57 {strides = array<i32>} : memref<1x16x28xf32, #tpu.memory_space<vmem>>, vector<1x1x24xf32>,
    %59 = vector.extract_strided_slice %26 {offsets = [0, 0, 168], sizes = [1, 1, 24], strides = [1, 1, 1]} : vector<1x1x576xf32> to vector<1x1x24xf32>
    %c0_57 = arith.constant 0 : index
    %c9 = arith.constant 9 : index
    %c2_58 = arith.constant 2 : index
    %60 = vector.load %arg27[%c0_57, %c9, %c2_58] : memref<1x16x28xf32, #tpu.memory_space<vmem>>, vector<1x1x24xf32>
    tpu.vector_store %arg27[%c0_57, %c9, %c2_58], %59 {strides = array<i32>} : memref<1x16x28xf32, #tpu.memory_space<vmem>>, vector<1x1x24xf32>,
    %61 = vector.extract_strided_slice %26 {offsets = [0, 0, 456], sizes = [1, 1, 24], strides = [1, 1, 1]} : vector<1x1x576xf32> to vector<1x1x24xf32>
    %c0_59 = arith.constant 0 : index
    %c9_60 = arith.constant 9 : index
    %c2_61 = arith.constant 2 : index
    %62 = vector.load %arg28[%c0_59, %c9_60, %c2_61] : memref<1x16x28xf32, #tpu.memory_space<vmem>>, vector<1x1x24xf32>
    tpu.vector_store %arg28[%c0_59, %c9_60, %c2_61], %61 {strides = array<i32>} : memref<1x16x28xf32, #tpu.memory_space<vmem>>, vector<1x1x24xf32>,
    %63 = vector.extract_strided_slice %26 {offsets = [0, 0, 192], sizes = [1, 1, 24], strides = [1, 1, 1]} : vector<1x1x576xf32> to vector<1x1x24xf32>
    %c0_62 = arith.constant 0 : index
    %c10 = arith.constant 10 : index
    %c2_63 = arith.constant 2 : index
    %64 = vector.load %arg27[%c0_62, %c10, %c2_63] : memref<1x16x28xf32, #tpu.memory_space<vmem>>, vector<1x1x24xf32>
    tpu.vector_store %arg27[%c0_62, %c10, %c2_63], %63 {strides = array<i32>} : memref<1x16x28xf32, #tpu.memory_space<vmem>>, vector<1x1x24xf32>,
    %65 = vector.extract_strided_slice %26 {offsets = [0, 0, 480], sizes = [1, 1, 24], strides = [1, 1, 1]} : vector<1x1x576xf32> to vector<1x1x24xf32>
    %c0_64 = arith.constant 0 : index
    %c10_65 = arith.constant 10 : index
    %c2_66 = arith.constant 2 : index
    %66 = vector.load %arg28[%c0_64, %c10_65, %c2_66] : memref<1x16x28xf32, #tpu.memory_space<vmem>>, vector<1x1x24xf32>
    tpu.vector_store %arg28[%c0_64, %c10_65, %c2_66], %65 {strides = array<i32>} : memref<1x16x28xf32, #tpu.memory_space<vmem>>, vector<1x1x24xf32>,
    %67 = vector.extract_strided_slice %26 {offsets = [0, 0, 216], sizes = [1, 1, 24], strides = [1, 1, 1]} : vector<1x1x576xf32> to vector<1x1x24xf32>
    %c0_67 = arith.constant 0 : index
    %c11 = arith.constant 11 : index
    %c2_68 = arith.constant 2 : index
    %68 = vector.load %arg27[%c0_67, %c11, %c2_68] : memref<1x16x28xf32, #tpu.memory_space<vmem>>, vector<1x1x24xf32>
    tpu.vector_store %arg27[%c0_67, %c11, %c2_68], %67 {strides = array<i32>} : memref<1x16x28xf32, #tpu.memory_space<vmem>>, vector<1x1x24xf32>,
    %69 = vector.extract_strided_slice %26 {offsets = [0, 0, 504], sizes = [1, 1, 24], strides = [1, 1, 1]} : vector<1x1x576xf32> to vector<1x1x24xf32>
    %c0_69 = arith.constant 0 : index
    %c11_70 = arith.constant 11 : index
    %c2_71 = arith.constant 2 : index
    %70 = vector.load %arg28[%c0_69, %c11_70, %c2_71] : memref<1x16x28xf32, #tpu.memory_space<vmem>>, vector<1x1x24xf32>
    tpu.vector_store %arg28[%c0_69, %c11_70, %c2_71], %69 {strides = array<i32>} : memref<1x16x28xf32, #tpu.memory_space<vmem>>, vector<1x1x24xf32>,
    %71 = vector.extract_strided_slice %26 {offsets = [0, 0, 240], sizes = [1, 1, 24], strides = [1, 1, 1]} : vector<1x1x576xf32> to vector<1x1x24xf32>
    %c0_72 = arith.constant 0 : index
    %c12 = arith.constant 12 : index
    %c2_73 = arith.constant 2 : index
    %72 = vector.load %arg27[%c0_72, %c12, %c2_73] : memref<1x16x28xf32, #tpu.memory_space<vmem>>, vector<1x1x24xf32>
    tpu.vector_store %arg27[%c0_72, %c12, %c2_73], %71 {strides = array<i32>} : memref<1x16x28xf32, #tpu.memory_space<vmem>>, vector<1x1x24xf32>,
    %73 = vector.extract_strided_slice %26 {offsets = [0, 0, 528], sizes = [1, 1, 24], strides = [1, 1, 1]} : vector<1x1x576xf32> to vector<1x1x24xf32>
    %c0_74 = arith.constant 0 : index
    %c12_75 = arith.constant 12 : index
    %c2_76 = arith.constant 2 : index
    %74 = vector.load %arg28[%c0_74, %c12_75, %c2_76] : memref<1x16x28xf32, #tpu.memory_space<vmem>>, vector<1x1x24xf32>
    tpu.vector_store %arg28[%c0_74, %c12_75, %c2_76], %73 {strides = array<i32>} : memref<1x16x28xf32, #tpu.memory_space<vmem>>, vector<1x1x24xf32>,
    %75 = vector.extract_strided_slice %26 {offsets = [0, 0, 264], sizes = [1, 1, 24], strides = [1, 1, 1]} : vector<1x1x576xf32> to vector<1x1x24xf32>
    %c0_77 = arith.constant 0 : index
    %c13 = arith.constant 13 : index
    %c2_78 = arith.constant 2 : index
    %76 = vector.load %arg27[%c0_77, %c13, %c2_78] : memref<1x16x28xf32, #tpu.memory_space<vmem>>, vector<1x1x24xf32>
    tpu.vector_store %arg27[%c0_77, %c13, %c2_78], %75 {strides = array<i32>} : memref<1x16x28xf32, #tpu.memory_space<vmem>>, vector<1x1x24xf32>,
    %77 = vector.extract_strided_slice %26 {offsets = [0, 0, 552], sizes = [1, 1, 24], strides = [1, 1, 1]} : vector<1x1x576xf32> to vector<1x1x24xf32>
    %c0_79 = arith.constant 0 : index
    %c13_80 = arith.constant 13 : index
    %c2_81 = arith.constant 2 : index
    %78 = vector.load %arg28[%c0_79, %c13_80, %c2_81] : memref<1x16x28xf32, #tpu.memory_space<vmem>>, vector<1x1x24xf32>
    tpu.vector_store %arg28[%c0_79, %c13_80, %c2_81], %77 {strides = array<i32>} : memref<1x16x28xf32, #tpu.memory_space<vmem>>, vector<1x1x24xf32>,
    %c0_82 = arith.constant 0 : index
    %c0_83 = arith.constant 0 : index
    %79 = vector.load %arg5[%c0_82, %c0_83] : memref<5x5xf32, #tpu.memory_space<vmem>>, vector<5x5xf32>
    %c0_84 = arith.constant 0 : index
    %c0_85 = arith.constant 0 : index
    %80 = vector.load %arg6[%c0_84, %c0_85] : memref<5x5xf32, #tpu.memory_space<vmem>>, vector<5x5xf32>
    %c0_86 = arith.constant 0 : index
    %c0_87 = arith.constant 0 : index
    %c0_88 = arith.constant 0 : index
    %81 = vector.load %arg27[%c0_86, %c0_87, %c0_88] : memref<1x16x28xf32, #tpu.memory_space<vmem>>, vector<1x16x28xf32>
    %c0_89 = arith.constant 0 : index
    %c0_90 = arith.constant 0 : index
    %c0_91 = arith.constant 0 : index
    %82 = vector.load %arg28[%c0_89, %c0_90, %c0_91] : memref<1x16x28xf32, #tpu.memory_space<vmem>>, vector<1x16x28xf32>
    %cst_92 = arith.constant 0.000000e+00 : f32
    %83 = vector.broadcast %cst_92 : f32 to vector<1x12x24xf32>
    %84 = vector.extract_strided_slice %79 {offsets = [0, 0], sizes = [1, 1], strides = [1, 1]} : vector<5x5xf32> to vector<1x1xf32>
    %85 = vector.extract_strided_slice %81 {offsets = [0, 0, 0], sizes = [1, 12, 24], strides = [1, 1, 1]} : vector<1x16x28xf32> to vector<1x12x24xf32>
    %86 = vector.shape_cast %84 : vector<1x1xf32> to vector<1x1x1xf32>
    %87 = vector.broadcast %86 : vector<1x1x1xf32> to vector<1x12x24xf32>
    %88 = arith.mulf %87, %85 : vector<1x12x24xf32>
    %89 = arith.addf %83, %88 : vector<1x12x24xf32>
    %90 = vector.extract_strided_slice %80 {offsets = [0, 0], sizes = [1, 1], strides = [1, 1]} : vector<5x5xf32> to vector<1x1xf32>
    %91 = vector.extract_strided_slice %82 {offsets = [0, 0, 0], sizes = [1, 12, 24], strides = [1, 1, 1]} : vector<1x16x28xf32> to vector<1x12x24xf32>
    %92 = vector.shape_cast %90 : vector<1x1xf32> to vector<1x1x1xf32>
    %93 = vector.broadcast %92 : vector<1x1x1xf32> to vector<1x12x24xf32>
    %94 = arith.mulf %93, %91 : vector<1x12x24xf32>
    %95 = arith.addf %89, %94 : vector<1x12x24xf32>
    %96 = vector.extract_strided_slice %79 {offsets = [0, 1], sizes = [1, 1], strides = [1, 1]} : vector<5x5xf32> to vector<1x1xf32>
    %97 = vector.extract_strided_slice %81 {offsets = [0, 0, 1], sizes = [1, 12, 24], strides = [1, 1, 1]} : vector<1x16x28xf32> to vector<1x12x24xf32>
    %98 = vector.shape_cast %96 : vector<1x1xf32> to vector<1x1x1xf32>
    %99 = vector.broadcast %98 : vector<1x1x1xf32> to vector<1x12x24xf32>
    %100 = arith.mulf %99, %97 : vector<1x12x24xf32>
    %101 = arith.addf %95, %100 : vector<1x12x24xf32>
    %102 = vector.extract_strided_slice %80 {offsets = [0, 1], sizes = [1, 1], strides = [1, 1]} : vector<5x5xf32> to vector<1x1xf32>
    %103 = vector.extract_strided_slice %82 {offsets = [0, 0, 1], sizes = [1, 12, 24], strides = [1, 1, 1]} : vector<1x16x28xf32> to vector<1x12x24xf32>
    %104 = vector.shape_cast %102 : vector<1x1xf32> to vector<1x1x1xf32>
    %105 = vector.broadcast %104 : vector<1x1x1xf32> to vector<1x12x24xf32>
    %106 = arith.mulf %105, %103 : vector<1x12x24xf32>
    %107 = arith.addf %101, %106 : vector<1x12x24xf32>
    %108 = vector.extract_strided_slice %79 {offsets = [0, 2], sizes = [1, 1], strides = [1, 1]} : vector<5x5xf32> to vector<1x1xf32>
    %109 = vector.extract_strided_slice %81 {offsets = [0, 0, 2], sizes = [1, 12, 24], strides = [1, 1, 1]} : vector<1x16x28xf32> to vector<1x12x24xf32>
    %110 = vector.shape_cast %108 : vector<1x1xf32> to vector<1x1x1xf32>
    %111 = vector.broadcast %110 : vector<1x1x1xf32> to vector<1x12x24xf32>
    %112 = arith.mulf %111, %109 : vector<1x12x24xf32>
    %113 = arith.addf %107, %112 : vector<1x12x24xf32>
    %114 = vector.extract_strided_slice %80 {offsets = [0, 2], sizes = [1, 1], strides = [1, 1]} : vector<5x5xf32> to vector<1x1xf32>
    %115 = vector.extract_strided_slice %82 {offsets = [0, 0, 2], sizes = [1, 12, 24], strides = [1, 1, 1]} : vector<1x16x28xf32> to vector<1x12x24xf32>
    %116 = vector.shape_cast %114 : vector<1x1xf32> to vector<1x1x1xf32>
    %117 = vector.broadcast %116 : vector<1x1x1xf32> to vector<1x12x24xf32>
    %118 = arith.mulf %117, %115 : vector<1x12x24xf32>
    %119 = arith.addf %113, %118 : vector<1x12x24xf32>
    %120 = vector.extract_strided_slice %79 {offsets = [0, 3], sizes = [1, 1], strides = [1, 1]} : vector<5x5xf32> to vector<1x1xf32>
    %121 = vector.extract_strided_slice %81 {offsets = [0, 0, 3], sizes = [1, 12, 24], strides = [1, 1, 1]} : vector<1x16x28xf32> to vector<1x12x24xf32>
    %122 = vector.shape_cast %120 : vector<1x1xf32> to vector<1x1x1xf32>
    %123 = vector.broadcast %122 : vector<1x1x1xf32> to vector<1x12x24xf32>
    %124 = arith.mulf %123, %121 : vector<1x12x24xf32>
    %125 = arith.addf %119, %124 : vector<1x12x24xf32>
    %126 = vector.extract_strided_slice %80 {offsets = [0, 3], sizes = [1, 1], strides = [1, 1]} : vector<5x5xf32> to vector<1x1xf32>
    %127 = vector.extract_strided_slice %82 {offsets = [0, 0, 3], sizes = [1, 12, 24], strides = [1, 1, 1]} : vector<1x16x28xf32> to vector<1x12x24xf32>
    %128 = vector.shape_cast %126 : vector<1x1xf32> to vector<1x1x1xf32>
    %129 = vector.broadcast %128 : vector<1x1x1xf32> to vector<1x12x24xf32>
    %130 = arith.mulf %129, %127 : vector<1x12x24xf32>
    %131 = arith.addf %125, %130 : vector<1x12x24xf32>
    %132 = vector.extract_strided_slice %79 {offsets = [0, 4], sizes = [1, 1], strides = [1, 1]} : vector<5x5xf32> to vector<1x1xf32>
    %133 = vector.extract_strided_slice %81 {offsets = [0, 0, 4], sizes = [1, 12, 24], strides = [1, 1, 1]} : vector<1x16x28xf32> to vector<1x12x24xf32>
    %134 = vector.shape_cast %132 : vector<1x1xf32> to vector<1x1x1xf32>
    %135 = vector.broadcast %134 : vector<1x1x1xf32> to vector<1x12x24xf32>
    %136 = arith.mulf %135, %133 : vector<1x12x24xf32>
    %137 = arith.addf %131, %136 : vector<1x12x24xf32>
    %138 = vector.extract_strided_slice %80 {offsets = [0, 4], sizes = [1, 1], strides = [1, 1]} : vector<5x5xf32> to vector<1x1xf32>
    %139 = vector.extract_strided_slice %82 {offsets = [0, 0, 4], sizes = [1, 12, 24], strides = [1, 1, 1]} : vector<1x16x28xf32> to vector<1x12x24xf32>
    %140 = vector.shape_cast %138 : vector<1x1xf32> to vector<1x1x1xf32>
    %141 = vector.broadcast %140 : vector<1x1x1xf32> to vector<1x12x24xf32>
    %142 = arith.mulf %141, %139 : vector<1x12x24xf32>
    %143 = arith.addf %137, %142 : vector<1x12x24xf32>
    %144 = vector.extract_strided_slice %79 {offsets = [1, 0], sizes = [1, 1], strides = [1, 1]} : vector<5x5xf32> to vector<1x1xf32>
    %145 = vector.extract_strided_slice %81 {offsets = [0, 1, 0], sizes = [1, 12, 24], strides = [1, 1, 1]} : vector<1x16x28xf32> to vector<1x12x24xf32>
    %146 = vector.shape_cast %144 : vector<1x1xf32> to vector<1x1x1xf32>
    %147 = vector.broadcast %146 : vector<1x1x1xf32> to vector<1x12x24xf32>
    %148 = arith.mulf %147, %145 : vector<1x12x24xf32>
    %149 = arith.addf %143, %148 : vector<1x12x24xf32>
    %150 = vector.extract_strided_slice %80 {offsets = [1, 0], sizes = [1, 1], strides = [1, 1]} : vector<5x5xf32> to vector<1x1xf32>
    %151 = vector.extract_strided_slice %82 {offsets = [0, 1, 0], sizes = [1, 12, 24], strides = [1, 1, 1]} : vector<1x16x28xf32> to vector<1x12x24xf32>
    %152 = vector.shape_cast %150 : vector<1x1xf32> to vector<1x1x1xf32>
    %153 = vector.broadcast %152 : vector<1x1x1xf32> to vector<1x12x24xf32>
    %154 = arith.mulf %153, %151 : vector<1x12x24xf32>
    %155 = arith.addf %149, %154 : vector<1x12x24xf32>
    %156 = vector.extract_strided_slice %79 {offsets = [1, 1], sizes = [1, 1], strides = [1, 1]} : vector<5x5xf32> to vector<1x1xf32>
    %157 = vector.extract_strided_slice %81 {offsets = [0, 1, 1], sizes = [1, 12, 24], strides = [1, 1, 1]} : vector<1x16x28xf32> to vector<1x12x24xf32>
    %158 = vector.shape_cast %156 : vector<1x1xf32> to vector<1x1x1xf32>
    %159 = vector.broadcast %158 : vector<1x1x1xf32> to vector<1x12x24xf32>
    %160 = arith.mulf %159, %157 : vector<1x12x24xf32>
    %161 = arith.addf %155, %160 : vector<1x12x24xf32>
    %162 = vector.extract_strided_slice %80 {offsets = [1, 1], sizes = [1, 1], strides = [1, 1]} : vector<5x5xf32> to vector<1x1xf32>
    %163 = vector.extract_strided_slice %82 {offsets = [0, 1, 1], sizes = [1, 12, 24], strides = [1, 1, 1]} : vector<1x16x28xf32> to vector<1x12x24xf32>
    %164 = vector.shape_cast %162 : vector<1x1xf32> to vector<1x1x1xf32>
    %165 = vector.broadcast %164 : vector<1x1x1xf32> to vector<1x12x24xf32>
    %166 = arith.mulf %165, %163 : vector<1x12x24xf32>
    %167 = arith.addf %161, %166 : vector<1x12x24xf32>
    %168 = vector.extract_strided_slice %79 {offsets = [1, 2], sizes = [1, 1], strides = [1, 1]} : vector<5x5xf32> to vector<1x1xf32>
    %169 = vector.extract_strided_slice %81 {offsets = [0, 1, 2], sizes = [1, 12, 24], strides = [1, 1, 1]} : vector<1x16x28xf32> to vector<1x12x24xf32>
    %170 = vector.shape_cast %168 : vector<1x1xf32> to vector<1x1x1xf32>
    %171 = vector.broadcast %170 : vector<1x1x1xf32> to vector<1x12x24xf32>
    %172 = arith.mulf %171, %169 : vector<1x12x24xf32>
    %173 = arith.addf %167, %172 : vector<1x12x24xf32>
    %174 = vector.extract_strided_slice %80 {offsets = [1, 2], sizes = [1, 1], strides = [1, 1]} : vector<5x5xf32> to vector<1x1xf32>
    %175 = vector.extract_strided_slice %82 {offsets = [0, 1, 2], sizes = [1, 12, 24], strides = [1, 1, 1]} : vector<1x16x28xf32> to vector<1x12x24xf32>
    %176 = vector.shape_cast %174 : vector<1x1xf32> to vector<1x1x1xf32>
    %177 = vector.broadcast %176 : vector<1x1x1xf32> to vector<1x12x24xf32>
    %178 = arith.mulf %177, %175 : vector<1x12x24xf32>
    %179 = arith.addf %173, %178 : vector<1x12x24xf32>
    %180 = vector.extract_strided_slice %79 {offsets = [1, 3], sizes = [1, 1], strides = [1, 1]} : vector<5x5xf32> to vector<1x1xf32>
    %181 = vector.extract_strided_slice %81 {offsets = [0, 1, 3], sizes = [1, 12, 24], strides = [1, 1, 1]} : vector<1x16x28xf32> to vector<1x12x24xf32>
    %182 = vector.shape_cast %180 : vector<1x1xf32> to vector<1x1x1xf32>
    %183 = vector.broadcast %182 : vector<1x1x1xf32> to vector<1x12x24xf32>
    %184 = arith.mulf %183, %181 : vector<1x12x24xf32>
    %185 = arith.addf %179, %184 : vector<1x12x24xf32>
    %186 = vector.extract_strided_slice %80 {offsets = [1, 3], sizes = [1, 1], strides = [1, 1]} : vector<5x5xf32> to vector<1x1xf32>
    %187 = vector.extract_strided_slice %82 {offsets = [0, 1, 3], sizes = [1, 12, 24], strides = [1, 1, 1]} : vector<1x16x28xf32> to vector<1x12x24xf32>
    %188 = vector.shape_cast %186 : vector<1x1xf32> to vector<1x1x1xf32>
    %189 = vector.broadcast %188 : vector<1x1x1xf32> to vector<1x12x24xf32>
    %190 = arith.mulf %189, %187 : vector<1x12x24xf32>
    %191 = arith.addf %185, %190 : vector<1x12x24xf32>
    %192 = vector.extract_strided_slice %79 {offsets = [1, 4], sizes = [1, 1], strides = [1, 1]} : vector<5x5xf32> to vector<1x1xf32>
    %193 = vector.extract_strided_slice %81 {offsets = [0, 1, 4], sizes = [1, 12, 24], strides = [1, 1, 1]} : vector<1x16x28xf32> to vector<1x12x24xf32>
    %194 = vector.shape_cast %192 : vector<1x1xf32> to vector<1x1x1xf32>
    %195 = vector.broadcast %194 : vector<1x1x1xf32> to vector<1x12x24xf32>
    %196 = arith.mulf %195, %193 : vector<1x12x24xf32>
    %197 = arith.addf %191, %196 : vector<1x12x24xf32>
    %198 = vector.extract_strided_slice %80 {offsets = [1, 4], sizes = [1, 1], strides = [1, 1]} : vector<5x5xf32> to vector<1x1xf32>
    %199 = vector.extract_strided_slice %82 {offsets = [0, 1, 4], sizes = [1, 12, 24], strides = [1, 1, 1]} : vector<1x16x28xf32> to vector<1x12x24xf32>
    %200 = vector.shape_cast %198 : vector<1x1xf32> to vector<1x1x1xf32>
    %201 = vector.broadcast %200 : vector<1x1x1xf32> to vector<1x12x24xf32>
    %202 = arith.mulf %201, %199 : vector<1x12x24xf32>
    %203 = arith.addf %197, %202 : vector<1x12x24xf32>
    %204 = vector.extract_strided_slice %79 {offsets = [2, 0], sizes = [1, 1], strides = [1, 1]} : vector<5x5xf32> to vector<1x1xf32>
    %205 = vector.extract_strided_slice %81 {offsets = [0, 2, 0], sizes = [1, 12, 24], strides = [1, 1, 1]} : vector<1x16x28xf32> to vector<1x12x24xf32>
    %206 = vector.shape_cast %204 : vector<1x1xf32> to vector<1x1x1xf32>
    %207 = vector.broadcast %206 : vector<1x1x1xf32> to vector<1x12x24xf32>
    %208 = arith.mulf %207, %205 : vector<1x12x24xf32>
    %209 = arith.addf %203, %208 : vector<1x12x24xf32>
    %210 = vector.extract_strided_slice %80 {offsets = [2, 0], sizes = [1, 1], strides = [1, 1]} : vector<5x5xf32> to vector<1x1xf32>
    %211 = vector.extract_strided_slice %82 {offsets = [0, 2, 0], sizes = [1, 12, 24], strides = [1, 1, 1]} : vector<1x16x28xf32> to vector<1x12x24xf32>
    %212 = vector.shape_cast %210 : vector<1x1xf32> to vector<1x1x1xf32>
    %213 = vector.broadcast %212 : vector<1x1x1xf32> to vector<1x12x24xf32>
    %214 = arith.mulf %213, %211 : vector<1x12x24xf32>
    %215 = arith.addf %209, %214 : vector<1x12x24xf32>
    %216 = vector.extract_strided_slice %79 {offsets = [2, 1], sizes = [1, 1], strides = [1, 1]} : vector<5x5xf32> to vector<1x1xf32>
    %217 = vector.extract_strided_slice %81 {offsets = [0, 2, 1], sizes = [1, 12, 24], strides = [1, 1, 1]} : vector<1x16x28xf32> to vector<1x12x24xf32>
    %218 = vector.shape_cast %216 : vector<1x1xf32> to vector<1x1x1xf32>
    %219 = vector.broadcast %218 : vector<1x1x1xf32> to vector<1x12x24xf32>
    %220 = arith.mulf %219, %217 : vector<1x12x24xf32>
    %221 = arith.addf %215, %220 : vector<1x12x24xf32>
    %222 = vector.extract_strided_slice %80 {offsets = [2, 1], sizes = [1, 1], strides = [1, 1]} : vector<5x5xf32> to vector<1x1xf32>
    %223 = vector.extract_strided_slice %82 {offsets = [0, 2, 1], sizes = [1, 12, 24], strides = [1, 1, 1]} : vector<1x16x28xf32> to vector<1x12x24xf32>
    %224 = vector.shape_cast %222 : vector<1x1xf32> to vector<1x1x1xf32>
    %225 = vector.broadcast %224 : vector<1x1x1xf32> to vector<1x12x24xf32>
    %226 = arith.mulf %225, %223 : vector<1x12x24xf32>
    %227 = arith.addf %221, %226 : vector<1x12x24xf32>
    %228 = vector.extract_strided_slice %79 {offsets = [2, 2], sizes = [1, 1], strides = [1, 1]} : vector<5x5xf32> to vector<1x1xf32>
    %229 = vector.extract_strided_slice %81 {offsets = [0, 2, 2], sizes = [1, 12, 24], strides = [1, 1, 1]} : vector<1x16x28xf32> to vector<1x12x24xf32>
    %230 = vector.shape_cast %228 : vector<1x1xf32> to vector<1x1x1xf32>
    %231 = vector.broadcast %230 : vector<1x1x1xf32> to vector<1x12x24xf32>
    %232 = arith.mulf %231, %229 : vector<1x12x24xf32>
    %233 = arith.addf %227, %232 : vector<1x12x24xf32>
    %234 = vector.extract_strided_slice %80 {offsets = [2, 2], sizes = [1, 1], strides = [1, 1]} : vector<5x5xf32> to vector<1x1xf32>
    %235 = vector.extract_strided_slice %82 {offsets = [0, 2, 2], sizes = [1, 12, 24], strides = [1, 1, 1]} : vector<1x16x28xf32> to vector<1x12x24xf32>
    %236 = vector.shape_cast %234 : vector<1x1xf32> to vector<1x1x1xf32>
    %237 = vector.broadcast %236 : vector<1x1x1xf32> to vector<1x12x24xf32>
    %238 = arith.mulf %237, %235 : vector<1x12x24xf32>
    %239 = arith.addf %233, %238 : vector<1x12x24xf32>
    %240 = vector.extract_strided_slice %79 {offsets = [2, 3], sizes = [1, 1], strides = [1, 1]} : vector<5x5xf32> to vector<1x1xf32>
    %241 = vector.extract_strided_slice %81 {offsets = [0, 2, 3], sizes = [1, 12, 24], strides = [1, 1, 1]} : vector<1x16x28xf32> to vector<1x12x24xf32>
    %242 = vector.shape_cast %240 : vector<1x1xf32> to vector<1x1x1xf32>
    %243 = vector.broadcast %242 : vector<1x1x1xf32> to vector<1x12x24xf32>
    %244 = arith.mulf %243, %241 : vector<1x12x24xf32>
    %245 = arith.addf %239, %244 : vector<1x12x24xf32>
    %246 = vector.extract_strided_slice %80 {offsets = [2, 3], sizes = [1, 1], strides = [1, 1]} : vector<5x5xf32> to vector<1x1xf32>
    %247 = vector.extract_strided_slice %82 {offsets = [0, 2, 3], sizes = [1, 12, 24], strides = [1, 1, 1]} : vector<1x16x28xf32> to vector<1x12x24xf32>
    %248 = vector.shape_cast %246 : vector<1x1xf32> to vector<1x1x1xf32>
    %249 = vector.broadcast %248 : vector<1x1x1xf32> to vector<1x12x24xf32>
    %250 = arith.mulf %249, %247 : vector<1x12x24xf32>
    %251 = arith.addf %245, %250 : vector<1x12x24xf32>
    %252 = vector.extract_strided_slice %79 {offsets = [2, 4], sizes = [1, 1], strides = [1, 1]} : vector<5x5xf32> to vector<1x1xf32>
    %253 = vector.extract_strided_slice %81 {offsets = [0, 2, 4], sizes = [1, 12, 24], strides = [1, 1, 1]} : vector<1x16x28xf32> to vector<1x12x24xf32>
    %254 = vector.shape_cast %252 : vector<1x1xf32> to vector<1x1x1xf32>
    %255 = vector.broadcast %254 : vector<1x1x1xf32> to vector<1x12x24xf32>
    %256 = arith.mulf %255, %253 : vector<1x12x24xf32>
    %257 = arith.addf %251, %256 : vector<1x12x24xf32>
    %258 = vector.extract_strided_slice %80 {offsets = [2, 4], sizes = [1, 1], strides = [1, 1]} : vector<5x5xf32> to vector<1x1xf32>
    %259 = vector.extract_strided_slice %82 {offsets = [0, 2, 4], sizes = [1, 12, 24], strides = [1, 1, 1]} : vector<1x16x28xf32> to vector<1x12x24xf32>
    %260 = vector.shape_cast %258 : vector<1x1xf32> to vector<1x1x1xf32>
    %261 = vector.broadcast %260 : vector<1x1x1xf32> to vector<1x12x24xf32>
    %262 = arith.mulf %261, %259 : vector<1x12x24xf32>
    %263 = arith.addf %257, %262 : vector<1x12x24xf32>
    %264 = vector.extract_strided_slice %79 {offsets = [3, 0], sizes = [1, 1], strides = [1, 1]} : vector<5x5xf32> to vector<1x1xf32>
    %265 = vector.extract_strided_slice %81 {offsets = [0, 3, 0], sizes = [1, 12, 24], strides = [1, 1, 1]} : vector<1x16x28xf32> to vector<1x12x24xf32>
    %266 = vector.shape_cast %264 : vector<1x1xf32> to vector<1x1x1xf32>
    %267 = vector.broadcast %266 : vector<1x1x1xf32> to vector<1x12x24xf32>
    %268 = arith.mulf %267, %265 : vector<1x12x24xf32>
    %269 = arith.addf %263, %268 : vector<1x12x24xf32>
    %270 = vector.extract_strided_slice %80 {offsets = [3, 0], sizes = [1, 1], strides = [1, 1]} : vector<5x5xf32> to vector<1x1xf32>
    %271 = vector.extract_strided_slice %82 {offsets = [0, 3, 0], sizes = [1, 12, 24], strides = [1, 1, 1]} : vector<1x16x28xf32> to vector<1x12x24xf32>
    %272 = vector.shape_cast %270 : vector<1x1xf32> to vector<1x1x1xf32>
    %273 = vector.broadcast %272 : vector<1x1x1xf32> to vector<1x12x24xf32>
    %274 = arith.mulf %273, %271 : vector<1x12x24xf32>
    %275 = arith.addf %269, %274 : vector<1x12x24xf32>
    %276 = vector.extract_strided_slice %79 {offsets = [3, 1], sizes = [1, 1], strides = [1, 1]} : vector<5x5xf32> to vector<1x1xf32>
    %277 = vector.extract_strided_slice %81 {offsets = [0, 3, 1], sizes = [1, 12, 24], strides = [1, 1, 1]} : vector<1x16x28xf32> to vector<1x12x24xf32>
    %278 = vector.shape_cast %276 : vector<1x1xf32> to vector<1x1x1xf32>
    %279 = vector.broadcast %278 : vector<1x1x1xf32> to vector<1x12x24xf32>
    %280 = arith.mulf %279, %277 : vector<1x12x24xf32>
    %281 = arith.addf %275, %280 : vector<1x12x24xf32>
    %282 = vector.extract_strided_slice %80 {offsets = [3, 1], sizes = [1, 1], strides = [1, 1]} : vector<5x5xf32> to vector<1x1xf32>
    %283 = vector.extract_strided_slice %82 {offsets = [0, 3, 1], sizes = [1, 12, 24], strides = [1, 1, 1]} : vector<1x16x28xf32> to vector<1x12x24xf32>
    %284 = vector.shape_cast %282 : vector<1x1xf32> to vector<1x1x1xf32>
    %285 = vector.broadcast %284 : vector<1x1x1xf32> to vector<1x12x24xf32>
    %286 = arith.mulf %285, %283 : vector<1x12x24xf32>
    %287 = arith.addf %281, %286 : vector<1x12x24xf32>
    %288 = vector.extract_strided_slice %79 {offsets = [3, 2], sizes = [1, 1], strides = [1, 1]} : vector<5x5xf32> to vector<1x1xf32>
    %289 = vector.extract_strided_slice %81 {offsets = [0, 3, 2], sizes = [1, 12, 24], strides = [1, 1, 1]} : vector<1x16x28xf32> to vector<1x12x24xf32>
    %290 = vector.shape_cast %288 : vector<1x1xf32> to vector<1x1x1xf32>
    %291 = vector.broadcast %290 : vector<1x1x1xf32> to vector<1x12x24xf32>
    %292 = arith.mulf %291, %289 : vector<1x12x24xf32>
    %293 = arith.addf %287, %292 : vector<1x12x24xf32>
    %294 = vector.extract_strided_slice %80 {offsets = [3, 2], sizes = [1, 1], strides = [1, 1]} : vector<5x5xf32> to vector<1x1xf32>
    %295 = vector.extract_strided_slice %82 {offsets = [0, 3, 2], sizes = [1, 12, 24], strides = [1, 1, 1]} : vector<1x16x28xf32> to vector<1x12x24xf32>
    %296 = vector.shape_cast %294 : vector<1x1xf32> to vector<1x1x1xf32>
    %297 = vector.broadcast %296 : vector<1x1x1xf32> to vector<1x12x24xf32>
    %298 = arith.mulf %297, %295 : vector<1x12x24xf32>
    %299 = arith.addf %293, %298 : vector<1x12x24xf32>
    %300 = vector.extract_strided_slice %79 {offsets = [3, 3], sizes = [1, 1], strides = [1, 1]} : vector<5x5xf32> to vector<1x1xf32>
    %301 = vector.extract_strided_slice %81 {offsets = [0, 3, 3], sizes = [1, 12, 24], strides = [1, 1, 1]} : vector<1x16x28xf32> to vector<1x12x24xf32>
    %302 = vector.shape_cast %300 : vector<1x1xf32> to vector<1x1x1xf32>
    %303 = vector.broadcast %302 : vector<1x1x1xf32> to vector<1x12x24xf32>
    %304 = arith.mulf %303, %301 : vector<1x12x24xf32>
    %305 = arith.addf %299, %304 : vector<1x12x24xf32>
    %306 = vector.extract_strided_slice %80 {offsets = [3, 3], sizes = [1, 1], strides = [1, 1]} : vector<5x5xf32> to vector<1x1xf32>
    %307 = vector.extract_strided_slice %82 {offsets = [0, 3, 3], sizes = [1, 12, 24], strides = [1, 1, 1]} : vector<1x16x28xf32> to vector<1x12x24xf32>
    %308 = vector.shape_cast %306 : vector<1x1xf32> to vector<1x1x1xf32>
    %309 = vector.broadcast %308 : vector<1x1x1xf32> to vector<1x12x24xf32>
    %310 = arith.mulf %309, %307 : vector<1x12x24xf32>
    %311 = arith.addf %305, %310 : vector<1x12x24xf32>
    %312 = vector.extract_strided_slice %79 {offsets = [3, 4], sizes = [1, 1], strides = [1, 1]} : vector<5x5xf32> to vector<1x1xf32>
    %313 = vector.extract_strided_slice %81 {offsets = [0, 3, 4], sizes = [1, 12, 24], strides = [1, 1, 1]} : vector<1x16x28xf32> to vector<1x12x24xf32>
    %314 = vector.shape_cast %312 : vector<1x1xf32> to vector<1x1x1xf32>
    %315 = vector.broadcast %314 : vector<1x1x1xf32> to vector<1x12x24xf32>
    %316 = arith.mulf %315, %313 : vector<1x12x24xf32>
    %317 = arith.addf %311, %316 : vector<1x12x24xf32>
    %318 = vector.extract_strided_slice %80 {offsets = [3, 4], sizes = [1, 1], strides = [1, 1]} : vector<5x5xf32> to vector<1x1xf32>
    %319 = vector.extract_strided_slice %82 {offsets = [0, 3, 4], sizes = [1, 12, 24], strides = [1, 1, 1]} : vector<1x16x28xf32> to vector<1x12x24xf32>
    %320 = vector.shape_cast %318 : vector<1x1xf32> to vector<1x1x1xf32>
    %321 = vector.broadcast %320 : vector<1x1x1xf32> to vector<1x12x24xf32>
    %322 = arith.mulf %321, %319 : vector<1x12x24xf32>
    %323 = arith.addf %317, %322 : vector<1x12x24xf32>
    %324 = vector.extract_strided_slice %79 {offsets = [4, 0], sizes = [1, 1], strides = [1, 1]} : vector<5x5xf32> to vector<1x1xf32>
    %325 = vector.extract_strided_slice %81 {offsets = [0, 4, 0], sizes = [1, 12, 24], strides = [1, 1, 1]} : vector<1x16x28xf32> to vector<1x12x24xf32>
    %326 = vector.shape_cast %324 : vector<1x1xf32> to vector<1x1x1xf32>
    %327 = vector.broadcast %326 : vector<1x1x1xf32> to vector<1x12x24xf32>
    %328 = arith.mulf %327, %325 : vector<1x12x24xf32>
    %329 = arith.addf %323, %328 : vector<1x12x24xf32>
    %330 = vector.extract_strided_slice %80 {offsets = [4, 0], sizes = [1, 1], strides = [1, 1]} : vector<5x5xf32> to vector<1x1xf32>
    %331 = vector.extract_strided_slice %82 {offsets = [0, 4, 0], sizes = [1, 12, 24], strides = [1, 1, 1]} : vector<1x16x28xf32> to vector<1x12x24xf32>
    %332 = vector.shape_cast %330 : vector<1x1xf32> to vector<1x1x1xf32>
    %333 = vector.broadcast %332 : vector<1x1x1xf32> to vector<1x12x24xf32>
    %334 = arith.mulf %333, %331 : vector<1x12x24xf32>
    %335 = arith.addf %329, %334 : vector<1x12x24xf32>
    %336 = vector.extract_strided_slice %79 {offsets = [4, 1], sizes = [1, 1], strides = [1, 1]} : vector<5x5xf32> to vector<1x1xf32>
    %337 = vector.extract_strided_slice %81 {offsets = [0, 4, 1], sizes = [1, 12, 24], strides = [1, 1, 1]} : vector<1x16x28xf32> to vector<1x12x24xf32>
    %338 = vector.shape_cast %336 : vector<1x1xf32> to vector<1x1x1xf32>
    %339 = vector.broadcast %338 : vector<1x1x1xf32> to vector<1x12x24xf32>
    %340 = arith.mulf %339, %337 : vector<1x12x24xf32>
    %341 = arith.addf %335, %340 : vector<1x12x24xf32>
    %342 = vector.extract_strided_slice %80 {offsets = [4, 1], sizes = [1, 1], strides = [1, 1]} : vector<5x5xf32> to vector<1x1xf32>
    %343 = vector.extract_strided_slice %82 {offsets = [0, 4, 1], sizes = [1, 12, 24], strides = [1, 1, 1]} : vector<1x16x28xf32> to vector<1x12x24xf32>
    %344 = vector.shape_cast %342 : vector<1x1xf32> to vector<1x1x1xf32>
    %345 = vector.broadcast %344 : vector<1x1x1xf32> to vector<1x12x24xf32>
    %346 = arith.mulf %345, %343 : vector<1x12x24xf32>
    %347 = arith.addf %341, %346 : vector<1x12x24xf32>
    %348 = vector.extract_strided_slice %79 {offsets = [4, 2], sizes = [1, 1], strides = [1, 1]} : vector<5x5xf32> to vector<1x1xf32>
    %349 = vector.extract_strided_slice %81 {offsets = [0, 4, 2], sizes = [1, 12, 24], strides = [1, 1, 1]} : vector<1x16x28xf32> to vector<1x12x24xf32>
    %350 = vector.shape_cast %348 : vector<1x1xf32> to vector<1x1x1xf32>
    %351 = vector.broadcast %350 : vector<1x1x1xf32> to vector<1x12x24xf32>
    %352 = arith.mulf %351, %349 : vector<1x12x24xf32>
    %353 = arith.addf %347, %352 : vector<1x12x24xf32>
    %354 = vector.extract_strided_slice %80 {offsets = [4, 2], sizes = [1, 1], strides = [1, 1]} : vector<5x5xf32> to vector<1x1xf32>
    %355 = vector.extract_strided_slice %82 {offsets = [0, 4, 2], sizes = [1, 12, 24], strides = [1, 1, 1]} : vector<1x16x28xf32> to vector<1x12x24xf32>
    %356 = vector.shape_cast %354 : vector<1x1xf32> to vector<1x1x1xf32>
    %357 = vector.broadcast %356 : vector<1x1x1xf32> to vector<1x12x24xf32>
    %358 = arith.mulf %357, %355 : vector<1x12x24xf32>
    %359 = arith.addf %353, %358 : vector<1x12x24xf32>
    %360 = vector.extract_strided_slice %79 {offsets = [4, 3], sizes = [1, 1], strides = [1, 1]} : vector<5x5xf32> to vector<1x1xf32>
    %361 = vector.extract_strided_slice %81 {offsets = [0, 4, 3], sizes = [1, 12, 24], strides = [1, 1, 1]} : vector<1x16x28xf32> to vector<1x12x24xf32>
    %362 = vector.shape_cast %360 : vector<1x1xf32> to vector<1x1x1xf32>
    %363 = vector.broadcast %362 : vector<1x1x1xf32> to vector<1x12x24xf32>
    %364 = arith.mulf %363, %361 : vector<1x12x24xf32>
    %365 = arith.addf %359, %364 : vector<1x12x24xf32>
    %366 = vector.extract_strided_slice %80 {offsets = [4, 3], sizes = [1, 1], strides = [1, 1]} : vector<5x5xf32> to vector<1x1xf32>
    %367 = vector.extract_strided_slice %82 {offsets = [0, 4, 3], sizes = [1, 12, 24], strides = [1, 1, 1]} : vector<1x16x28xf32> to vector<1x12x24xf32>
    %368 = vector.shape_cast %366 : vector<1x1xf32> to vector<1x1x1xf32>
    %369 = vector.broadcast %368 : vector<1x1x1xf32> to vector<1x12x24xf32>
    %370 = arith.mulf %369, %367 : vector<1x12x24xf32>
    %371 = arith.addf %365, %370 : vector<1x12x24xf32>
    %372 = vector.extract_strided_slice %79 {offsets = [4, 4], sizes = [1, 1], strides = [1, 1]} : vector<5x5xf32> to vector<1x1xf32>
    %373 = vector.extract_strided_slice %81 {offsets = [0, 4, 4], sizes = [1, 12, 24], strides = [1, 1, 1]} : vector<1x16x28xf32> to vector<1x12x24xf32>
    %374 = vector.shape_cast %372 : vector<1x1xf32> to vector<1x1x1xf32>
    %375 = vector.broadcast %374 : vector<1x1x1xf32> to vector<1x12x24xf32>
    %376 = arith.mulf %375, %373 : vector<1x12x24xf32>
    %377 = arith.addf %371, %376 : vector<1x12x24xf32>
    %378 = vector.extract_strided_slice %80 {offsets = [4, 4], sizes = [1, 1], strides = [1, 1]} : vector<5x5xf32> to vector<1x1xf32>
    %379 = vector.extract_strided_slice %82 {offsets = [0, 4, 4], sizes = [1, 12, 24], strides = [1, 1, 1]} : vector<1x16x28xf32> to vector<1x12x24xf32>
    %380 = vector.shape_cast %378 : vector<1x1xf32> to vector<1x1x1xf32>
    %381 = vector.broadcast %380 : vector<1x1x1xf32> to vector<1x12x24xf32>
    %382 = arith.mulf %381, %379 : vector<1x12x24xf32>
    %383 = arith.addf %377, %382 : vector<1x12x24xf32>
    %c0_93 = arith.constant 0 : index
    %c0_94 = arith.constant 0 : index
    %384 = vector.load %arg7[%c0_93, %c0_94] : memref<1x1xf32, #tpu.memory_space<vmem>>, vector<1x1xf32>
    %385 = vector.shape_cast %384 : vector<1x1xf32> to vector<1x1x1xf32>
    %386 = vector.broadcast %385 : vector<1x1x1xf32> to vector<1x12x24xf32>
    %387 = arith.addf %383, %386 : vector<1x12x24xf32>
    %388 = tpu.transpose %387, [0, 2, 1] : vector<1x12x24xf32> -> vector<1x24x12xf32>
    %c0_95 = arith.constant 0 : index
    %c0_96 = arith.constant 0 : index
    %389 = vector.load %arg16[%c0_95, %c0_96] : memref<12x8xf32, #tpu.memory_space<vmem>>, vector<12x8xf32>
    "tpu.trace_start"() <{level = 10 : i32, message = "bdp,ph->bdh"}> : () -> ()
    %cst_97 = arith.constant dense<0.000000e+00> : vector<1x24x8xf32>
    %390 = tpu.matmul %388, %389, %cst_97 {dimension_numbers = #tpu.dot_dimension_numbers<[2], [0], [0, 1], [1], [0, 0, 0, 1, 1, 1], [], []>} : vector<1x24x12xf32>, vector<12x8xf32>, vector<1x24x8xf32> -> vector<1x24x8xf32>
    "tpu.trace_stop"() : () -> ()
    %c0_98 = arith.constant 0 : index
    %c0_99 = arith.constant 0 : index
    %391 = vector.load %arg17[%c0_98, %c0_99] : memref<1x8xf32, #tpu.memory_space<vmem>>, vector<1x8xf32>
    %392 = vector.shape_cast %391 : vector<1x8xf32> to vector<1x1x8xf32>
    %393 = vector.broadcast %392 : vector<1x1x8xf32> to vector<1x24x8xf32>
    %394 = arith.addf %390, %393 : vector<1x24x8xf32>
    %c0_100 = arith.constant 0 : index
    %c0_101 = arith.constant 0 : index
    %395 = vector.load %arg18[%c0_100, %c0_101] : memref<24x1xf32, #tpu.memory_space<vmem>>, vector<24x1xf32>
    %396 = vector.shape_cast %395 : vector<24x1xf32> to vector<1x24x1xf32>
    %397 = vector.broadcast %396 : vector<1x24x1xf32> to vector<1x24x8xf32>
    %398 = arith.mulf %394, %397 : vector<1x24x8xf32>
    %c0_102 = arith.constant 0 : index
    %c0_103 = arith.constant 0 : index
    %399 = vector.load %arg19[%c0_102, %c0_103] : memref<24x1xf32, #tpu.memory_space<vmem>>, vector<24x1xf32>
    %400 = vector.shape_cast %399 : vector<24x1xf32> to vector<1x24x1xf32>
    %401 = vector.broadcast %400 : vector<1x24x1xf32> to vector<1x24x8xf32>
    %402 = arith.addf %398, %401 : vector<1x24x8xf32>
    %cst_104 = arith.constant 0.000000e+00 : f32
    %403 = vector.broadcast %cst_104 : f32 to vector<1x24x8xf32>
    %404 = arith.maximumf %402, %403 : vector<1x24x8xf32>
    %405 = vector.extract_strided_slice %6 {offsets = [0, 12, 1], sizes = [1, 36, 4], strides = [1, 1, 1]} : vector<1x48x5xf32> to vector<1x36x4xf32>
    %406 = vector.extract_strided_slice %14 {offsets = [0, 0, 1], sizes = [1, 1, 4], strides = [1, 1, 1]} : vector<1x1x5xf32> to vector<1x1x4xf32>
    %407 = vector.broadcast %406 : vector<1x1x4xf32> to vector<1x36x4xf32>
    %408 = arith.divf %405, %407 : vector<1x36x4xf32>
    %c0_105 = arith.constant 0 : index
    %c0_106 = arith.constant 0 : index
    %409 = vector.load %arg8[%c0_105, %c0_106] : memref<4x16xf32, #tpu.memory_space<vmem>>, vector<4x16xf32>
    "tpu.trace_start"() <{level = 10 : i32, message = "btc,cf->btf"}> : () -> ()
    %cst_107 = arith.constant dense<0.000000e+00> : vector<1x36x16xf32>
    %410 = tpu.matmul %408, %409, %cst_107 {dimension_numbers = #tpu.dot_dimension_numbers<[2], [0], [0, 1], [1], [0, 0, 0, 1, 1, 1], [], []>} : vector<1x36x4xf32>, vector<4x16xf32>, vector<1x36x16xf32> -> vector<1x36x16xf32>
    "tpu.trace_stop"() : () -> ()
    %c0_108 = arith.constant 0 : index
    %c0_109 = arith.constant 0 : index
    %411 = vector.load %arg9[%c0_108, %c0_109] : memref<1x16xf32, #tpu.memory_space<vmem>>, vector<1x16xf32>
    %412 = vector.shape_cast %411 : vector<1x16xf32> to vector<1x1x16xf32>
    %413 = vector.broadcast %412 : vector<1x1x16xf32> to vector<1x36x16xf32>
    %414 = arith.addf %410, %413 : vector<1x36x16xf32>
    %cst_110 = arith.constant 0.000000e+00 : f32
    %415 = vector.broadcast %cst_110 : f32 to vector<1x36x16xf32>
    %416 = arith.maximumf %414, %415 : vector<1x36x16xf32>
    %417 = tpu.transpose %416, [0, 2, 1] : vector<1x36x16xf32> -> vector<1x16x36xf32>
    %c0_111 = arith.constant 0 : index
    %c0_112 = arith.constant 0 : index
    %418 = vector.load %arg10[%c0_111, %c0_112] : memref<36x8xf32, #tpu.memory_space<vmem>>, vector<36x8xf32>
    "tpu.trace_start"() <{level = 10 : i32, message = "bft,th->bfh"}> : () -> ()
    %cst_113 = arith.constant dense<0.000000e+00> : vector<1x16x8xf32>
    %419 = tpu.matmul %417, %418, %cst_113 {dimension_numbers = #tpu.dot_dimension_numbers<[2], [0], [0, 1], [1], [0, 0, 0, 1, 1, 1], [], []>} : vector<1x16x36xf32>, vector<36x8xf32>, vector<1x16x8xf32> -> vector<1x16x8xf32>
    "tpu.trace_stop"() : () -> ()
    %c0_114 = arith.constant 0 : index
    %c0_115 = arith.constant 0 : index
    %420 = vector.load %arg11[%c0_114, %c0_115] : memref<1x8xf32, #tpu.memory_space<vmem>>, vector<1x8xf32>
    %421 = vector.shape_cast %420 : vector<1x8xf32> to vector<1x1x8xf32>
    %422 = vector.broadcast %421 : vector<1x1x8xf32> to vector<1x16x8xf32>
    %423 = arith.addf %419, %422 : vector<1x16x8xf32>
    %cst_116 = arith.constant 0.000000e+00 : f32
    %424 = vector.broadcast %cst_116 : f32 to vector<1x16x8xf32>
    %425 = arith.maximumf %423, %424 : vector<1x16x8xf32>
    %426 = tpu.transpose %425, [0, 2, 1] : vector<1x16x8xf32> -> vector<1x8x16xf32>
    %c0_117 = arith.constant 0 : index
    %c0_118 = arith.constant 0 : index
    %427 = vector.load %arg12[%c0_117, %c0_118] : memref<16x8xf32, #tpu.memory_space<vmem>>, vector<16x8xf32>
    "tpu.trace_start"() <{level = 10 : i32, message = "bhf,fd->bhd"}> : () -> ()
    %cst_119 = arith.constant dense<0.000000e+00> : vector<1x8x8xf32>
    %428 = tpu.matmul %426, %427, %cst_119 {dimension_numbers = #tpu.dot_dimension_numbers<[2], [0], [0, 1], [1], [0, 0, 0, 1, 1, 1], [], []>} : vector<1x8x16xf32>, vector<16x8xf32>, vector<1x8x8xf32> -> vector<1x8x8xf32>
    "tpu.trace_stop"() : () -> ()
    %c0_120 = arith.constant 0 : index
    %c0_121 = arith.constant 0 : index
    %429 = vector.load %arg13[%c0_120, %c0_121] : memref<1x8xf32, #tpu.memory_space<vmem>>, vector<1x8xf32>
    %430 = vector.shape_cast %429 : vector<1x8xf32> to vector<1x1x8xf32>
    %431 = vector.broadcast %430 : vector<1x1x8xf32> to vector<1x8x8xf32>
    %432 = arith.addf %428, %431 : vector<1x8x8xf32>
    %c0_122 = arith.constant 0 : index
    %c0_123 = arith.constant 0 : index
    %433 = vector.load %arg14[%c0_122, %c0_123] : memref<8x1xf32, #tpu.memory_space<vmem>>, vector<8x1xf32>
    %434 = vector.shape_cast %433 : vector<8x1xf32> to vector<1x8x1xf32>
    %435 = vector.broadcast %434 : vector<1x8x1xf32> to vector<1x8x8xf32>
    %436 = arith.mulf %432, %435 : vector<1x8x8xf32>
    %c0_124 = arith.constant 0 : index
    %c0_125 = arith.constant 0 : index
    %437 = vector.load %arg15[%c0_124, %c0_125] : memref<8x1xf32, #tpu.memory_space<vmem>>, vector<8x1xf32>
    %438 = vector.shape_cast %437 : vector<8x1xf32> to vector<1x8x1xf32>
    %439 = vector.broadcast %438 : vector<1x8x1xf32> to vector<1x8x8xf32>
    %440 = arith.addf %436, %439 : vector<1x8x8xf32>
    %cst_126 = arith.constant 0.000000e+00 : f32
    %441 = vector.broadcast %cst_126 : f32 to vector<1x8x8xf32>
    %442 = arith.maximumf %440, %441 : vector<1x8x8xf32>
    %443 = tpu.transpose %442, [0, 2, 1] : vector<1x8x8xf32> -> vector<1x8x8xf32>
    %c0_127 = arith.constant 0 : index
    %c0_128 = arith.constant 0 : index
    %c0_129 = arith.constant 0 : index
    %444 = vector.load %arg29[%c0_127, %c0_128, %c0_129] : memref<1x32x8xf32, #tpu.memory_space<vmem>>, vector<1x24x8xf32>
    tpu.vector_store %arg29[%c0_127, %c0_128, %c0_129], %404 {strides = array<i32>} : memref<1x32x8xf32, #tpu.memory_space<vmem>>, vector<1x24x8xf32>,
    %c0_130 = arith.constant 0 : index
    %c24 = arith.constant 24 : index
    %c0_131 = arith.constant 0 : index
    %445 = vector.load %arg29[%c0_130, %c24, %c0_131] : memref<1x32x8xf32, #tpu.memory_space<vmem>>, vector<1x8x8xf32>
    tpu.vector_store %arg29[%c0_130, %c24, %c0_131], %443 {strides = array<i32>} : memref<1x32x8xf32, #tpu.memory_space<vmem>>, vector<1x8x8xf32>,
    %c0_132 = arith.constant 0 : index
    %c0_133 = arith.constant 0 : index
    %c0_134 = arith.constant 0 : index
    %446 = vector.load %arg29[%c0_132, %c0_133, %c0_134] : memref<1x32x8xf32, #tpu.memory_space<vmem>>, vector<1x32x8xf32>
    %c0_135 = arith.constant 0 : index
    %c0_136 = arith.constant 0 : index
    %447 = vector.load %arg20[%c0_135, %c0_136] : memref<8x12xf32, #tpu.memory_space<vmem>>, vector<8x12xf32>
    "tpu.trace_start"() <{level = 10 : i32, message = "bdh,hp->bdp"}> : () -> ()
    %cst_137 = arith.constant dense<0.000000e+00> : vector<1x32x12xf32>
    %448 = tpu.matmul %446, %447, %cst_137 {dimension_numbers = #tpu.dot_dimension_numbers<[2], [0], [0, 1], [1], [0, 0, 0, 1, 1, 1], [], []>} : vector<1x32x8xf32>, vector<8x12xf32>, vector<1x32x12xf32> -> vector<1x32x12xf32>
    "tpu.trace_stop"() : () -> ()
    %c0_138 = arith.constant 0 : index
    %c0_139 = arith.constant 0 : index
    %449 = vector.load %arg21[%c0_138, %c0_139] : memref<1x12xf32, #tpu.memory_space<vmem>>, vector<1x12xf32>
    %450 = vector.shape_cast %449 : vector<1x12xf32> to vector<1x1x12xf32>
    %451 = vector.broadcast %450 : vector<1x1x12xf32> to vector<1x32x12xf32>
    %452 = arith.addf %448, %451 : vector<1x32x12xf32>
    %c0_140 = arith.constant 0 : index
    %c0_141 = arith.constant 0 : index
    %453 = vector.load %arg22[%c0_140, %c0_141] : memref<32x1xf32, #tpu.memory_space<vmem>>, vector<32x1xf32>
    %454 = vector.shape_cast %453 : vector<32x1xf32> to vector<1x32x1xf32>
    %455 = vector.broadcast %454 : vector<1x32x1xf32> to vector<1x32x12xf32>
    %456 = arith.mulf %452, %455 : vector<1x32x12xf32>
    %c0_142 = arith.constant 0 : index
    %c0_143 = arith.constant 0 : index
    %457 = vector.load %arg23[%c0_142, %c0_143] : memref<32x1xf32, #tpu.memory_space<vmem>>, vector<32x1xf32>
    %458 = vector.shape_cast %457 : vector<32x1xf32> to vector<1x32x1xf32>
    %459 = vector.broadcast %458 : vector<1x32x1xf32> to vector<1x32x12xf32>
    %460 = arith.addf %456, %459 : vector<1x32x12xf32>
    %cst_144 = arith.constant 0.000000e+00 : f32
    %461 = vector.broadcast %cst_144 : f32 to vector<1x32x12xf32>
    %462 = arith.maximumf %460, %461 : vector<1x32x12xf32>
    %463 = tpu.transpose %462, [0, 2, 1] : vector<1x32x12xf32> -> vector<1x12x32xf32>
    %c0_145 = arith.constant 0 : index
    %c0_146 = arith.constant 0 : index
    %464 = vector.load %arg24[%c0_145, %c0_146] : memref<32x5xf32, #tpu.memory_space<vmem>>, vector<32x5xf32>
    "tpu.trace_start"() <{level = 10 : i32, message = "bpd,dc->bpc"}> : () -> ()
    %cst_147 = arith.constant dense<0.000000e+00> : vector<1x12x5xf32>
    %465 = tpu.matmul %463, %464, %cst_147 {dimension_numbers = #tpu.dot_dimension_numbers<[2], [0], [0, 1], [1], [0, 0, 0, 1, 1, 1], [], []>} : vector<1x12x32xf32>, vector<32x5xf32>, vector<1x12x5xf32> -> vector<1x12x5xf32>
    "tpu.trace_stop"() : () -> ()
    %c0_148 = arith.constant 0 : index
    %c0_149 = arith.constant 0 : index
    %466 = vector.load %arg25[%c0_148, %c0_149] : memref<1x5xf32, #tpu.memory_space<vmem>>, vector<1x5xf32>
    %467 = vector.shape_cast %466 : vector<1x5xf32> to vector<1x1x5xf32>
    %468 = vector.broadcast %467 : vector<1x1x5xf32> to vector<1x12x5xf32>
    %469 = arith.addf %465, %468 : vector<1x12x5xf32>
    %470 = vector.broadcast %14 : vector<1x1x5xf32> to vector<1x12x5xf32>
    %471 = arith.mulf %469, %470 : vector<1x12x5xf32>
    %472 = vector.broadcast %4 : vector<1x1x5xf32> to vector<1x12x5xf32>
    %473 = arith.addf %471, %472 : vector<1x12x5xf32>
    %c0_150 = arith.constant 0 : index
    %c0_151 = arith.constant 0 : index
    %c0_152 = arith.constant 0 : index
    %474 = vector.load %arg26[%c0_150, %c0_151, %c0_152] : memref<1x12x5xf32, #tpu.memory_space<vmem>>, vector<1x12x5xf32>
    tpu.vector_store %arg26[%c0_150, %c0_151, %c0_152], %473 {strides = array<i32>} : memref<1x12x5xf32, #tpu.memory_space<vmem>>, vector<1x12x5xf32>,
    return
  }
  func.func @transform_0(%arg0: i32) -> (i32, i32, i32) {
    %c0_i32 = arith.constant 0 : i32
    %c0_i32_0 = arith.constant 0 : i32
    %c0_i32_1 = arith.constant 0 : i32
    return %arg0, %c0_i32, %c0_i32_0 : i32, i32, i32
  }
  func.func @transform_1(%arg0: i32) -> (i32, i32, i32) {
    %c0_i32 = arith.constant 0 : i32
    %c0_i32_0 = arith.constant 0 : i32
    %c0_i32_1 = arith.constant 0 : i32
    return %arg0, %c0_i32, %c0_i32_0 : i32, i32, i32
  }
  func.func @transform_2(%arg0: i32) -> (i32, i32) {
    %c0_i32 = arith.constant 0 : i32
    %c0_i32_0 = arith.constant 0 : i32
    %c0_i32_1 = arith.constant 0 : i32
    return %c0_i32, %c0_i32_0 : i32, i32
  }
  func.func @transform_3(%arg0: i32) -> (i32, i32) {
    %c0_i32 = arith.constant 0 : i32
    %c0_i32_0 = arith.constant 0 : i32
    %c0_i32_1 = arith.constant 0 : i32
    return %c0_i32, %c0_i32_0 : i32, i32
  }
  func.func @transform_4(%arg0: i32) -> (i32, i32) {
    %c0_i32 = arith.constant 0 : i32
    %c0_i32_0 = arith.constant 0 : i32
    %c0_i32_1 = arith.constant 0 : i32
    return %c0_i32, %c0_i32_0 : i32, i32
  }
  func.func @transform_5(%arg0: i32) -> (i32, i32) {
    %c0_i32 = arith.constant 0 : i32
    %c0_i32_0 = arith.constant 0 : i32
    %c0_i32_1 = arith.constant 0 : i32
    return %c0_i32, %c0_i32_0 : i32, i32
  }
  func.func @transform_6(%arg0: i32) -> (i32, i32) {
    %c0_i32 = arith.constant 0 : i32
    %c0_i32_0 = arith.constant 0 : i32
    %c0_i32_1 = arith.constant 0 : i32
    return %c0_i32, %c0_i32_0 : i32, i32
  }
  func.func @transform_7(%arg0: i32) -> (i32, i32) {
    %c0_i32 = arith.constant 0 : i32
    %c0_i32_0 = arith.constant 0 : i32
    %c0_i32_1 = arith.constant 0 : i32
    return %c0_i32, %c0_i32_0 : i32, i32
  }
  func.func @transform_8(%arg0: i32) -> (i32, i32) {
    %c0_i32 = arith.constant 0 : i32
    %c0_i32_0 = arith.constant 0 : i32
    %c0_i32_1 = arith.constant 0 : i32
    return %c0_i32, %c0_i32_0 : i32, i32
  }
  func.func @transform_9(%arg0: i32) -> (i32, i32) {
    %c0_i32 = arith.constant 0 : i32
    %c0_i32_0 = arith.constant 0 : i32
    %c0_i32_1 = arith.constant 0 : i32
    return %c0_i32, %c0_i32_0 : i32, i32
  }
  func.func @transform_10(%arg0: i32) -> (i32, i32) {
    %c0_i32 = arith.constant 0 : i32
    %c0_i32_0 = arith.constant 0 : i32
    %c0_i32_1 = arith.constant 0 : i32
    return %c0_i32, %c0_i32_0 : i32, i32
  }
  func.func @transform_11(%arg0: i32) -> (i32, i32) {
    %c0_i32 = arith.constant 0 : i32
    %c0_i32_0 = arith.constant 0 : i32
    %c0_i32_1 = arith.constant 0 : i32
    return %c0_i32, %c0_i32_0 : i32, i32
  }
  func.func @transform_12(%arg0: i32) -> (i32, i32) {
    %c0_i32 = arith.constant 0 : i32
    %c0_i32_0 = arith.constant 0 : i32
    %c0_i32_1 = arith.constant 0 : i32
    return %c0_i32, %c0_i32_0 : i32, i32
  }
  func.func @transform_13(%arg0: i32) -> (i32, i32) {
    %c0_i32 = arith.constant 0 : i32
    %c0_i32_0 = arith.constant 0 : i32
    %c0_i32_1 = arith.constant 0 : i32
    return %c0_i32, %c0_i32_0 : i32, i32
  }
  func.func @transform_14(%arg0: i32) -> (i32, i32) {
    %c0_i32 = arith.constant 0 : i32
    %c0_i32_0 = arith.constant 0 : i32
    %c0_i32_1 = arith.constant 0 : i32
    return %c0_i32, %c0_i32_0 : i32, i32
  }
  func.func @transform_15(%arg0: i32) -> (i32, i32) {
    %c0_i32 = arith.constant 0 : i32
    %c0_i32_0 = arith.constant 0 : i32
    %c0_i32_1 = arith.constant 0 : i32
    return %c0_i32, %c0_i32_0 : i32, i32
  }
  func.func @transform_16(%arg0: i32) -> (i32, i32) {
    %c0_i32 = arith.constant 0 : i32
    %c0_i32_0 = arith.constant 0 : i32
    %c0_i32_1 = arith.constant 0 : i32
    return %c0_i32, %c0_i32_0 : i32, i32
  }
  func.func @transform_17(%arg0: i32) -> (i32, i32) {
    %c0_i32 = arith.constant 0 : i32
    %c0_i32_0 = arith.constant 0 : i32
    %c0_i32_1 = arith.constant 0 : i32
    return %c0_i32, %c0_i32_0 : i32, i32
  }
  func.func @transform_18(%arg0: i32) -> (i32, i32) {
    %c0_i32 = arith.constant 0 : i32
    %c0_i32_0 = arith.constant 0 : i32
    %c0_i32_1 = arith.constant 0 : i32
    return %c0_i32, %c0_i32_0 : i32, i32
  }
  func.func @transform_19(%arg0: i32) -> (i32, i32) {
    %c0_i32 = arith.constant 0 : i32
    %c0_i32_0 = arith.constant 0 : i32
    %c0_i32_1 = arith.constant 0 : i32
    return %c0_i32, %c0_i32_0 : i32, i32
  }
  func.func @transform_20(%arg0: i32) -> (i32, i32) {
    %c0_i32 = arith.constant 0 : i32
    %c0_i32_0 = arith.constant 0 : i32
    %c0_i32_1 = arith.constant 0 : i32
    return %c0_i32, %c0_i32_0 : i32, i32
  }
  func.func @transform_21(%arg0: i32) -> (i32, i32) {
    %c0_i32 = arith.constant 0 : i32
    %c0_i32_0 = arith.constant 0 : i32
    %c0_i32_1 = arith.constant 0 : i32
    return %c0_i32, %c0_i32_0 : i32, i32
  }
  func.func @transform_22(%arg0: i32) -> (i32, i32) {
    %c0_i32 = arith.constant 0 : i32
    %c0_i32_0 = arith.constant 0 : i32
    %c0_i32_1 = arith.constant 0 : i32
    return %c0_i32, %c0_i32_0 : i32, i32
  }
  func.func @transform_23(%arg0: i32) -> (i32, i32) {
    %c0_i32 = arith.constant 0 : i32
    %c0_i32_0 = arith.constant 0 : i32
    %c0_i32_1 = arith.constant 0 : i32
    return %c0_i32, %c0_i32_0 : i32, i32
  }
  func.func @transform_24(%arg0: i32) -> (i32, i32) {
    %c0_i32 = arith.constant 0 : i32
    %c0_i32_0 = arith.constant 0 : i32
    %c0_i32_1 = arith.constant 0 : i32
    return %c0_i32, %c0_i32_0 : i32, i32
  }
  func.func @transform_25(%arg0: i32) -> (i32, i32, i32) {
    %c0_i32 = arith.constant 0 : i32
    %c0_i32_0 = arith.constant 0 : i32
    %c0_i32_1 = arith.constant 0 : i32
    return %arg0, %c0_i32, %c0_i32_0 : i32, i32, i32
  }
}

</mosaic_0001>

<llo_original>
// kernel: light_time_forward.1
$region0: #{light_time_forward.1}
  #allocation0 [shape = 'u32[]', space=smem, size = 0x4, offset = 0x4, fixed_abs, tag = 'smem constant byte address 0x4 - core index']
  #allocation1 [shape = 'u32[72,128]{1,0:T(1,128)}', space=vmem, size = 0x9000, scoped, tag = 'internal scratch']
  #allocation2 [shape = 'f32[1,16,28]{2,1,0:T(8,128)}', space=vmem, size = 0x2000, scoped, tag = 'scratch operand']
  #allocation3 [shape = 'f32[1,16,28]{2,1,0:T(8,128)}', space=vmem, size = 0x2000, scoped, tag = 'scratch operand']
  #allocation4 [shape = 'f32[1,32,8]{2,1,0:T(8,128)}', space=vmem, size = 0x4000, scoped, tag = 'scratch operand']
  #allocation5 [shape = 'f32[1,1]{1,0:T(1,128)S(1)}', space=vmem, size = 0x200, scoped, tag = 'scoped memory for light_time_forward.1']
  %s0 = inlined_call_operand.vmem [shape: f32[2,48,5], index: 0, kind: input, shape index: {}]
  %s1 = inlined_call_operand.vmem [shape: f32[2,1,48], index: 1, kind: input, shape index: {}]
  %s2 = inlined_call_operand.hbm [shape: f32[48,576], index: 2, kind: input, shape index: {}]
  %s3 = inlined_call_operand.vmem [shape: f32[1,576], index: 3, kind: input, shape index: {}]
  %s4 = inlined_call_operand.vmem [shape: f32[5,5], index: 4, kind: input, shape index: {}]
  %s5 = inlined_call_operand.vmem [shape: f32[5,5], index: 5, kind: input, shape index: {}]
  %s6 = inlined_call_operand.<no memory space> [shape: f32[1,1], index: 6, kind: input, shape index: {}]
  %s7 = inlined_call_operand.vmem [shape: f32[4,16], index: 7, kind: input, shape index: {}]
  %s8 = inlined_call_operand.vmem [shape: f32[1,16], index: 8, kind: input, shape index: {}]
  %s9 = inlined_call_operand.vmem [shape: f32[36,8], index: 9, kind: input, shape index: {}]
  %s10 = inlined_call_operand.vmem [shape: f32[1,8], index: 10, kind: input, shape index: {}]
  %s11 = inlined_call_operand.vmem [shape: f32[16,8], index: 11, kind: input, shape index: {}]
  %s12 = inlined_call_operand.vmem [shape: f32[1,8], index: 12, kind: input, shape index: {}]
  %s13 = inlined_call_operand.vmem [shape: f32[8,1], index: 13, kind: input, shape index: {}]
  %s14 = inlined_call_operand.vmem [shape: f32[8,1], index: 14, kind: input, shape index: {}]
  %s15 = inlined_call_operand.vmem [shape: f32[12,8], index: 15, kind: input, shape index: {}]
  %s16 = inlined_call_operand.vmem [shape: f32[1,8], index: 16, kind: input, shape index: {}]
  %s17 = inlined_call_operand.vmem [shape: f32[24,1], index: 17, kind: input, shape index: {}]
  %s18 = inlined_call_operand.vmem [shape: f32[24,1], index: 18, kind: input, shape index: {}]
  %s19 = inlined_call_operand.vmem [shape: f32[8,12], index: 19, kind: input, shape index: {}]
  %s20 = inlined_call_operand.vmem [shape: f32[1,12], index: 20, kind: input, shape index: {}]
  %s21 = inlined_call_operand.vmem [shape: f32[32,1], index: 21, kind: input, shape index: {}]
  %s22 = inlined_call_operand.vmem [shape: f32[32,1], index: 22, kind: input, shape index: {}]
  %s23 = inlined_call_operand.vmem [shape: f32[32,5], index: 23, kind: input, shape index: {}]
  %s24 = inlined_call_operand.vmem [shape: f32[1,5], index: 24, kind: input, shape index: {}]
  %s25 = inlined_call_operand.vmem [shape: f32[2,12,5], index: 25, kind: output, shape index: {}]
  %s26 = sld [smem:[#allocation0]]
  $region137: #{light_time_forward.1} parent=0
    _
  %s28 = ssub.s32 1, %s26
  %s29 = scalar_select 0, %s28, %s26
  %v30 = vstv %s6
  %31 = vst [vmem:[#allocation5] sm:$0x1] %v30
  $region1: #{light_time_forward.1} parent=0
    #allocation6 [shape = 'u8[122880]{0}', space=vmem, size = 0x1e000, scoped, tag = 'input window, operand 2, single buffered']
    #allocation7 [shape = 's32[2]{0}', space=sflag, size = 0x8, scoped, tag = 'scoped memory for light_time_forward.1']
    %32 = vsyncpa [#allocation7], 0
    loop: start=0, step=1, limit=4
    $region2: #{light_time_forward.1} parent=1 // loop_pre_header
      _
    $region3: #{light_time_forward.1} parent=1 // loop_header
      %s34 = sphi 0, %s38
      %p35 = scmp.ge.s32.totalorder %s34, 4
      %s44 = sphi 0, %s46
      %s47 = sphi 0, %s44
      %s48 = sphi 0, %s47
      %s64 = sphi 0, %s48
      %s70 = sphi 0, %s72
      %s73 = sphi 0, %s70
      %s74 = sphi 0, %s73
      %s90 = sphi 0, %s74
      %s94 = sphi 0, %s94
      %s96 = sphi 0, %s94
      %s97 = sphi 0, %s96
      %s111 = sphi 0, %s97
      %s115 = sphi 0, %s115
      %s117 = sphi 0, %s115
      %s118 = sphi 0, %s117
      %s132 = sphi 0, %s118
      %s136 = sphi 0, %s136
      %s138 = sphi 0, %s136
      %s139 = sphi 0, %s138
      %s153 = sphi 0, %s139
      %s157 = sphi 0, %s157
      %s159 = sphi 0, %s157
      %s160 = sphi 0, %s159
      %s174 = sphi 0, %s160
      %s178 = sphi 0, %s178
      %s180 = sphi 0, %s178
      %s181 = sphi 0, %s180
      %s195 = sphi 0, %s181
      %s199 = sphi 0, %s199
      %s201 = sphi 0, %s199
      %s202 = sphi 0, %s201
      %s216 = sphi 0, %s202
      %s220 = sphi 0, %s220
      %s222 = sphi 0, %s220
      %s223 = sphi 0, %s222
      %s237 = sphi 0, %s223
      %s241 = sphi 0, %s241
      %s243 = sphi 0, %s241
      %s244 = sphi 0, %s243
      %s258 = sphi 0, %s244
      %s262 = sphi 0, %s262
      %s264 = sphi 0, %s262
      %s265 = sphi 0, %s264
      %s279 = sphi 0, %s265
      %s283 = sphi 0, %s283
      %s285 = sphi 0, %s283
      %s286 = sphi 0, %s285
      %s300 = sphi 0, %s286
      %s304 = sphi 0, %s304
      %s306 = sphi 0, %s304
      %s307 = sphi 0, %s306
      %s321 = sphi 0, %s307
      %s325 = sphi 0, %s325
      %s327 = sphi 0, %s325
      %s328 = sphi 0, %s327
      %s342 = sphi 0, %s328
      %s346 = sphi 0, %s346
      %s348 = sphi 0, %s346
      %s349 = sphi 0, %s348
      %s363 = sphi 0, %s349
      %s367 = sphi 0, %s367
      %s369 = sphi 0, %s367
      %s370 = sphi 0, %s369
      %s384 = sphi 0, %s370
      %s388 = sphi 0, %s388
      %s390 = sphi 0, %s388
      %s391 = sphi 0, %s390
      %s405 = sphi 0, %s391
      %s409 = sphi 0, %s409
      %s411 = sphi 0, %s409
      %s412 = sphi 0, %s411
      %s426 = sphi 0, %s412
      %s430 = sphi 0, %s430
      %s432 = sphi 0, %s430
      %s433 = sphi 0, %s432
      %s447 = sphi 0, %s433
      %s451 = sphi 0, %s451
      %s453 = sphi 0, %s451
      %s454 = sphi 0, %s453
      %s468 = sphi 0, %s454
      %s472 = sphi 0, %s472
      %s474 = sphi 0, %s472
      %s475 = sphi 0, %s474
      %s489 = sphi 0, %s475
      %s493 = sphi 0, %s493
      %s495 = sphi 0, %s493
      %s496 = sphi 0, %s495
      %s510 = sphi 0, %s496
      %s514 = sphi 0, %s514
      %s516 = sphi 0, %s514
      %s517 = sphi 0, %s516
      %s531 = sphi 0, %s517
      %s535 = sphi 0, %s535
      %s537 = sphi 0, %s535
      %s538 = sphi 0, %s537
      %s552 = sphi 0, %s538
      %s556 = sphi 0, %s556
      %s558 = sphi 0, %s556
      %s559 = sphi 0, %s558
      %s573 = sphi 0, %s559
      %s579 = sphi 0, %s581
      %s582 = sphi 0, %s579
      %s583 = sphi 0, %s582
      %s599 = sphi 0, %s583
    $region4: #{light_time_forward.1} parent=1 // loop_header_branch
      %37 = sbr.rel (%p35) target = $region8
    $region5: #{light_time_forward.1} parent=1 // loop_body
      %s39 = ssub.s32 %s34, 1
      %s40 = ssub.s32 %s34, 2
      %s41 = sadd.s32 %s34, 1
      %s42 = ssub.s32 %s34, %s41
      %p43 = scmp.eq.s32.totalorder %s42, 0
      %s45 = sadd.s32 %s44, 1
      %s46 = scalar_select %p43, %s44, %s45
      %p49 = pneg %p43
      %p50 = scmp.eq.s32.totalorder %s34, 1
      %p51 = por %p49, %p50
      %p52 = scmp.ne.s32.totalorder %s44, %s47
      %p53 = scmp.eq.s32.totalorder %s34, 0
      %p54 = por %p52, %p53
      %p55 = scmp.ne.s32.totalorder %s44, %s47
      %p56 = scmp.eq.s32.totalorder %s39, 1
      %p57 = por %p55, %p56
      %p58 = scmp.ne.s32.totalorder %s47, %s48
      %p59 = scmp.eq.s32.totalorder %s39, 0
      %p60 = por %p58, %p59
      %p61 = scmp.ne.s32.totalorder %s47, %s48
      %p62 = scmp.eq.s32.totalorder %s40, 1
      %p63 = por %p61, %p62
      %p65 = scmp.ne.s32.totalorder %s48, %s64
      %p66 = scmp.eq.s32.totalorder %s40, 0
      %p67 = por %p65, %p66
      %s68 = ssub.s32 %s34, %s41
      %p69 = scmp.eq.s32.totalorder %s68, 0
      %s71 = sadd.s32 %s70, 1
      %s72 = scalar_select %p69, %s70, %s71
      %p75 = pneg %p69
      %p76 = scmp.eq.s32.totalorder %s34, 1
      %p77 = por %p75, %p76
      %p78 = scmp.ne.s32.totalorder %s70, %s73
      %p79 = scmp.eq.s32.totalorder %s34, 0
      %p80 = por %p78, %p79
      %p81 = scmp.ne.s32.totalorder %s70, %s73
      %p82 = scmp.eq.s32.totalorder %s39, 1
      %p83 = por %p81, %p82
      %p84 = scmp.ne.s32.totalorder %s73, %s74
      %p85 = scmp.eq.s32.totalorder %s39, 0
      %p86 = por %p84, %p85
      %p87 = scmp.ne.s32.totalorder %s73, %s74
      %p88 = scmp.eq.s32.totalorder %s40, 1
      %p89 = por %p87, %p88
      %p91 = scmp.ne.s32.totalorder %s74, %s90
      %p92 = scmp.eq.s32.totalorder %s40, 0
      %p93 = por %p91, %p92
      %s95 = sadd.s32 %s94, 1
      %p98 = scmp.eq.s32.totalorder %s34, 1
      %p99 = scmp.ne.s32.totalorder %s94, %s96
      %p100 = scmp.eq.s32.totalorder %s34, 0
      %p101 = por %p99, %p100
      %p102 = scmp.ne.s32.totalorder %s94, %s96
      %p103 = scmp.eq.s32.totalorder %s39, 1
      %p104 = por %p102, %p103
      %p105 = scmp.ne.s32.totalorder %s96, %s97
      %p106 = scmp.eq.s32.totalorder %s39, 0
      %p107 = por %p105, %p106
      %p108 = scmp.ne.s32.totalorder %s96, %s97
      %p109 = scmp.eq.s32.totalorder %s40, 1
      %p110 = por %p108, %p109
      %p112 = scmp.ne.s32.totalorder %s97, %s111
      %p113 = scmp.eq.s32.totalorder %s40, 0
      %p114 = por %p112, %p113
      %s116 = sadd.s32 %s115, 1
      %p119 = scmp.eq.s32.totalorder %s34, 1
      %p120 = scmp.ne.s32.totalorder %s115, %s117
      %p121 = scmp.eq.s32.totalorder %s34, 0
      %p122 = por %p120, %p121
      %p123 = scmp.ne.s32.totalorder %s115, %s117
      %p124 = scmp.eq.s32.totalorder %s39, 1
      %p125 = por %p123, %p124
      %p126 = scmp.ne.s32.totalorder %s117, %s118
      %p127 = scmp.eq.s32.totalorder %s39, 0
      %p128 = por %p126, %p127
      %p129 = scmp.ne.s32.totalorder %s117, %s118
      %p130 = scmp.eq.s32.totalorder %s40, 1
      %p131 = por %p129, %p130
      %p133 = scmp.ne.s32.totalorder %s118, %s132
      %p134 = scmp.eq.s32.totalorder %s40, 0
      %p135 = por %p133, %p134
      %s137 = sadd.s32 %s136, 1
      %p140 = scmp.eq.s32.totalorder %s34, 1
      %p141 = scmp.ne.s32.totalorder %s136, %s138
      %p142 = scmp.eq.s32.totalorder %s34, 0
      %p143 = por %p141, %p142
      %p144 = scmp.ne.s32.totalorder %s136, %s138
      %p145 = scmp.eq.s32.totalorder %s39, 1
      %p146 = por %p144, %p145
      %p147 = scmp.ne.s32.totalorder %s138, %s139
      %p148 = scmp.eq.s32.totalorder %s39, 0
      %p149 = por %p147, %p148
      %p150 = scmp.ne.s32.totalorder %s138, %s139
      %p151 = scmp.eq.s32.totalorder %s40, 1
      %p152 = por %p150, %p151
      %p154 = scmp.ne.s32.totalorder %s139, %s153
      %p155 = scmp.eq.s32.totalorder %s40, 0
      %p156 = por %p154, %p155
      %s158 = sadd.s32 %s157, 1
      %p161 = scmp.eq.s32.totalorder %s34, 1
      %p162 = scmp.ne.s32.totalorder %s157, %s159
      %p163 = scmp.eq.s32.totalorder %s34, 0
      %p164 = por %p162, %p163
      %p165 = scmp.ne.s32.totalorder %s157, %s159
      %p166 = scmp.eq.s32.totalorder %s39, 1
      %p167 = por %p165, %p166
      %p168 = scmp.ne.s32.totalorder %s159, %s160
      %p169 = scmp.eq.s32.totalorder %s39, 0
      %p170 = por %p168, %p169
      %p171 = scmp.ne.s32.totalorder %s159, %s160
      %p172 = scmp.eq.s32.totalorder %s40, 1
      %p173 = por %p171, %p172
      %p175 = scmp.ne.s32.totalorder %s160, %s174
      %p176 = scmp.eq.s32.totalorder %s40, 0
      %p177 = por %p175, %p176
      %s179 = sadd.s32 %s178, 1
      %p182 = scmp.eq.s32.totalorder %s34, 1
      %p183 = scmp.ne.s32.totalorder %s178, %s180
      %p184 = scmp.eq.s32.totalorder %s34, 0
      %p185 = por %p183, %p184
      %p186 = scmp.ne.s32.totalorder %s178, %s180
      %p187 = scmp.eq.s32.totalorder %s39, 1
      %p188 = por %p186, %p187
      %p189 = scmp.ne.s32.totalorder %s180, %s181
      %p190 = scmp.eq.s32.totalorder %s39, 0
      %p191 = por %p189, %p190
      %p192 = scmp.ne.s32.totalorder %s180, %s181
      %p193 = scmp.eq.s32.totalorder %s40, 1
      %p194 = por %p192, %p193
      %p196 = scmp.ne.s32.totalorder %s181, %s195
      %p197 = scmp.eq.s32.totalorder %s40, 0
      %p198 = por %p196, %p197
      %s200 = sadd.s32 %s199, 1
      %p203 = scmp.eq.s32.totalorder %s34, 1
      %p204 = scmp.ne.s32.totalorder %s199, %s201
      %p205 = scmp.eq.s32.totalorder %s34, 0
      %p206 = por %p204, %p205
      %p207 = scmp.ne.s32.totalorder %s199, %s201
      %p208 = scmp.eq.s32.totalorder %s39, 1
      %p209 = por %p207, %p208
      %p210 = scmp.ne.s32.totalorder %s201, %s202
      %p211 = scmp.eq.s32.totalorder %s39, 0
      %p212 = por %p210, %p211
      %p213 = scmp.ne.s32.totalorder %s201, %s202
      %p214 = scmp.eq.s32.totalorder %s40, 1
      %p215 = por %p213, %p214
      %p217 = scmp.ne.s32.totalorder %s202, %s216
      %p218 = scmp.eq.s32.totalorder %s40, 0
      %p219 = por %p217, %p218
      %s221 = sadd.s32 %s220, 1
      %p224 = scmp.eq.s32.totalorder %s34, 1
      %p225 = scmp.ne.s32.totalorder %s220, %s222
      %p226 = scmp.eq.s32.totalorder %s34, 0
      %p227 = por %p225, %p226
      %p228 = scmp.ne.s32.totalorder %s220, %s222
      %p229 = scmp.eq.s32.totalorder %s39, 1
      %p230 = por %p228, %p229
      %p231 = scmp.ne.s32.totalorder %s222, %s223
      %p232 = scmp.eq.s32.totalorder %s39, 0
      %p233 = por %p231, %p232
      %p234 = scmp.ne.s32.totalorder %s222, %s223
      %p235 = scmp.eq.s32.totalorder %s40, 1
      %p236 = por %p234, %p235
      %p238 = scmp.ne.s32.totalorder %s223, %s237
      %p239 = scmp.eq.s32.totalorder %s40, 0
      %p240 = por %p238, %p239
      %s242 = sadd.s32 %s241, 1
      %p245 = scmp.eq.s32.totalorder %s34, 1
      %p246 = scmp.ne.s32.totalorder %s241, %s243
      %p247 = scmp.eq.s32.totalorder %s34, 0
      %p248 = por %p246, %p247
      %p249 = scmp.ne.s32.totalorder %s241, %s243
      %p250 = scmp.eq.s32.totalorder %s39, 1
      %p251 = por %p249, %p250
      %p252 = scmp.ne.s32.totalorder %s243, %s244
      %p253 = scmp.eq.s32.totalorder %s39, 0
      %p254 = por %p252, %p253
      %p255 = scmp.ne.s32.totalorder %s243, %s244
      %p256 = scmp.eq.s32.totalorder %s40, 1
      %p257 = por %p255, %p256
      %p259 = scmp.ne.s32.totalorder %s244, %s258
      %p260 = scmp.eq.s32.totalorder %s40, 0
      %p261 = por %p259, %p260
      %s263 = sadd.s32 %s262, 1
      %p266 = scmp.eq.s32.totalorder %s34, 1
      %p267 = scmp.ne.s32.totalorder %s262, %s264
      %p268 = scmp.eq.s32.totalorder %s34, 0
      %p269 = por %p267, %p268
      %p270 = scmp.ne.s32.totalorder %s262, %s264
      %p271 = scmp.eq.s32.totalorder %s39, 1
      %p272 = por %p270, %p271
      %p273 = scmp.ne.s32.totalorder %s264, %s265
      %p274 = scmp.eq.s32.totalorder %s39, 0
      %p275 = por %p273, %p274
      %p276 = scmp.ne.s32.totalorder %s264, %s265
      %p277 = scmp.eq.s32.totalorder %s40, 1
      %p278 = por %p276, %p277
      %p280 = scmp.ne.s32.totalorder %s265, %s279
      %p281 = scmp.eq.s32.totalorder %s40, 0
      %p282 = por %p280, %p281
      %s284 = sadd.s32 %s283, 1
      %p287 = scmp.eq.s32.totalorder %s34, 1
      %p288 = scmp.ne.s32.totalorder %s283, %s285
      %p289 = scmp.eq.s32.totalorder %s34, 0
      %p290 = por %p288, %p289
      %p291 = scmp.ne.s32.totalorder %s283, %s285
      %p292 = scmp.eq.s32.totalorder %s39, 1
      %p293 = por %p291, %p292
      %p294 = scmp.ne.s32.totalorder %s285, %s286
      %p295 = scmp.eq.s32.totalorder %s39, 0
      %p296 = por %p294, %p295
      %p297 = scmp.ne.s32.totalorder %s285, %s286
      %p298 = scmp.eq.s32.totalorder %s40, 1
      %p299 = por %p297, %p298
      %p301 = scmp.ne.s32.totalorder %s286, %s300
      %p302 = scmp.eq.s32.totalorder %s40, 0
      %p303 = por %p301, %p302
      %s305 = sadd.s32 %s304, 1
      %p308 = scmp.eq.s32.totalorder %s34, 1
      %p309 = scmp.ne.s32.totalorder %s304, %s306
      %p310 = scmp.eq.s32.totalorder %s34, 0
      %p311 = por %p309, %p310
      %p312 = scmp.ne.s32.totalorder %s304, %s306
      %p313 = scmp.eq.s32.totalorder %s39, 1
      %p314 = por %p312, %p313
      %p315 = scmp.ne.s32.totalorder %s306, %s307
      %p316 = scmp.eq.s32.totalorder %s39, 0
      %p317 = por %p315, %p316
      %p318 = scmp.ne.s32.totalorder %s306, %s307
      %p319 = scmp.eq.s32.totalorder %s40, 1
      %p320 = por %p318, %p319
      %p322 = scmp.ne.s32.totalorder %s307, %s321
      %p323 = scmp.eq.s32.totalorder %s40, 0
      %p324 = por %p322, %p323
      %s326 = sadd.s32 %s325, 1
      %p329 = scmp.eq.s32.totalorder %s34, 1
      %p330 = scmp.ne.s32.totalorder %s325, %s327
      %p331 = scmp.eq.s32.totalorder %s34, 0
      %p332 = por %p330, %p331
      %p333 = scmp.ne.s32.totalorder %s325, %s327
      %p334 = scmp.eq.s32.totalorder %s39, 1
      %p335 = por %p333, %p334
      %p336 = scmp.ne.s32.totalorder %s327, %s328
      %p337 = scmp.eq.s32.totalorder %s39, 0
      %p338 = por %p336, %p337
      %p339 = scmp.ne.s32.totalorder %s327, %s328
      %p340 = scmp.eq.s32.totalorder %s40, 1
      %p341 = por %p339, %p340
      %p343 = scmp.ne.s32.totalorder %s328, %s342
      %p344 = scmp.eq.s32.totalorder %s40, 0
      %p345 = por %p343, %p344
      %s347 = sadd.s32 %s346, 1
      %p350 = scmp.eq.s32.totalorder %s34, 1
      %p351 = scmp.ne.s32.totalorder %s346, %s348
      %p352 = scmp.eq.s32.totalorder %s34, 0
      %p353 = por %p351, %p352
      %p354 = scmp.ne.s32.totalorder %s346, %s348
      %p355 = scmp.eq.s32.totalorder %s39, 1
      %p356 = por %p354, %p355
      %p357 = scmp.ne.s32.totalorder %s348, %s349
      %p358 = scmp.eq.s32.totalorder %s39, 0
      %p359 = por %p357, %p358
      %p360 = scmp.ne.s32.totalorder %s348, %s349
      %p361 = scmp.eq.s32.totalorder %s40, 1
      %p362 = por %p360, %p361
      %p364 = scmp.ne.s32.totalorder %s349, %s363
      %p365 = scmp.eq.s32.totalorder %s40, 0
      %p366 = por %p364, %p365
      %s368 = sadd.s32 %s367, 1
      %p371 = scmp.eq.s32.totalorder %s34, 1
      %p372 = scmp.ne.s32.totalorder %s367, %s369
      %p373 = scmp.eq.s32.totalorder %s34, 0
      %p374 = por %p372, %p373
      %p375 = scmp.ne.s32.totalorder %s367, %s369
      %p376 = scmp.eq.s32.totalorder %s39, 1
      %p377 = por %p375, %p376
      %p378 = scmp.ne.s32.totalorder %s369, %s370
      %p379 = scmp.eq.s32.totalorder %s39, 0
      %p380 = por %p378, %p379
      %p381 = scmp.ne.s32.totalorder %s369, %s370
      %p382 = scmp.eq.s32.totalorder %s40, 1
      %p383 = por %p381, %p382
      %p385 = scmp.ne.s32.totalorder %s370, %s384
      %p386 = scmp.eq.s32.totalorder %s40, 0
      %p387 = por %p385, %p386
      %s389 = sadd.s32 %s388, 1
      %p392 = scmp.eq.s32.totalorder %s34, 1
      %p393 = scmp.ne.s32.totalorder %s388, %s390
      %p394 = scmp.eq.s32.totalorder %s34, 0
      %p395 = por %p393, %p394
      %p396 = scmp.ne.s32.totalorder %s388, %s390
      %p397 = scmp.eq.s32.totalorder %s39, 1
      %p398 = por %p396, %p397
      %p399 = scmp.ne.s32.totalorder %s390, %s391
      %p400 = scmp.eq.s32.totalorder %s39, 0
      %p401 = por %p399, %p400
      %p402 = scmp.ne.s32.totalorder %s390, %s391
      %p403 = scmp.eq.s32.totalorder %s40, 1
      %p404 = por %p402, %p403
      %p406 = scmp.ne.s32.totalorder %s391, %s405
      %p407 = scmp.eq.s32.totalorder %s40, 0
      %p408 = por %p406, %p407
      %s410 = sadd.s32 %s409, 1
      %p413 = scmp.eq.s32.totalorder %s34, 1
      %p414 = scmp.ne.s32.totalorder %s409, %s411
      %p415 = scmp.eq.s32.totalorder %s34, 0
      %p416 = por %p414, %p415
      %p417 = scmp.ne.s32.totalorder %s409, %s411
      %p418 = scmp.eq.s32.totalorder %s39, 1
      %p419 = por %p417, %p418
      %p420 = scmp.ne.s32.totalorder %s411, %s412
      %p421 = scmp.eq.s32.totalorder %s39, 0
      %p422 = por %p420, %p421
      %p423 = scmp.ne.s32.totalorder %s411, %s412
      %p424 = scmp.eq.s32.totalorder %s40, 1
      %p425 = por %p423, %p424
      %p427 = scmp.ne.s32.totalorder %s412, %s426
      %p428 = scmp.eq.s32.totalorder %s40, 0
      %p429 = por %p427, %p428
      %s431 = sadd.s32 %s430, 1
      %p434 = scmp.eq.s32.totalorder %s34, 1
      %p435 = scmp.ne.s32.totalorder %s430, %s432
      %p436 = scmp.eq.s32.totalorder %s34, 0
      %p437 = por %p435, %p436
      %p438 = scmp.ne.s32.totalorder %s430, %s432
      %p439 = scmp.eq.s32.totalorder %s39, 1
      %p440 = por %p438, %p439
      %p441 = scmp.ne.s32.totalorder %s432, %s433
      %p442 = scmp.eq.s32.totalorder %s39, 0
      %p443 = por %p441, %p442
      %p444 = scmp.ne.s32.totalorder %s432, %s433
      %p445 = scmp.eq.s32.totalorder %s40, 1
      %p446 = por %p444, %p445
      %p448 = scmp.ne.s32.totalorder %s433, %s447
      %p449 = scmp.eq.s32.totalorder %s40, 0
      %p450 = por %p448, %p449
      %s452 = sadd.s32 %s451, 1
      %p455 = scmp.eq.s32.totalorder %s34, 1
      %p456 = scmp.ne.s32.totalorder %s451, %s453
      %p457 = scmp.eq.s32.totalorder %s34, 0
      %p458 = por %p456, %p457
      %p459 = scmp.ne.s32.totalorder %s451, %s453
      %p460 = scmp.eq.s32.totalorder %s39, 1
      %p461 = por %p459, %p460
      %p462 = scmp.ne.s32.totalorder %s453, %s454
      %p463 = scmp.eq.s32.totalorder %s39, 0
      %p464 = por %p462, %p463
      %p465 = scmp.ne.s32.totalorder %s453, %s454
      %p466 = scmp.eq.s32.totalorder %s40, 1
      %p467 = por %p465, %p466
      %p469 = scmp.ne.s32.totalorder %s454, %s468
      %p470 = scmp.eq.s32.totalorder %s40, 0
      %p471 = por %p469, %p470
      %s473 = sadd.s32 %s472, 1
      %p476 = scmp.eq.s32.totalorder %s34, 1
      %p477 = scmp.ne.s32.totalorder %s472, %s474
      %p478 = scmp.eq.s32.totalorder %s34, 0
      %p479 = por %p477, %p478
      %p480 = scmp.ne.s32.totalorder %s472, %s474
      %p481 = scmp.eq.s32.totalorder %s39, 1
      %p482 = por %p480, %p481
      %p483 = scmp.ne.s32.totalorder %s474, %s475
      %p484 = scmp.eq.s32.totalorder %s39, 0
      %p485 = por %p483, %p484
      %p486 = scmp.ne.s32.totalorder %s474, %s475
      %p487 = scmp.eq.s32.totalorder %s40, 1
      %p488 = por %p486, %p487
      %p490 = scmp.ne.s32.totalorder %s475, %s489
      %p491 = scmp.eq.s32.totalorder %s40, 0
      %p492 = por %p490, %p491
      %s494 = sadd.s32 %s493, 1
      %p497 = scmp.eq.s32.totalorder %s34, 1
      %p498 = scmp.ne.s32.totalorder %s493, %s495
      %p499 = scmp.eq.s32.totalorder %s34, 0
      %p500 = por %p498, %p499
      %p501 = scmp.ne.s32.totalorder %s493, %s495
      %p502 = scmp.eq.s32.totalorder %s39, 1
      %p503 = por %p501, %p502
      %p504 = scmp.ne.s32.totalorder %s495, %s496
      %p505 = scmp.eq.s32.totalorder %s39, 0
      %p506 = por %p504, %p505
      %p507 = scmp.ne.s32.totalorder %s495, %s496
      %p508 = scmp.eq.s32.totalorder %s40, 1
      %p509 = por %p507, %p508
      %p511 = scmp.ne.s32.totalorder %s496, %s510
      %p512 = scmp.eq.s32.totalorder %s40, 0
      %p513 = por %p511, %p512
      %s515 = sadd.s32 %s514, 1
      %p518 = scmp.eq.s32.totalorder %s34, 1
      %p519 = scmp.ne.s32.totalorder %s514, %s516
      %p520 = scmp.eq.s32.totalorder %s34, 0
      %p521 = por %p519, %p520
      %p522 = scmp.ne.s32.totalorder %s514, %s516
      %p523 = scmp.eq.s32.totalorder %s39, 1
      %p524 = por %p522, %p523
      %p525 = scmp.ne.s32.totalorder %s516, %s517
      %p526 = scmp.eq.s32.totalorder %s39, 0
      %p527 = por %p525, %p526
      %p528 = scmp.ne.s32.totalorder %s516, %s517
      %p529 = scmp.eq.s32.totalorder %s40, 1
      %p530 = por %p528, %p529
      %p532 = scmp.ne.s32.totalorder %s517, %s531
      %p533 = scmp.eq.s32.totalorder %s40, 0
      %p534 = por %p532, %p533
      %s536 = sadd.s32 %s535, 1
      %p539 = scmp.eq.s32.totalorder %s34, 1
      %p540 = scmp.ne.s32.totalorder %s535, %s537
      %p541 = scmp.eq.s32.totalorder %s34, 0
      %p542 = por %p540, %p541
      %p543 = scmp.ne.s32.totalorder %s535, %s537
      %p544 = scmp.eq.s32.totalorder %s39, 1
      %p545 = por %p543, %p544
      %p546 = scmp.ne.s32.totalorder %s537, %s538
      %p547 = scmp.eq.s32.totalorder %s39, 0
      %p548 = por %p546, %p547
      %p549 = scmp.ne.s32.totalorder %s537, %s538
      %p550 = scmp.eq.s32.totalorder %s40, 1
      %p551 = por %p549, %p550
      %p553 = scmp.ne.s32.totalorder %s538, %s552
      %p554 = scmp.eq.s32.totalorder %s40, 0
      %p555 = por %p553, %p554
      %s557 = sadd.s32 %s556, 1
      %p560 = scmp.eq.s32.totalorder %s34, 1
      %p561 = scmp.ne.s32.totalorder %s556, %s558
      %p562 = scmp.eq.s32.totalorder %s34, 0
      %p563 = por %p561, %p562
      %p564 = scmp.ne.s32.totalorder %s556, %s558
      %p565 = scmp.eq.s32.totalorder %s39, 1
      %p566 = por %p564, %p565
      %p567 = scmp.ne.s32.totalorder %s558, %s559
      %p568 = scmp.eq.s32.totalorder %s39, 0
      %p569 = por %p567, %p568
      %p570 = scmp.ne.s32.totalorder %s558, %s559
      %p571 = scmp.eq.s32.totalorder %s40, 1
      %p572 = por %p570, %p571
      %p574 = scmp.ne.s32.totalorder %s559, %s573
      %p575 = scmp.eq.s32.totalorder %s40, 0
      %p576 = por %p574, %p575
      %s577 = ssub.s32 %s34, %s41
      %p578 = scmp.eq.s32.totalorder %s577, 0
      %s580 = sadd.s32 %s579, 1
      %s581 = scalar_select %p578, %s579, %s580
      %p584 = pneg %p578
      %p585 = scmp.eq.s32.totalorder %s34, 1
      %p586 = por %p584, %p585
      %p587 = scmp.ne.s32.totalorder %s579, %s582
      %p588 = scmp.eq.s32.totalorder %s34, 0
      %p589 = por %p587, %p588
      %p590 = scmp.ne.s32.totalorder %s579, %s582
      %p591 = scmp.eq.s32.totalorder %s39, 1
      %p592 = por %p590, %p591
      %p593 = scmp.ne.s32.totalorder %s582, %s583
      %p594 = scmp.eq.s32.totalorder %s39, 0
      %p595 = por %p593, %p594
      %p596 = scmp.ne.s32.totalorder %s582, %s583
      %p597 = scmp.eq.s32.totalorder %s40, 1
      %p598 = por %p596, %p597
      %p600 = scmp.ne.s32.totalorder %s583, %s599
      %p601 = scmp.eq.s32.totalorder %s40, 0
      %p602 = por %p600, %p601
      %p603 = scmp.le.s32.totalorder 1, %s34
      %p604 = scmp.lt.s32.totalorder %s34, 3
      %p605 = pnand %p603, %p604
      %p606 = pneg %p605
      // Predicated region
      $region9: #{light_time_forward.1} parent=5 // pred_check
        _
      $region10: #{light_time_forward.1} parent=5 // pred_check_branch
        %608 = sbr.rel (%p605) target = $region12
      $region11: #{light_time_forward.1} parent=5 // pred_region
        %s609 = ssub.s32 %s34, 1
        // Predicated region
        $region13: #{light_time_forward.1} parent=11 // pred_check
          %p610 = pneg %p107
        $region14: #{light_time_forward.1} parent=11 // pred_check_branch
          %612 = sbr.rel (%p610) target = $region16
        $region15: #{light_time_forward.1} parent=11 // pred_region
          %614 = vsyncadd [#allocation7], 0
          %s615 = sshll.u32 %s2, 4
          %s616 = int_to_ptr.hbm [resolvable:$true] %s615
          %s617 = sshll.u32 [#allocation6], 4
          %s618 = int_to_ptr.vmem [resolvable:$true] %s617
          %623 = dma.hbm_to_vmem [thread:$0]  %s616, 3840, %s618, [#allocation7], 640, 640, 40
        $region16: #{light_time_forward.1} parent=11 // pred_fallthru
          _
        // Predicated region
        $region17: #{light_time_forward.1} parent=11 // pred_check
          %p624 = pneg %p128
        $region18: #{light_time_forward.1} parent=11 // pred_check_branch
          %626 = sbr.rel (%p624) target = $region20
        $region19: #{light_time_forward.1} parent=11 // pred_region
          _
        $region20: #{light_time_forward.1} parent=11 // pred_fallthru
          _
        // Predicated region
        $region21: #{light_time_forward.1} parent=11 // pred_check
          %p627 = pneg %p149
        $region22: #{light_time_forward.1} parent=11 // pred_check_branch
          %629 = sbr.rel (%p627) target = $region24
        $region23: #{light_time_forward.1} parent=11 // pred_region
          _
        $region24: #{light_time_forward.1} parent=11 // pred_fallthru
          _
        // Predicated region
        $region25: #{light_time_forward.1} parent=11 // pred_check
          %p630 = pneg %p170
        $region26: #{light_time_forward.1} parent=11 // pred_check_branch
          %632 = sbr.rel (%p630) target = $region28
        $region27: #{light_time_forward.1} parent=11 // pred_region
          _
        $region28: #{light_time_forward.1} parent=11 // pred_fallthru
          _
        // Predicated region
        $region29: #{light_time_forward.1} parent=11 // pred_check
          %p633 = pneg %p191
        $region30: #{light_time_forward.1} parent=11 // pred_check_branch
          %635 = sbr.rel (%p633) target = $region32
        $region31: #{light_time_forward.1} parent=11 // pred_region
          _
        $region32: #{light_time_forward.1} parent=11 // pred_fallthru
          _
        // Predicated region
        $region33: #{light_time_forward.1} parent=11 // pred_check
          %p636 = pneg %p212
        $region34: #{light_time_forward.1} parent=11 // pred_check_branch
          %638 = sbr.rel (%p636) target = $region36
        $region35: #{light_time_forward.1} parent=11 // pred_region
          _
        $region36: #{light_time_forward.1} parent=11 // pred_fallthru
          _
        // Predicated region
        $region37: #{light_time_forward.1} parent=11 // pred_check
          %p639 = pneg %p233
        $region38: #{light_time_forward.1} parent=11 // pred_check_branch
          %641 = sbr.rel (%p639) target = $region40
        $region39: #{light_time_forward.1} parent=11 // pred_region
          _
        $region40: #{light_time_forward.1} parent=11 // pred_fallthru
          _
        // Predicated region
        $region41: #{light_time_forward.1} parent=11 // pred_check
          %p642 = pneg %p254
        $region42: #{light_time_forward.1} parent=11 // pred_check_branch
          %644 = sbr.rel (%p642) target = $region44
        $region43: #{light_time_forward.1} parent=11 // pred_region
          _
        $region44: #{light_time_forward.1} parent=11 // pred_fallthru
          _
        // Predicated region
        $region45: #{light_time_forward.1} parent=11 // pred_check
          %p645 = pneg %p275
        $region46: #{light_time_forward.1} parent=11 // pred_check_branch
          %647 = sbr.rel (%p645) target = $region48
        $region47: #{light_time_forward.1} parent=11 // pred_region
          _
        $region48: #{light_time_forward.1} parent=11 // pred_fallthru
          _
        // Predicated region
        $region49: #{light_time_forward.1} parent=11 // pred_check
          %p648 = pneg %p296
        $region50: #{light_time_forward.1} parent=11 // pred_check_branch
          %650 = sbr.rel (%p648) target = $region52
        $region51: #{light_time_forward.1} parent=11 // pred_region
          _
        $region52: #{light_time_forward.1} parent=11 // pred_fallthru
          _
        // Predicated region
        $region53: #{light_time_forward.1} parent=11 // pred_check
          %p651 = pneg %p317
        $region54: #{light_time_forward.1} parent=11 // pred_check_branch
          %653 = sbr.rel (%p651) target = $region56
        $region55: #{light_time_forward.1} parent=11 // pred_region
          _
        $region56: #{light_time_forward.1} parent=11 // pred_fallthru
          _
        // Predicated region
        $region57: #{light_time_forward.1} parent=11 // pred_check
          %p654 = pneg %p338
        $region58: #{light_time_forward.1} parent=11 // pred_check_branch
          %656 = sbr.rel (%p654) target = $region60
        $region59: #{light_time_forward.1} parent=11 // pred_region
          _
        $region60: #{light_time_forward.1} parent=11 // pred_fallthru
          _
        // Predicated region
        $region61: #{light_time_forward.1} parent=11 // pred_check
          %p657 = pneg %p359
        $region62: #{light_time_forward.1} parent=11 // pred_check_branch
          %659 = sbr.rel (%p657) target = $region64
        $region63: #{light_time_forward.1} parent=11 // pred_region
          _
        $region64: #{light_time_forward.1} parent=11 // pred_fallthru
          _
        // Predicated region
        $region65: #{light_time_forward.1} parent=11 // pred_check
          %p660 = pneg %p380
        $region66: #{light_time_forward.1} parent=11 // pred_check_branch
          %662 = sbr.rel (%p660) target = $region68
        $region67: #{light_time_forward.1} parent=11 // pred_region
          _
        $region68: #{light_time_forward.1} parent=11 // pred_fallthru
          _
        // Predicated region
        $region69: #{light_time_forward.1} parent=11 // pred_check
          %p663 = pneg %p401
        $region70: #{light_time_forward.1} parent=11 // pred_check_branch
          %665 = sbr.rel (%p663) target = $region72
        $region71: #{light_time_forward.1} parent=11 // pred_region
          _
        $region72: #{light_time_forward.1} parent=11 // pred_fallthru
          _
        // Predicated region
        $region73: #{light_time_forward.1} parent=11 // pred_check
          %p666 = pneg %p422
        $region74: #{light_time_forward.1} parent=11 // pred_check_branch
          %668 = sbr.rel (%p666) target = $region76
        $region75: #{light_time_forward.1} parent=11 // pred_region
          _
        $region76: #{light_time_forward.1} parent=11 // pred_fallthru
          _
        // Predicated region
        $region77: #{light_time_forward.1} parent=11 // pred_check
          %p669 = pneg %p443
        $region78: #{light_time_forward.1} parent=11 // pred_check_branch
          %671 = sbr.rel (%p669) target = $region80
        $region79: #{light_time_forward.1} parent=11 // pred_region
          _
        $region80: #{light_time_forward.1} parent=11 // pred_fallthru
          _
        // Predicated region
        $region81: #{light_time_forward.1} parent=11 // pred_check
          %p672 = pneg %p464
        $region82: #{light_time_forward.1} parent=11 // pred_check_branch
          %674 = sbr.rel (%p672) target = $region84
        $region83: #{light_time_forward.1} parent=11 // pred_region
          _
        $region84: #{light_time_forward.1} parent=11 // pred_fallthru
          _
        // Predicated region
        $region85: #{light_time_forward.1} parent=11 // pred_check
          %p675 = pneg %p485
        $region86: #{light_time_forward.1} parent=11 // pred_check_branch
          %677 = sbr.rel (%p675) target = $region88
        $region87: #{light_time_forward.1} parent=11 // pred_region
          _
        $region88: #{light_time_forward.1} parent=11 // pred_fallthru
          _
        // Predicated region
        $region89: #{light_time_forward.1} parent=11 // pred_check
          %p678 = pneg %p506
        $region90: #{light_time_forward.1} parent=11 // pred_check_branch
          %680 = sbr.rel (%p678) target = $region92
        $region91: #{light_time_forward.1} parent=11 // pred_region
          _
        $region92: #{light_time_forward.1} parent=11 // pred_fallthru
          _
        // Predicated region
        $region93: #{light_time_forward.1} parent=11 // pred_check
          %p681 = pneg %p527
        $region94: #{light_time_forward.1} parent=11 // pred_check_branch
          %683 = sbr.rel (%p681) target = $region96
        $region95: #{light_time_forward.1} parent=11 // pred_region
          _
        $region96: #{light_time_forward.1} parent=11 // pred_fallthru
          _
        // Predicated region
        $region97: #{light_time_forward.1} parent=11 // pred_check
          %p684 = pneg %p548
        $region98: #{light_time_forward.1} parent=11 // pred_check_branch
          %686 = sbr.rel (%p684) target = $region100
        $region99: #{light_time_forward.1} parent=11 // pred_region
          _
        $region100: #{light_time_forward.1} parent=11 // pred_fallthru
          _
        // Predicated region
        $region101: #{light_time_forward.1} parent=11 // pred_check
          %p687 = pneg %p569
        $region102: #{light_time_forward.1} parent=11 // pred_check_branch
          %689 = sbr.rel (%p687) target = $region104
        $region103: #{light_time_forward.1} parent=11 // pred_region
          _
        $region104: #{light_time_forward.1} parent=11 // pred_fallthru
          _
      $region12: #{light_time_forward.1} parent=5 // pred_fallthru
        _
      %p690 = scmp.lt.s32.totalorder %s34, 2
      // Predicated region
      $region105: #{light_time_forward.1} parent=5 // pred_check
        %p691 = pneg %p690
      $region106: #{light_time_forward.1} parent=5 // pred_check_branch
        %693 = sbr.rel (%p691) target = $region108
      $region107: #{light_time_forward.1} parent=5 // pred_region
        // Predicated region
        $region109: #{light_time_forward.1} parent=107 // pred_check
          %p694 = pneg %p54
        $region110: #{light_time_forward.1} parent=107 // pred_check_branch
          %696 = sbr.rel (%p694) target = $region112
        $region111: #{light_time_forward.1} parent=107 // pred_region
          %p697 = scmp.lt.s32.totalorder %s34, 1
          %s698 = scalar_select %p697, %s34, 1
          %s699 = smul.addr %s698, 6
          %s700 = smul.addr %s699, 8
          %s701 = scalar_lea.vmem %s0, %s700
        $region112: #{light_time_forward.1} parent=107 // pred_fallthru
          _
        // Predicated region
        $region113: #{light_time_forward.1} parent=107 // pred_check
          %p702 = pneg %p80
        $region114: #{light_time_forward.1} parent=107 // pred_check_branch
          %704 = sbr.rel (%p702) target = $region116
        $region115: #{light_time_forward.1} parent=107 // pred_region
          %p705 = scmp.lt.s32.totalorder %s34, 1
          %s706 = scalar_select %p705, %s34, 1
          %s707 = scalar_lea.vmem %s1, %s706
        $region116: #{light_time_forward.1} parent=107 // pred_fallthru
          _
      $region108: #{light_time_forward.1} parent=5 // pred_fallthru
        _
      %p708 = scmp.le.s32.totalorder 1, %s34
      %p709 = scmp.lt.s32.totalorder %s34, 3
      %p710 = pnand %p708, %p709
      %p711 = pneg %p710
      // Predicated region
      $region117: #{light_time_forward.1} parent=5 // pred_check
        _
      $region118: #{light_time_forward.1} parent=5 // pred_check_branch
        %713 = sbr.rel (%p710) target = $region120
      $region119: #{light_time_forward.1} parent=5 // pred_region
        %s714 = ssub.s32 %s34, 1
        // Predicated region
        $region121: #{light_time_forward.1} parent=119 // pred_check
          %p715 = pneg %p107
        $region122: #{light_time_forward.1} parent=119 // pred_check_branch
          %717 = sbr.rel (%p715) target = $region124
        $region123: #{light_time_forward.1} parent=119 // pred_region
          %719 = dma.done [#allocation7], 3840
        $region124: #{light_time_forward.1} parent=119 // pred_fallthru
          _
        %p720 = scmp.lt.s32.totalorder %s39, 1
        %s721 = scalar_select %p720, %s39, 1
        %s722 = smul.addr %s721, 6
        %s723 = smul.addr %s722, 8
        %s724 = scalar_lea.vmem %s0, %s723
        %p725 = pneg %p60
        %p726 = pneg %p57
        %p727 = scmp.lt.s32.totalorder %s39, 1
        %s728 = scalar_select %p727, %s39, 1
        %s729 = scalar_lea.vmem %s1, %s728
        %p730 = pneg %p86
        %p731 = pneg %p83
        %p732 = pneg %p107
        %p733 = pneg %p104
        %p734 = pneg %p128
        %p735 = pneg %p125
        %p736 = pneg %p149
        %p737 = pneg %p146
        %p738 = pneg %p170
        %p739 = pneg %p167
        %p740 = pneg %p191
        %p741 = pneg %p188
        %p742 = pneg %p212
        %p743 = pneg %p209
        %p744 = pneg %p233
        %p745 = pneg %p230
        %p746 = pneg %p254
        %p747 = pneg %p251
        %p748 = pneg %p275
        %p749 = pneg %p272
        %p750 = pneg %p296
        %p751 = pneg %p293
        %p752 = pneg %p317
        %p753 = pneg %p314
        %p754 = pneg %p338
        %p755 = pneg %p335
        %p756 = pneg %p359
        %p757 = pneg %p356
        %p758 = pneg %p380
        %p759 = pneg %p377
        %p760 = pneg %p401
        %p761 = pneg %p398
        %p762 = pneg %p422
        %p763 = pneg %p419
        %p764 = pneg %p443
        %p765 = pneg %p440
        %p766 = pneg %p464
        %p767 = pneg %p461
        %p768 = pneg %p485
        %p769 = pneg %p482
        %p770 = pneg %p506
        %p771 = pneg %p503
        %p772 = pneg %p527
        %p773 = pneg %p524
        %p774 = pneg %p548
        %p775 = pneg %p545
        %p776 = pneg %p569
        %p777 = pneg %p566
        %p778 = pneg %p595
        %p779 = pneg %p592
        %p780 = scmp.lt.s32.totalorder %s39, 1
        %s781 = scalar_select %p780, %s39, 1
        %s782 = smul.addr %s781, 2
        %s783 = smul.addr %s782, 8
        %s784 = scalar_lea.vmem %s25, %s783
        %p785 = scmp.lt.s32.totalorder %s39, 1
        %s786 = scalar_select %p785, %s39, 1
        %s787 = smul.addr %s786, 6
        %s788 = smul.addr %s787, 8
        %s789 = scalar_lea.vmem %s0, %s788
        %p790 = scmp.lt.s32.totalorder %s39, 1
        %s791 = scalar_select %p790, %s39, 1
        %s792 = scalar_lea.vmem %s1, %s791
        %p793 = scmp.lt.s32.totalorder %s39, 1
        %s794 = scalar_select %p793, %s39, 1
        %s795 = smul.addr %s794, 2
        %s796 = smul.addr %s795, 8
        %s797 = scalar_lea.vmem %s25, %s796
        %v798 = vld [vmem:[%s789] sm:$0xff]
        %v799 = vld [vmem:[%s789 + $0x8] sm:$0xff]
        %v800 = vld [vmem:[%s789 + $0x10] sm:$0xff]
        %v801 = vld [vmem:[%s789 + $0x18] sm:$0xff]
        %v802 = vld [vmem:[%s789 + $0x20] sm:$0xff]
        %v803 = vld [vmem:[%s789 + $0x28] sm:$0xff]
        %vm804 = vcmask 39936
        %v805 = vsel %vm804, %v798, 0.0
        %v806 = vsel %vm804, %v799, 0.0
        %v807 = vadd.f32 %v805, %v806
        %v808 = vsel %vm804, %v800, 0.0
        %v809 = vadd.f32 %v807, %v808
        %v810 = vsel %vm804, %v801, 0.0
        %v811 = vadd.f32 %v809, %v810
        %v812 = vsel %vm804, %v802, 0.0
        %v813 = vadd.f32 %v811, %v812
        %v814 = vsel %vm804, %v803, 0.0
        %v815 = vadd.f32 %v813, %v814
        %v816 = vrot.slane %v815, 4
        %v817 = vadd.f32 %v815, %v816
        %v818 = vrot.slane %v817, 2
        %v819 = vadd.f32 %v817, %v818
        %v820 = vrot.slane %v819, 1
        %v821 = vadd.f32 %v819, %v820
        %v822 = vrcp.pop 48.0
        %v823 = vmul.f32 48.0, %v822
        %v824 = vsub.f32 1.0, %v823
        %v825 = vmul.f32 %v822, %v824
        %v826 = vadd.f32 %v822, %v825
        %vm827 = vweird.f32 %v822
        %v828 = vsel %vm827, %v822, %v826
        %v829 = vmul.f32 %v821, %v828
        %v830 = vsub.f32 %v798, %v829
        %v831 = vsub.f32 %v799, %v829
        %v832 = vsub.f32 %v800, %v829
        %v833 = vsub.f32 %v801, %v829
        %v834 = vsub.f32 %v802, %v829
        %v835 = vsub.f32 %v803, %v829
        %v836 = vmul.f32 %v830, %v830
        %v837 = vmul.f32 %v831, %v831
        %v838 = vmul.f32 %v832, %v832
        %v839 = vmul.f32 %v833, %v833
        %v840 = vmul.f32 %v834, %v834
        %v841 = vmul.f32 %v835, %v835
        %v842 = vsel %vm804, %v836, 0.0
        %v843 = vsel %vm804, %v837, 0.0
        %v844 = vadd.f32 %v842, %v843
        %v845 = vsel %vm804, %v838, 0.0
        %v846 = vadd.f32 %v844, %v845
        %v847 = vsel %vm804, %v839, 0.0
        %v848 = vadd.f32 %v846, %v847
        %v849 = vsel %vm804, %v840, 0.0
        %v850 = vadd.f32 %v848, %v849
        %v851 = vsel %vm804, %v841, 0.0
        %v852 = vadd.f32 %v850, %v851
        %v853 = vrot.slane %v852, 4
        %v854 = vadd.f32 %v852, %v853
        %v855 = vrot.slane %v854, 2
        %v856 = vadd.f32 %v854, %v855
        %v857 = vrot.slane %v856, 1
        %v858 = vadd.f32 %v856, %v857
        %v859 = vmul.f32 %v858, %v828
        %v860 = vadd.f32 %v859, 1e-05
        %v861 = vrsqrt.pop %v860
        %v862 = vmul.f32 %v861, %v860
        %v863 = vmul.f32 %v862, %v861
        %v864 = vmul.f32 0.5, %v863
        %v865 = vsub.f32 1.5, %v864
        %v866 = vmul.f32 %v861, %v865
        %v867 = vmul.f32 %v860, %v866
        %vm868 = vcmp.eq.f32.partialorder %v860, inf
        %v869 = vsel %vm868, %v860, %v867
        %vm870 = vcmp.eq.f32.partialorder %v860, 0.0
        %v871 = vand.u32 %v860, 2147483648
        %v872 = vsel %vm870, %v871, %v869
        %v873 = vld [vmem:[%s792] sm:$0x1]
        %875 = vset.pattern.permute.xlu0 0
        %876 = vperm.xlu0 %875, %v829
        %v877 = vpop.permute.xlu0 %876
        %v879 = vsub.f32 %v873, %v877
        %881 = vset.pattern.permute.xlu0 0
        %882 = vperm.xlu0 %881, %v872
        %v883 = vpop.permute.xlu0 %882
        %v885 = vrcp.pop %v883
        %v886 = vmul.f32 %v883, %v885
        %v887 = vsub.f32 1.0, %v886
        %v888 = vmul.f32 %v885, %v887
        %v889 = vadd.f32 %v885, %v888
        %vm890 = vweird.f32 %v883
        %vm891 = vweird.f32 %v885
        %vm892 = vmor %vm890, %vm891
        %v893 = vsel %vm892, %v885, %v889
        %v894 = vand.u32 2147483647, %v883
        %vm895 = vcmp.eq.f32.partialorder %v894, 8.507059e+37
        %v896 = vand.u32 %v883, 2147483648
        %v897 = vor.u32 1.1754944e-38, %v896
        %v898 = vsel %vm895, %v897, %v893
        %v899 = vmul.f32 %v879, %v898
        %v900 = vld [vmem:[#allocation6] sm:$0xff]
        %v901 = vld [vmem:[#allocation6 + $0x8] sm:$0xff]
        %v902 = vld [vmem:[#allocation6 + $0x10] sm:$0xff]
        %v903 = vld [vmem:[#allocation6 + $0x18] sm:$0xff]
        %v904 = vld [vmem:[#allocation6 + $0x20] sm:$0xff]
        %v905 = vld [vmem:[#allocation6 + $0x28] sm:$0xff]
        %v906 = vld [vmem:[#allocation6 + $0x30] sm:$0xff]
        %v907 = vld [vmem:[#allocation6 + $0x38] sm:$0xff]
        %v908 = vld [vmem:[#allocation6 + $0x40] sm:$0xff]
        %v909 = vld [vmem:[#allocation6 + $0x48] sm:$0xff]
        %v910 = vld [vmem:[#allocation6 + $0x50] sm:$0xff]
        %v911 = vld [vmem:[#allocation6 + $0x58] sm:$0xff]
        %v912 = vld [vmem:[#allocation6 + $0x60] sm:$0xff]
        %v913 = vld [vmem:[#allocation6 + $0x68] sm:$0xff]
        %v914 = vld [vmem:[#allocation6 + $0x70] sm:$0xff]
        %v915 = vld [vmem:[#allocation6 + $0x78] sm:$0xff]
        %v916 = vld [vmem:[#allocation6 + $0x80] sm:$0xff]
        %v917 = vld [vmem:[#allocation6 + $0x88] sm:$0xff]
        %v918 = vld [vmem:[#allocation6 + $0x90] sm:$0xff]
        %v919 = vld [vmem:[#allocation6 + $0x98] sm:$0xff]
        %v920 = vld [vmem:[#allocation6 + $0xa0] sm:$0xff]
        %v921 = vld [vmem:[#allocation6 + $0xa8] sm:$0xff]
        %v922 = vld [vmem:[#allocation6 + $0xb0] sm:$0xff]
        %v923 = vld [vmem:[#allocation6 + $0xb8] sm:$0xff]
        %v924 = vld [vmem:[#allocation6 + $0xc0] sm:$0xff]
        %v925 = vld [vmem:[#allocation6 + $0xc8] sm:$0xff]
        %v926 = vld [vmem:[#allocation6 + $0xd0] sm:$0xff]
        %v927 = vld [vmem:[#allocation6 + $0xd8] sm:$0xff]
        %v928 = vld [vmem:[#allocation6 + $0xe0] sm:$0xff]
        %v929 = vld [vmem:[#allocation6 + $0xe8] sm:$0xff]
        %v930 = vld [vmem:[%s3] sm:$0x1f]
        %v932 = vperm.slane %v930, 0
        %v933 = vperm.slane %v930, 1
        %v934 = vperm.slane %v930, 2
        %v935 = vperm.slane %v930, 3
        %v936 = vperm.slane %v930, 4
        %vm942 = vcmask 392192
        %v944 = vsel %vm942, %v899, 0
        %946 = vmatpush.msra.mxu0 0.0
        %947 = vmatpush.msra.mxu0 0.0
        %948 = vmatpush.msra.mxu0 0.0
        %949 = vmatpush.msra.mxu0 0.0
        %950 = vmatpush.msra.mxu0 0.0
        %951 = vmatpush.msra.mxu0 0.0
        %952 = vmatpush.msra.mxu0 0.0
        %953 = vmatpush.msra.mxu0 0.0
        %954 = vmatpush.msra.mxu0 0.0
        %955 = vmatpush.msra.mxu0 0.0
        %956 = vmatpush.msra.mxu0 %v925
        %957 = vmatpush.msra.mxu0 %v920
        %958 = vmatpush.msra.mxu0 %v915
        %959 = vmatpush.msra.mxu0 %v910
        %960 = vmatpush.msra.mxu0 %v905
        %961 = vmatpush.msra.mxu0 %v900
        %962 = vmatmul.f32.gmra.mxu0 %v944
        %v963 = vpop.f32.mrf.mxu0
        %v964 = vadd.f32 %v932, %v963
        %965 = vdwg.mxu0
        %966 = vmatpush.msra.mxu0 0.0
        %967 = vmatpush.msra.mxu0 0.0
        %968 = vmatpush.msra.mxu0 0.0
        %969 = vmatpush.msra.mxu0 0.0
        %970 = vmatpush.msra.mxu0 0.0
        %971 = vmatpush.msra.mxu0 0.0
        %972 = vmatpush.msra.mxu0 0.0
        %973 = vmatpush.msra.mxu0 0.0
        %974 = vmatpush.msra.mxu0 0.0
        %975 = vmatpush.msra.mxu0 0.0
        %976 = vmatpush.msra.mxu0 %v926
        %977 = vmatpush.msra.mxu0 %v921
        %978 = vmatpush.msra.mxu0 %v916
        %979 = vmatpush.msra.mxu0 %v911
        %980 = vmatpush.msra.mxu0 %v906
        %981 = vmatpush.msra.mxu0 %v901
        %982 = vmatmul.f32.gmra.mxu0 %v944
        %v983 = vpop.f32.mrf.mxu0
        %v984 = vadd.f32 %v933, %v983
        %985 = vdwg.mxu0
        %986 = vmatpush.msra.mxu0 0.0
        %987 = vmatpush.msra.mxu0 0.0
        %988 = vmatpush.msra.mxu0 0.0
        %989 = vmatpush.msra.mxu0 0.0
        %990 = vmatpush.msra.mxu0 0.0
        %991 = vmatpush.msra.mxu0 0.0
        %992 = vmatpush.msra.mxu0 0.0
        %993 = vmatpush.msra.mxu0 0.0
        %994 = vmatpush.msra.mxu0 0.0
        %995 = vmatpush.msra.mxu0 0.0
        %996 = vmatpush.msra.mxu0 %v927
        %997 = vmatpush.msra.mxu0 %v922
        %998 = vmatpush.msra.mxu0 %v917
        %999 = vmatpush.msra.mxu0 %v912
        %1000 = vmatpush.msra.mxu0 %v907
        %1001 = vmatpush.msra.mxu0 %v902
        %1002 = vmatmul.f32.gmra.mxu0 %v944
        %v1003 = vpop.f32.mrf.mxu0
        %v1004 = vadd.f32 %v934, %v1003
        %1005 = vdwg.mxu0
        %1006 = vmatpush.msra.mxu0 0.0
        %1007 = vmatpush.msra.mxu0 0.0
        %1008 = vmatpush.msra.mxu0 0.0
        %1009 = vmatpush.msra.mxu0 0.0
        %1010 = vmatpush.msra.mxu0 0.0
        %1011 = vmatpush.msra.mxu0 0.0
        %1012 = vmatpush.msra.mxu0 0.0
        %1013 = vmatpush.msra.mxu0 0.0
        %1014 = vmatpush.msra.mxu0 0.0
        %1015 = vmatpush.msra.mxu0 0.0
        %1016 = vmatpush.msra.mxu0 %v928
        %1017 = vmatpush.msra.mxu0 %v923
        %1018 = vmatpush.msra.mxu0 %v918
        %1019 = vmatpush.msra.mxu0 %v913
        %1020 = vmatpush.msra.mxu0 %v908
        %1021 = vmatpush.msra.mxu0 %v903
        %1022 = vmatmul.f32.gmra.mxu0 %v944
        %v1023 = vpop.f32.mrf.mxu0
        %v1024 = vadd.f32 %v935, %v1023
        %1025 = vdwg.mxu0
        %1026 = vmatpush.msra.mxu0 0.0
        %1027 = vmatpush.msra.mxu0 0.0
        %1028 = vmatpush.msra.mxu0 0.0
        %1029 = vmatpush.msra.mxu0 0.0
        %1030 = vmatpush.msra.mxu0 0.0
        %1031 = vmatpush.msra.mxu0 0.0
        %1032 = vmatpush.msra.mxu0 0.0
        %1033 = vmatpush.msra.mxu0 0.0
        %1034 = vmatpush.msra.mxu0 0.0
        %1035 = vmatpush.msra.mxu0 0.0
        %1036 = vmatpush.msra.mxu0 %v929
        %1037 = vmatpush.msra.mxu0 %v924
        %1038 = vmatpush.msra.mxu0 %v919
        %1039 = vmatpush.msra.mxu0 %v914
        %1040 = vmatpush.msra.mxu0 %v909
        %1041 = vmatpush.msra.mxu0 %v904
        %1042 = vmatmul.f32.gmra.mxu0 %v944
        %v1043 = vpop.f32.mrf.mxu0
        %v1044 = vadd.f32 %v936, %v1043
        %1045 = vdwg.mxu0
        %vm1046 = vcmask 228352
        %1047 = vst.msk [vmem:[#allocation2] sm:$0xff] %vm1046, 0.0
        %1048 = vst.msk [vmem:[#allocation2 + $0x8] sm:$0xff] %vm1046, 0.0
        %1049 = vst.msk [vmem:[#allocation3] sm:$0xff] %vm1046, 0.0
        %1050 = vst.msk [vmem:[#allocation3 + $0x8] sm:$0xff] %vm1046, 0.0
        %1052 = vrot.lane.b32.xlu0 %v964, 2
        %v1053 = vpop.permute.xlu0 %1052
        %vm1055 = vcmask 204816
        %1056 = vst.msk [vmem:[#allocation2 + $0x2] sm:$0x1] %vm1055, %v1053
        %1058 = vrot.lane.b32.xlu0 %v1004, 98
        %v1059 = vpop.permute.xlu0 %1058
        %1061 = vst.msk [vmem:[#allocation3 + $0x2] sm:$0x1] %vm1055, %v1059
        %1062 = vrot.lane.b32.xlu0 %v964, 106
        %v1063 = vpop.permute.xlu0 %1062
        %1065 = vst.msk [vmem:[#allocation2 + $0x3] sm:$0x1] %vm1055, %v1063
        %1066 = vrot.lane.b32.xlu0 %v1004, 74
        %v1067 = vpop.permute.xlu0 %1066
        %1069 = vst.msk [vmem:[#allocation3 + $0x3] sm:$0x1] %vm1055, %v1067
        %1070 = vrot.lane.b32.xlu0 %v964, 82
        %v1071 = vpop.permute.xlu0 %1070
        %1073 = vst.msk [vmem:[#allocation2 + $0x4] sm:$0x1] %vm1055, %v1071
        %1074 = vrot.lane.b32.xlu0 %v1004, 50
        %v1075 = vpop.permute.xlu0 %1074
        %1077 = vst.msk [vmem:[#allocation3 + $0x4] sm:$0x1] %vm1055, %v1075
        %1078 = vrot.lane.b32.xlu0 %v964, 58
        %v1079 = vpop.permute.xlu0 %1078
        %1081 = vst.msk [vmem:[#allocation2 + $0x5] sm:$0x1] %vm1055, %v1079
        %1082 = vrot.lane.b32.xlu0 %v1004, 26
        %v1083 = vpop.permute.xlu0 %1082
        %1085 = vst.msk [vmem:[#allocation3 + $0x5] sm:$0x1] %vm1055, %v1083
        %1086 = vrot.lane.b32.xlu0 %v964, 34
        %v1087 = vpop.permute.xlu0 %1086
        %1089 = vst.msk [vmem:[#allocation2 + $0x6] sm:$0x1] %vm1055, %v1087
        %1091 = vrot.lane.b32.xlu0 %v1024, 2
        %v1092 = vpop.permute.xlu0 %1091
        %1094 = vst.msk [vmem:[#allocation3 + $0x6] sm:$0x1] %vm1055, %v1092
        %1096 = vrot.lane.b32.xlu0 %v964, 10
        %v1097 = vpop.permute.xlu0 %1096
        %1098 = vrot.lane.b32.xlu0 %v984, 10
        %v1099 = vpop.permute.xlu0 %1098
        %vm1100 = vcmask 80896
        %v1101 = vsel %vm1100, %v1097, %v1099
        %1103 = vst.msk [vmem:[#allocation2 + $0x7] sm:$0x1] %vm1055, %v1101
        %1104 = vrot.lane.b32.xlu0 %v1024, 106
        %v1105 = vpop.permute.xlu0 %1104
        %1107 = vst.msk [vmem:[#allocation3 + $0x7] sm:$0x1] %vm1055, %v1105
        %1108 = vrot.lane.b32.xlu0 %v984, 114
        %v1109 = vpop.permute.xlu0 %1108
        %1111 = vst.msk [vmem:[#allocation2 + $0x8] sm:$0x1] %vm1055, %v1109
        %1112 = vrot.lane.b32.xlu0 %v1024, 82
        %v1113 = vpop.permute.xlu0 %1112
        %1115 = vst.msk [vmem:[#allocation3 + $0x8] sm:$0x1] %vm1055, %v1113
        %1116 = vrot.lane.b32.xlu0 %v984, 90
        %v1117 = vpop.permute.xlu0 %1116
        %1119 = vst.msk [vmem:[#allocation2 + $0x9] sm:$0x1] %vm1055, %v1117
        %1120 = vrot.lane.b32.xlu0 %v1024, 58
        %v1121 = vpop.permute.xlu0 %1120
        %1123 = vst.msk [vmem:[#allocation3 + $0x9] sm:$0x1] %vm1055, %v1121
        %1124 = vrot.lane.b32.xlu0 %v984, 66
        %v1125 = vpop.permute.xlu0 %1124
        %1127 = vst.msk [vmem:[#allocation2 + $0xa] sm:$0x1] %vm1055, %v1125
        %1128 = vrot.lane.b32.xlu0 %v1024, 34
        %v1129 = vpop.permute.xlu0 %1128
        %1131 = vst.msk [vmem:[#allocation3 + $0xa] sm:$0x1] %vm1055, %v1129
        %1132 = vrot.lane.b32.xlu0 %v984, 42
        %v1133 = vpop.permute.xlu0 %1132
        %1135 = vst.msk [vmem:[#allocation2 + $0xb] sm:$0x1] %vm1055, %v1133
        %1137 = vrot.lane.b32.xlu0 %v1024, 10
        %v1138 = vpop.permute.xlu0 %1137
        %1139 = vrot.lane.b32.xlu0 %v1044, 10
        %v1140 = vpop.permute.xlu0 %1139
        %v1141 = vsel %vm1100, %v1138, %v1140
        %1143 = vst.msk [vmem:[#allocation3 + $0xb] sm:$0x1] %vm1055, %v1141
        %1144 = vrot.lane.b32.xlu0 %v984, 18
        %v1145 = vpop.permute.xlu0 %1144
        %1146 = vrot.lane.b32.xlu0 %v1004, 18
        %v1147 = vpop.permute.xlu0 %1146
        %vm1148 = vcmask 146432
        %v1149 = vsel %vm1148, %v1145, %v1147
        %1151 = vst.msk [vmem:[#allocation2 + $0xc] sm:$0x1] %vm1055, %v1149
        %1152 = vrot.lane.b32.xlu0 %v1044, 114
        %v1153 = vpop.permute.xlu0 %1152
        %1155 = vst.msk [vmem:[#allocation3 + $0xc] sm:$0x1] %vm1055, %v1153
        %1156 = vrot.lane.b32.xlu0 %v1004, 122
        %v1157 = vpop.permute.xlu0 %1156
        %1159 = vst.msk [vmem:[#allocation2 + $0xd] sm:$0x1] %vm1055, %v1157
        %1160 = vrot.lane.b32.xlu0 %v1044, 90
        %v1161 = vpop.permute.xlu0 %1160
        %1163 = vst.msk [vmem:[#allocation3 + $0xd] sm:$0x1] %vm1055, %v1161
        %v1164 = vld [vmem:[%s4] sm:$0x1f]
        %v1165 = vld [vmem:[%s5] sm:$0x1f]
        %v1166 = vld [vmem:[#allocation2] sm:$0xff]
        %v1167 = vld [vmem:[#allocation2 + $0x8] sm:$0xff]
        %v1168 = vld [vmem:[#allocation3] sm:$0xff]
        %v1169 = vld [vmem:[#allocation3 + $0x8] sm:$0xff]
        %s1171 = vtos %v1164
        %v1172 = vstv %s1171
        %v1174 = vmul.f32 %v1172, %v1166
        %v1175 = vmul.f32 %v1172, %v1167
        %v1176 = vadd.f32 %v1174, 0.0
        %v1177 = vadd.f32 %v1175, 0.0
        %s1179 = vtos %v1165
        %v1180 = vstv %s1179
        %v1182 = vmul.f32 %v1180, %v1168
        %v1183 = vmul.f32 %v1180, %v1169
        %v1184 = vadd.f32 %v1176, %v1182
        %v1185 = vadd.f32 %v1177, %v1183
        %1186 = vrot.lane.b32.xlu0 %v1164, 127
        %v1187 = vpop.permute.xlu0 %1186
        %s1188 = vtos %v1187
        %v1189 = vstv %s1188
        %v1191 = vmul.f32 %v1189, %v1166
        %v1192 = vmul.f32 %v1189, %v1167
        %1195 = vrot.lane.b32.xlu0 %v1191, 127
        %v1196 = vpop.permute.xlu0 %1195
        %1197 = vrot.lane.b32.xlu0 %v1192, 127
        %v1198 = vpop.permute.xlu0 %1197
        %v1201 = vadd.f32 %v1184, %v1196
        %v1202 = vadd.f32 %v1185, %v1198
        %1203 = vrot.lane.b32.xlu0 %v1165, 127
        %v1204 = vpop.permute.xlu0 %1203
        %s1205 = vtos %v1204
        %v1206 = vstv %s1205
        %v1208 = vmul.f32 %v1206, %v1168
        %v1209 = vmul.f32 %v1206, %v1169
        %1212 = vrot.lane.b32.xlu0 %v1208, 127
        %v1213 = vpop.permute.xlu0 %1212
        %1214 = vrot.lane.b32.xlu0 %v1209, 127
        %v1215 = vpop.permute.xlu0 %1214
        %v1218 = vadd.f32 %v1201, %v1213
        %v1219 = vadd.f32 %v1202, %v1215
        %1220 = vrot.lane.b32.xlu0 %v1164, 126
        %v1221 = vpop.permute.xlu0 %1220
        %s1222 = vtos %v1221
        %v1223 = vstv %s1222
        %v1225 = vmul.f32 %v1223, %v1166
        %v1226 = vmul.f32 %v1223, %v1167
        %1229 = vrot.lane.b32.xlu0 %v1225, 126
        %v1230 = vpop.permute.xlu0 %1229
        %1231 = vrot.lane.b32.xlu0 %v1226, 126
        %v1232 = vpop.permute.xlu0 %1231
        %v1235 = vadd.f32 %v1218, %v1230
        %v1236 = vadd.f32 %v1219, %v1232
        %1237 = vrot.lane.b32.xlu0 %v1165, 126
        %v1238 = vpop.permute.xlu0 %1237
        %s1239 = vtos %v1238
        %v1240 = vstv %s1239
        %v1242 = vmul.f32 %v1240, %v1168
        %v1243 = vmul.f32 %v1240, %v1169
        %1246 = vrot.lane.b32.xlu0 %v1242, 126
        %v1247 = vpop.permute.xlu0 %1246
        %1248 = vrot.lane.b32.xlu0 %v1243, 126
        %v1249 = vpop.permute.xlu0 %1248
        %v1252 = vadd.f32 %v1235, %v1247
        %v1253 = vadd.f32 %v1236, %v1249
        %1254 = vrot.lane.b32.xlu0 %v1164, 125
        %v1255 = vpop.permute.xlu0 %1254
        %s1256 = vtos %v1255
        %v1257 = vstv %s1256
        %v1259 = vmul.f32 %v1257, %v1166
        %v1260 = vmul.f32 %v1257, %v1167
        %1263 = vrot.lane.b32.xlu0 %v1259, 125
        %v1264 = vpop.permute.xlu0 %1263
        %1265 = vrot.lane.b32.xlu0 %v1260, 125
        %v1266 = vpop.permute.xlu0 %1265
        %v1269 = vadd.f32 %v1252, %v1264
        %v1270 = vadd.f32 %v1253, %v1266
        %1271 = vrot.lane.b32.xlu0 %v1165, 125
        %v1272 = vpop.permute.xlu0 %1271
        %s1273 = vtos %v1272
        %v1274 = vstv %s1273
        %v1276 = vmul.f32 %v1274, %v1168
        %v1277 = vmul.f32 %v1274, %v1169
        %1280 = vrot.lane.b32.xlu0 %v1276, 125
        %v1281 = vpop.permute.xlu0 %1280
        %1282 = vrot.lane.b32.xlu0 %v1277, 125
        %v1283 = vpop.permute.xlu0 %1282
        %v1286 = vadd.f32 %v1269, %v1281
        %v1287 = vadd.f32 %v1270, %v1283
        %1288 = vrot.lane.b32.xlu0 %v1164, 124
        %v1289 = vpop.permute.xlu0 %1288
        %s1290 = vtos %v1289
        %v1291 = vstv %s1290
        %v1293 = vmul.f32 %v1291, %v1166
        %v1294 = vmul.f32 %v1291, %v1167
        %1297 = vrot.lane.b32.xlu0 %v1293, 124
        %v1298 = vpop.permute.xlu0 %1297
        %1299 = vrot.lane.b32.xlu0 %v1294, 124
        %v1300 = vpop.permute.xlu0 %1299
        %v1303 = vadd.f32 %v1286, %v1298
        %v1304 = vadd.f32 %v1287, %v1300
        %1305 = vrot.lane.b32.xlu0 %v1165, 124
        %v1306 = vpop.permute.xlu0 %1305
        %s1307 = vtos %v1306
        %v1308 = vstv %s1307
        %v1310 = vmul.f32 %v1308, %v1168
        %v1311 = vmul.f32 %v1308, %v1169
        %1314 = vrot.lane.b32.xlu0 %v1310, 124
        %v1315 = vpop.permute.xlu0 %1314
        %1316 = vrot.lane.b32.xlu0 %v1311, 124
        %v1317 = vpop.permute.xlu0 %1316
        %v1320 = vadd.f32 %v1303, %v1315
        %v1321 = vadd.f32 %v1304, %v1317
        %v1322 = vrot.slane %v1164, 1
        %s1323 = vtos %v1322
        %v1324 = vstv %s1323
        %v1326 = vmul.f32 %v1324, %v1166
        %v1327 = vmul.f32 %v1324, %v1167
        %vm1330 = vcmask 1046528
        %v1331 = vrot.slane %v1326, 1
        %v1332 = vrot.slane %v1327, 1
        %v1333 = vsel %vm1330, %v1331, %v1332
        %v1336 = vadd.f32 %v1320, %v1333
        %v1337 = vadd.f32 %v1321, %v1332
        %v1338 = vrot.slane %v1165, 1
        %s1339 = vtos %v1338
        %v1340 = vstv %s1339
        %v1342 = vmul.f32 %v1340, %v1168
        %v1343 = vmul.f32 %v1340, %v1169
        %v1346 = vrot.slane %v1342, 1
        %v1347 = vrot.slane %v1343, 1
        %v1348 = vsel %vm1330, %v1346, %v1347
        %v1351 = vadd.f32 %v1336, %v1348
        %v1352 = vadd.f32 %v1337, %v1347
        %1353 = vrot.lane.b32.xlu0 %v1322, 127
        %v1354 = vpop.permute.xlu0 %1353
        %s1355 = vtos %v1354
        %v1356 = vstv %s1355
        %v1358 = vmul.f32 %v1356, %v1166
        %v1359 = vmul.f32 %v1356, %v1167
        %v1362 = vrot.slane %v1358, 1
        %v1363 = vrot.slane %v1359, 1
        %v1364 = vsel %vm1330, %v1362, %v1363
        %1365 = vrot.lane.b32.xlu0 %v1364, 127
        %v1366 = vpop.permute.xlu0 %1365
        %1367 = vrot.lane.b32.xlu0 %v1363, 127
        %v1368 = vpop.permute.xlu0 %1367
        %v1371 = vadd.f32 %v1351, %v1366
        %v1372 = vadd.f32 %v1352, %v1368
        %1373 = vrot.lane.b32.xlu0 %v1338, 127
        %v1374 = vpop.permute.xlu0 %1373
        %s1375 = vtos %v1374
        %v1376 = vstv %s1375
        %v1378 = vmul.f32 %v1376, %v1168
        %v1379 = vmul.f32 %v1376, %v1169
        %v1382 = vrot.slane %v1378, 1
        %v1383 = vrot.slane %v1379, 1
        %v1384 = vsel %vm1330, %v1382, %v1383
        %1385 = vrot.lane.b32.xlu0 %v1384, 127
        %v1386 = vpop.permute.xlu0 %1385
        %1387 = vrot.lane.b32.xlu0 %v1383, 127
        %v1388 = vpop.permute.xlu0 %1387
        %v1391 = vadd.f32 %v1371, %v1386
        %v1392 = vadd.f32 %v1372, %v1388
        %1393 = vrot.lane.b32.xlu0 %v1322, 126
        %v1394 = vpop.permute.xlu0 %1393
        %s1395 = vtos %v1394
        %v1396 = vstv %s1395
        %v1398 = vmul.f32 %v1396, %v1166
        %v1399 = vmul.f32 %v1396, %v1167
        %v1402 = vrot.slane %v1398, 1
        %v1403 = vrot.slane %v1399, 1
        %v1404 = vsel %vm1330, %v1402, %v1403
        %1405 = vrot.lane.b32.xlu0 %v1404, 126
        %v1406 = vpop.permute.xlu0 %1405
        %1407 = vrot.lane.b32.xlu0 %v1403, 126
        %v1408 = vpop.permute.xlu0 %1407
        %v1411 = vadd.f32 %v1391, %v1406
        %v1412 = vadd.f32 %v1392, %v1408
        %1413 = vrot.lane.b32.xlu0 %v1338, 126
        %v1414 = vpop.permute.xlu0 %1413
        %s1415 = vtos %v1414
        %v1416 = vstv %s1415
        %v1418 = vmul.f32 %v1416, %v1168
        %v1419 = vmul.f32 %v1416, %v1169
        %v1422 = vrot.slane %v1418, 1
        %v1423 = vrot.slane %v1419, 1
        %v1424 = vsel %vm1330, %v1422, %v1423
        %1425 = vrot.lane.b32.xlu0 %v1424, 126
        %v1426 = vpop.permute.xlu0 %1425
        %1427 = vrot.lane.b32.xlu0 %v1423, 126
        %v1428 = vpop.permute.xlu0 %1427
        %v1431 = vadd.f32 %v1411, %v1426
        %v1432 = vadd.f32 %v1412, %v1428
        %1433 = vrot.lane.b32.xlu0 %v1322, 125
        %v1434 = vpop.permute.xlu0 %1433
        %s1435 = vtos %v1434
        %v1436 = vstv %s1435
        %v1438 = vmul.f32 %v1436, %v1166
        %v1439 = vmul.f32 %v1436, %v1167
        %v1442 = vrot.slane %v1438, 1
        %v1443 = vrot.slane %v1439, 1
        %v1444 = vsel %vm1330, %v1442, %v1443
        %1445 = vrot.lane.b32.xlu0 %v1444, 125
        %v1446 = vpop.permute.xlu0 %1445
        %1447 = vrot.lane.b32.xlu0 %v1443, 125
        %v1448 = vpop.permute.xlu0 %1447
        %v1451 = vadd.f32 %v1431, %v1446
        %v1452 = vadd.f32 %v1432, %v1448
        %1453 = vrot.lane.b32.xlu0 %v1338, 125
        %v1454 = vpop.permute.xlu0 %1453
        %s1455 = vtos %v1454
        %v1456 = vstv %s1455
        %v1458 = vmul.f32 %v1456, %v1168
        %v1459 = vmul.f32 %v1456, %v1169
        %v1462 = vrot.slane %v1458, 1
        %v1463 = vrot.slane %v1459, 1
        %v1464 = vsel %vm1330, %v1462, %v1463
        %1465 = vrot.lane.b32.xlu0 %v1464, 125
        %v1466 = vpop.permute.xlu0 %1465
        %1467 = vrot.lane.b32.xlu0 %v1463, 125
        %v1468 = vpop.permute.xlu0 %1467
        %v1471 = vadd.f32 %v1451, %v1466
        %v1472 = vadd.f32 %v1452, %v1468
        %1473 = vrot.lane.b32.xlu0 %v1322, 124
        %v1474 = vpop.permute.xlu0 %1473
        %s1475 = vtos %v1474
        %v1476 = vstv %s1475
        %v1478 = vmul.f32 %v1476, %v1166
        %v1479 = vmul.f32 %v1476, %v1167
        %v1482 = vrot.slane %v1478, 1
        %v1483 = vrot.slane %v1479, 1
        %v1484 = vsel %vm1330, %v1482, %v1483
        %1485 = vrot.lane.b32.xlu0 %v1484, 124
        %v1486 = vpop.permute.xlu0 %1485
        %1487 = vrot.lane.b32.xlu0 %v1483, 124
        %v1488 = vpop.permute.xlu0 %1487
        %v1491 = vadd.f32 %v1471, %v1486
        %v1492 = vadd.f32 %v1472, %v1488
        %1493 = vrot.lane.b32.xlu0 %v1338, 124
        %v1494 = vpop.permute.xlu0 %1493
        %s1495 = vtos %v1494
        %v1496 = vstv %s1495
        %v1498 = vmul.f32 %v1496, %v1168
        %v1499 = vmul.f32 %v1496, %v1169
        %v1502 = vrot.slane %v1498, 1
        %v1503 = vrot.slane %v1499, 1
        %v1504 = vsel %vm1330, %v1502, %v1503
        %1505 = vrot.lane.b32.xlu0 %v1504, 124
        %v1506 = vpop.permute.xlu0 %1505
        %1507 = vrot.lane.b32.xlu0 %v1503, 124
        %v1508 = vpop.permute.xlu0 %1507
        %v1511 = vadd.f32 %v1491, %v1506
        %v1512 = vadd.f32 %v1492, %v1508
        %v1513 = vrot.slane %v1164, 2
        %s1514 = vtos %v1513
        %v1515 = vstv %s1514
        %v1517 = vmul.f32 %v1515, %v1166
        %v1518 = vmul.f32 %v1515, %v1167
        %vm1521 = vcmask 1045504
        %v1522 = vrot.slane %v1517, 2
        %v1523 = vrot.slane %v1518, 2
        %v1524 = vsel %vm1521, %v1522, %v1523
        %v1527 = vadd.f32 %v1511, %v1524
        %v1528 = vadd.f32 %v1512, %v1523
        %v1529 = vrot.slane %v1165, 2
        %s1530 = vtos %v1529
        %v1531 = vstv %s1530
        %v1533 = vmul.f32 %v1531, %v1168
        %v1534 = vmul.f32 %v1531, %v1169
        %v1537 = vrot.slane %v1533, 2
        %v1538 = vrot.slane %v1534, 2
        %v1539 = vsel %vm1521, %v1537, %v1538
        %v1542 = vadd.f32 %v1527, %v1539
        %v1543 = vadd.f32 %v1528, %v1538
        %1544 = vrot.lane.b32.xlu0 %v1513, 127
        %v1545 = vpop.permute.xlu0 %1544
        %s1546 = vtos %v1545
        %v1547 = vstv %s1546
        %v1549 = vmul.f32 %v1547, %v1166
        %v1550 = vmul.f32 %v1547, %v1167
        %v1553 = vrot.slane %v1549, 2
        %v1554 = vrot.slane %v1550, 2
        %v1555 = vsel %vm1521, %v1553, %v1554
        %1556 = vrot.lane.b32.xlu0 %v1555, 127
        %v1557 = vpop.permute.xlu0 %1556
        %1558 = vrot.lane.b32.xlu0 %v1554, 127
        %v1559 = vpop.permute.xlu0 %1558
        %v1562 = vadd.f32 %v1542, %v1557
        %v1563 = vadd.f32 %v1543, %v1559
        %1564 = vrot.lane.b32.xlu0 %v1529, 127
        %v1565 = vpop.permute.xlu0 %1564
        %s1566 = vtos %v1565
        %v1567 = vstv %s1566
        %v1569 = vmul.f32 %v1567, %v1168
        %v1570 = vmul.f32 %v1567, %v1169
        %v1573 = vrot.slane %v1569, 2
        %v1574 = vrot.slane %v1570, 2
        %v1575 = vsel %vm1521, %v1573, %v1574
        %1576 = vrot.lane.b32.xlu0 %v1575, 127
        %v1577 = vpop.permute.xlu0 %1576
        %1578 = vrot.lane.b32.xlu0 %v1574, 127
        %v1579 = vpop.permute.xlu0 %1578
        %v1582 = vadd.f32 %v1562, %v1577
        %v1583 = vadd.f32 %v1563, %v1579
        %1584 = vrot.lane.b32.xlu0 %v1513, 126
        %v1585 = vpop.permute.xlu0 %1584
        %s1586 = vtos %v1585
        %v1587 = vstv %s1586
        %v1589 = vmul.f32 %v1587, %v1166
        %v1590 = vmul.f32 %v1587, %v1167
        %v1593 = vrot.slane %v1589, 2
        %v1594 = vrot.slane %v1590, 2
        %v1595 = vsel %vm1521, %v1593, %v1594
        %1596 = vrot.lane.b32.xlu0 %v1595, 126
        %v1597 = vpop.permute.xlu0 %1596
        %1598 = vrot.lane.b32.xlu0 %v1594, 126
        %v1599 = vpop.permute.xlu0 %1598
        %v1602 = vadd.f32 %v1582, %v1597
        %v1603 = vadd.f32 %v1583, %v1599
        %1604 = vrot.lane.b32.xlu0 %v1529, 126
        %v1605 = vpop.permute.xlu0 %1604
        %s1606 = vtos %v1605
        %v1607 = vstv %s1606
        %v1609 = vmul.f32 %v1607, %v1168
        %v1610 = vmul.f32 %v1607, %v1169
        %v1613 = vrot.slane %v1609, 2
        %v1614 = vrot.slane %v1610, 2
        %v1615 = vsel %vm1521, %v1613, %v1614
        %1616 = vrot.lane.b32.xlu0 %v1615, 126
        %v1617 = vpop.permute.xlu0 %1616
        %1618 = vrot.lane.b32.xlu0 %v1614, 126
        %v1619 = vpop.permute.xlu0 %1618
        %v1622 = vadd.f32 %v1602, %v1617
        %v1623 = vadd.f32 %v1603, %v1619
        %1624 = vrot.lane.b32.xlu0 %v1513, 125
        %v1625 = vpop.permute.xlu0 %1624
        %s1626 = vtos %v1625
        %v1627 = vstv %s1626
        %v1629 = vmul.f32 %v1627, %v1166
        %v1630 = vmul.f32 %v1627, %v1167
        %v1633 = vrot.slane %v1629, 2
        %v1634 = vrot.slane %v1630, 2
        %v1635 = vsel %vm1521, %v1633, %v1634
        %1636 = vrot.lane.b32.xlu0 %v1635, 125
        %v1637 = vpop.permute.xlu0 %1636
        %1638 = vrot.lane.b32.xlu0 %v1634, 125
        %v1639 = vpop.permute.xlu0 %1638
        %v1642 = vadd.f32 %v1622, %v1637
        %v1643 = vadd.f32 %v1623, %v1639
        %1644 = vrot.lane.b32.xlu0 %v1529, 125
        %v1645 = vpop.permute.xlu0 %1644
        %s1646 = vtos %v1645
        %v1647 = vstv %s1646
        %v1649 = vmul.f32 %v1647, %v1168
        %v1650 = vmul.f32 %v1647, %v1169
        %v1653 = vrot.slane %v1649, 2
        %v1654 = vrot.slane %v1650, 2
        %v1655 = vsel %vm1521, %v1653, %v1654
        %1656 = vrot.lane.b32.xlu0 %v1655, 125
        %v1657 = vpop.permute.xlu0 %1656
        %1658 = vrot.lane.b32.xlu0 %v1654, 125
        %v1659 = vpop.permute.xlu0 %1658
        %v1662 = vadd.f32 %v1642, %v1657
        %v1663 = vadd.f32 %v1643, %v1659
        %1664 = vrot.lane.b32.xlu0 %v1513, 124
        %v1665 = vpop.permute.xlu0 %1664
        %s1666 = vtos %v1665
        %v1667 = vstv %s1666
        %v1669 = vmul.f32 %v1667, %v1166
        %v1670 = vmul.f32 %v1667, %v1167
        %v1673 = vrot.slane %v1669, 2
        %v1674 = vrot.slane %v1670, 2
        %v1675 = vsel %vm1521, %v1673, %v1674
        %1676 = vrot.lane.b32.xlu0 %v1675, 124
        %v1677 = vpop.permute.xlu0 %1676
        %1678 = vrot.lane.b32.xlu0 %v1674, 124
        %v1679 = vpop.permute.xlu0 %1678
        %v1682 = vadd.f32 %v1662, %v1677
        %v1683 = vadd.f32 %v1663, %v1679
        %1684 = vrot.lane.b32.xlu0 %v1529, 124
        %v1685 = vpop.permute.xlu0 %1684
        %s1686 = vtos %v1685
        %v1687 = vstv %s1686
        %v1689 = vmul.f32 %v1687, %v1168
        %v1690 = vmul.f32 %v1687, %v1169
        %v1693 = vrot.slane %v1689, 2
        %v1694 = vrot.slane %v1690, 2
        %v1695 = vsel %vm1521, %v1693, %v1694
        %1696 = vrot.lane.b32.xlu0 %v1695, 124
        %v1697 = vpop.permute.xlu0 %1696
        %1698 = vrot.lane.b32.xlu0 %v1694, 124
        %v1699 = vpop.permute.xlu0 %1698
        %v1702 = vadd.f32 %v1682, %v1697
        %v1703 = vadd.f32 %v1683, %v1699
        %v1704 = vrot.slane %v1164, 3
        %s1705 = vtos %v1704
        %v1706 = vstv %s1705
        %v1708 = vmul.f32 %v1706, %v1166
        %v1709 = vmul.f32 %v1706, %v1167
        %vm1712 = vcmask 1044480
        %v1713 = vrot.slane %v1708, 3
        %v1714 = vrot.slane %v1709, 3
        %v1715 = vsel %vm1712, %v1713, %v1714
        %v1718 = vadd.f32 %v1702, %v1715
        %v1719 = vadd.f32 %v1703, %v1714
        %v1720 = vrot.slane %v1165, 3
        %s1721 = vtos %v1720
        %v1722 = vstv %s1721
        %v1724 = vmul.f32 %v1722, %v1168
        %v1725 = vmul.f32 %v1722, %v1169
        %v1728 = vrot.slane %v1724, 3
        %v1729 = vrot.slane %v1725, 3
        %v1730 = vsel %vm1712, %v1728, %v1729
        %v1733 = vadd.f32 %v1718, %v1730
        %v1734 = vadd.f32 %v1719, %v1729
        %1735 = vrot.lane.b32.xlu0 %v1704, 127
        %v1736 = vpop.permute.xlu0 %1735
        %s1737 = vtos %v1736
        %v1738 = vstv %s1737
        %v1740 = vmul.f32 %v1738, %v1166
        %v1741 = vmul.f32 %v1738, %v1167
        %v1744 = vrot.slane %v1740, 3
        %v1745 = vrot.slane %v1741, 3
        %v1746 = vsel %vm1712, %v1744, %v1745
        %1747 = vrot.lane.b32.xlu0 %v1746, 127
        %v1748 = vpop.permute.xlu0 %1747
        %1749 = vrot.lane.b32.xlu0 %v1745, 127
        %v1750 = vpop.permute.xlu0 %1749
        %v1753 = vadd.f32 %v1733, %v1748
        %v1754 = vadd.f32 %v1734, %v1750
        %1755 = vrot.lane.b32.xlu0 %v1720, 127
        %v1756 = vpop.permute.xlu0 %1755
        %s1757 = vtos %v1756
        %v1758 = vstv %s1757
        %v1760 = vmul.f32 %v1758, %v1168
        %v1761 = vmul.f32 %v1758, %v1169
        %v1764 = vrot.slane %v1760, 3
        %v1765 = vrot.slane %v1761, 3
        %v1766 = vsel %vm1712, %v1764, %v1765
        %1767 = vrot.lane.b32.xlu0 %v1766, 127
        %v1768 = vpop.permute.xlu0 %1767
        %1769 = vrot.lane.b32.xlu0 %v1765, 127
        %v1770 = vpop.permute.xlu0 %1769
        %v1773 = vadd.f32 %v1753, %v1768
        %v1774 = vadd.f32 %v1754, %v1770
        %1775 = vrot.lane.b32.xlu0 %v1704, 126
        %v1776 = vpop.permute.xlu0 %1775
        %s1777 = vtos %v1776
        %v1778 = vstv %s1777
        %v1780 = vmul.f32 %v1778, %v1166
        %v1781 = vmul.f32 %v1778, %v1167
        %v1784 = vrot.slane %v1780, 3
        %v1785 = vrot.slane %v1781, 3
        %v1786 = vsel %vm1712, %v1784, %v1785
        %1787 = vrot.lane.b32.xlu0 %v1786, 126
        %v1788 = vpop.permute.xlu0 %1787
        %1789 = vrot.lane.b32.xlu0 %v1785, 126
        %v1790 = vpop.permute.xlu0 %1789
        %v1793 = vadd.f32 %v1773, %v1788
        %v1794 = vadd.f32 %v1774, %v1790
        %1795 = vrot.lane.b32.xlu0 %v1720, 126
        %v1796 = vpop.permute.xlu0 %1795
        %s1797 = vtos %v1796
        %v1798 = vstv %s1797
        %v1800 = vmul.f32 %v1798, %v1168
        %v1801 = vmul.f32 %v1798, %v1169
        %v1804 = vrot.slane %v1800, 3
        %v1805 = vrot.slane %v1801, 3
        %v1806 = vsel %vm1712, %v1804, %v1805
        %1807 = vrot.lane.b32.xlu0 %v1806, 126
        %v1808 = vpop.permute.xlu0 %1807
        %1809 = vrot.lane.b32.xlu0 %v1805, 126
        %v1810 = vpop.permute.xlu0 %1809
        %v1813 = vadd.f32 %v1793, %v1808
        %v1814 = vadd.f32 %v1794, %v1810
        %1815 = vrot.lane.b32.xlu0 %v1704, 125
        %v1816 = vpop.permute.xlu0 %1815
        %s1817 = vtos %v1816
        %v1818 = vstv %s1817
        %v1820 = vmul.f32 %v1818, %v1166
        %v1821 = vmul.f32 %v1818, %v1167
        %v1824 = vrot.slane %v1820, 3
        %v1825 = vrot.slane %v1821, 3
        %v1826 = vsel %vm1712, %v1824, %v1825
        %1827 = vrot.lane.b32.xlu0 %v1826, 125
        %v1828 = vpop.permute.xlu0 %1827
        %1829 = vrot.lane.b32.xlu0 %v1825, 125
        %v1830 = vpop.permute.xlu0 %1829
        %v1833 = vadd.f32 %v1813, %v1828
        %v1834 = vadd.f32 %v1814, %v1830
        %1835 = vrot.lane.b32.xlu0 %v1720, 125
        %v1836 = vpop.permute.xlu0 %1835
        %s1837 = vtos %v1836
        %v1838 = vstv %s1837
        %v1840 = vmul.f32 %v1838, %v1168
        %v1841 = vmul.f32 %v1838, %v1169
        %v1844 = vrot.slane %v1840, 3
        %v1845 = vrot.slane %v1841, 3
        %v1846 = vsel %vm1712, %v1844, %v1845
        %1847 = vrot.lane.b32.xlu0 %v1846, 125
        %v1848 = vpop.permute.xlu0 %1847
        %1849 = vrot.lane.b32.xlu0 %v1845, 125
        %v1850 = vpop.permute.xlu0 %1849
        %v1853 = vadd.f32 %v1833, %v1848
        %v1854 = vadd.f32 %v1834, %v1850
        %1855 = vrot.lane.b32.xlu0 %v1704, 124
        %v1856 = vpop.permute.xlu0 %1855
        %s1857 = vtos %v1856
        %v1858 = vstv %s1857
        %v1860 = vmul.f32 %v1858, %v1166
        %v1861 = vmul.f32 %v1858, %v1167
        %v1864 = vrot.slane %v1860, 3
        %v1865 = vrot.slane %v1861, 3
        %v1866 = vsel %vm1712, %v1864, %v1865
        %1867 = vrot.lane.b32.xlu0 %v1866, 124
        %v1868 = vpop.permute.xlu0 %1867
        %1869 = vrot.lane.b32.xlu0 %v1865, 124
        %v1870 = vpop.permute.xlu0 %1869
        %v1873 = vadd.f32 %v1853, %v1868
        %v1874 = vadd.f32 %v1854, %v1870
        %1875 = vrot.lane.b32.xlu0 %v1720, 124
        %v1876 = vpop.permute.xlu0 %1875
        %s1877 = vtos %v1876
        %v1878 = vstv %s1877
        %v1880 = vmul.f32 %v1878, %v1168
        %v1881 = vmul.f32 %v1878, %v1169
        %v1884 = vrot.slane %v1880, 3
        %v1885 = vrot.slane %v1881, 3
        %v1886 = vsel %vm1712, %v1884, %v1885
        %1887 = vrot.lane.b32.xlu0 %v1886, 124
        %v1888 = vpop.permute.xlu0 %1887
        %1889 = vrot.lane.b32.xlu0 %v1885, 124
        %v1890 = vpop.permute.xlu0 %1889
        %v1893 = vadd.f32 %v1873, %v1888
        %v1894 = vadd.f32 %v1874, %v1890
        %v1895 = vrot.slane %v1164, 4
        %s1896 = vtos %v1895
        %v1897 = vstv %s1896
        %v1899 = vmul.f32 %v1897, %v1166
        %v1900 = vmul.f32 %v1897, %v1167
        %vm1903 = vcmask 1043456
        %v1904 = vrot.slane %v1899, 4
        %v1905 = vrot.slane %v1900, 4
        %v1906 = vsel %vm1903, %v1904, %v1905
        %v1909 = vadd.f32 %v1893, %v1906
        %v1910 = vadd.f32 %v1894, %v1905
        %v1911 = vrot.slane %v1165, 4
        %s1912 = vtos %v1911
        %v1913 = vstv %s1912
        %v1915 = vmul.f32 %v1913, %v1168
        %v1916 = vmul.f32 %v1913, %v1169
        %v1919 = vrot.slane %v1915, 4
        %v1920 = vrot.slane %v1916, 4
        %v1921 = vsel %vm1903, %v1919, %v1920
        %v1924 = vadd.f32 %v1909, %v1921
        %v1925 = vadd.f32 %v1910, %v1920
        %1926 = vrot.lane.b32.xlu0 %v1895, 127
        %v1927 = vpop.permute.xlu0 %1926
        %s1928 = vtos %v1927
        %v1929 = vstv %s1928
        %v1931 = vmul.f32 %v1929, %v1166
        %v1932 = vmul.f32 %v1929, %v1167
        %v1935 = vrot.slane %v1931, 4
        %v1936 = vrot.slane %v1932, 4
        %v1937 = vsel %vm1903, %v1935, %v1936
        %1938 = vrot.lane.b32.xlu0 %v1937, 127
        %v1939 = vpop.permute.xlu0 %1938
        %1940 = vrot.lane.b32.xlu0 %v1936, 127
        %v1941 = vpop.permute.xlu0 %1940
        %v1944 = vadd.f32 %v1924, %v1939
        %v1945 = vadd.f32 %v1925, %v1941
        %1946 = vrot.lane.b32.xlu0 %v1911, 127
        %v1947 = vpop.permute.xlu0 %1946
        %s1948 = vtos %v1947
        %v1949 = vstv %s1948
        %v1951 = vmul.f32 %v1949, %v1168
        %v1952 = vmul.f32 %v1949, %v1169
        %v1955 = vrot.slane %v1951, 4
        %v1956 = vrot.slane %v1952, 4
        %v1957 = vsel %vm1903, %v1955, %v1956
        %1958 = vrot.lane.b32.xlu0 %v1957, 127
        %v1959 = vpop.permute.xlu0 %1958
        %1960 = vrot.lane.b32.xlu0 %v1956, 127
        %v1961 = vpop.permute.xlu0 %1960
        %v1964 = vadd.f32 %v1944, %v1959
        %v1965 = vadd.f32 %v1945, %v1961
        %1966 = vrot.lane.b32.xlu0 %v1895, 126
        %v1967 = vpop.permute.xlu0 %1966
        %s1968 = vtos %v1967
        %v1969 = vstv %s1968
        %v1971 = vmul.f32 %v1969, %v1166
        %v1972 = vmul.f32 %v1969, %v1167
        %v1975 = vrot.slane %v1971, 4
        %v1976 = vrot.slane %v1972, 4
        %v1977 = vsel %vm1903, %v1975, %v1976
        %1978 = vrot.lane.b32.xlu0 %v1977, 126
        %v1979 = vpop.permute.xlu0 %1978
        %1980 = vrot.lane.b32.xlu0 %v1976, 126
        %v1981 = vpop.permute.xlu0 %1980
        %v1984 = vadd.f32 %v1964, %v1979
        %v1985 = vadd.f32 %v1965, %v1981
        %1986 = vrot.lane.b32.xlu0 %v1911, 126
        %v1987 = vpop.permute.xlu0 %1986
        %s1988 = vtos %v1987
        %v1989 = vstv %s1988
        %v1991 = vmul.f32 %v1989, %v1168
        %v1992 = vmul.f32 %v1989, %v1169
        %v1995 = vrot.slane %v1991, 4
        %v1996 = vrot.slane %v1992, 4
        %v1997 = vsel %vm1903, %v1995, %v1996
        %1998 = vrot.lane.b32.xlu0 %v1997, 126
        %v1999 = vpop.permute.xlu0 %1998
        %2000 = vrot.lane.b32.xlu0 %v1996, 126
        %v2001 = vpop.permute.xlu0 %2000
        %v2004 = vadd.f32 %v1984, %v1999
        %v2005 = vadd.f32 %v1985, %v2001
        %2006 = vrot.lane.b32.xlu0 %v1895, 125
        %v2007 = vpop.permute.xlu0 %2006
        %s2008 = vtos %v2007
        %v2009 = vstv %s2008
        %v2011 = vmul.f32 %v2009, %v1166
        %v2012 = vmul.f32 %v2009, %v1167
        %v2015 = vrot.slane %v2011, 4
        %v2016 = vrot.slane %v2012, 4
        %v2017 = vsel %vm1903, %v2015, %v2016
        %2018 = vrot.lane.b32.xlu0 %v2017, 125
        %v2019 = vpop.permute.xlu0 %2018
        %2020 = vrot.lane.b32.xlu0 %v2016, 125
        %v2021 = vpop.permute.xlu0 %2020
        %v2024 = vadd.f32 %v2004, %v2019
        %v2025 = vadd.f32 %v2005, %v2021
        %2026 = vrot.lane.b32.xlu0 %v1911, 125
        %v2027 = vpop.permute.xlu0 %2026
        %s2028 = vtos %v2027
        %v2029 = vstv %s2028
        %v2031 = vmul.f32 %v2029, %v1168
        %v2032 = vmul.f32 %v2029, %v1169
        %v2035 = vrot.slane %v2031, 4
        %v2036 = vrot.slane %v2032, 4
        %v2037 = vsel %vm1903, %v2035, %v2036
        %2038 = vrot.lane.b32.xlu0 %v2037, 125
        %v2039 = vpop.permute.xlu0 %2038
        %2040 = vrot.lane.b32.xlu0 %v2036, 125
        %v2041 = vpop.permute.xlu0 %2040
        %v2044 = vadd.f32 %v2024, %v2039
        %v2045 = vadd.f32 %v2025, %v2041
        %2046 = vrot.lane.b32.xlu0 %v1895, 124
        %v2047 = vpop.permute.xlu0 %2046
        %s2048 = vtos %v2047
        %v2049 = vstv %s2048
        %v2051 = vmul.f32 %v2049, %v1166
        %v2052 = vmul.f32 %v2049, %v1167
        %v2055 = vrot.slane %v2051, 4
        %v2056 = vrot.slane %v2052, 4
        %v2057 = vsel %vm1903, %v2055, %v2056
        %2058 = vrot.lane.b32.xlu0 %v2057, 124
        %v2059 = vpop.permute.xlu0 %2058
        %2060 = vrot.lane.b32.xlu0 %v2056, 124
        %v2061 = vpop.permute.xlu0 %2060
        %v2064 = vadd.f32 %v2044, %v2059
        %v2065 = vadd.f32 %v2045, %v2061
        %2066 = vrot.lane.b32.xlu0 %v1911, 124
        %v2067 = vpop.permute.xlu0 %2066
        %s2068 = vtos %v2067
        %v2069 = vstv %s2068
        %v2071 = vmul.f32 %v2069, %v1168
        %v2072 = vmul.f32 %v2069, %v1169
        %v2075 = vrot.slane %v2071, 4
        %v2076 = vrot.slane %v2072, 4
        %v2077 = vsel %vm1903, %v2075, %v2076
        %2078 = vrot.lane.b32.xlu0 %v2077, 124
        %v2079 = vpop.permute.xlu0 %2078
        %2080 = vrot.lane.b32.xlu0 %v2076, 124
        %v2081 = vpop.permute.xlu0 %2080
        %v2084 = vadd.f32 %v2064, %v2079
        %v2085 = vadd.f32 %v2065, %v2081
        %v2086 = vld [vmem:[#allocation5] sm:$0x1]
        %v2088 = vperm.slane %v2086, 0
        %2089 = vset.pattern.permute.xlu0 0
        %2090 = vperm.xlu0 %2089, %v2088
        %v2091 = vpop.permute.xlu0 %2090
        %v2093 = vadd.f32 %v2084, %v2091
        %v2094 = vadd.f32 %v2085, %v2091
        %2095 = vxpose.xlu0.b32.start [1/16] %v2093, 128
        %2096 = vxpose.xlu0.b32.cont [2/16] %v2094, 128
        %2097 = vxpose.xlu0.b32.cont [3/16] 0.0, 128
        %2098 = vxpose.xlu0.b32.cont [4/16] 0.0, 128
        %2099 = vxpose.xlu0.b32.cont [5/16] 0.0, 128
        %2100 = vxpose.xlu0.b32.cont [6/16] 0.0, 128
        %2101 = vxpose.xlu0.b32.cont [7/16] 0.0, 128
        %2102 = vxpose.xlu0.b32.cont [8/16] 0.0, 128
        %2103 = vxpose.xlu0.b32.cont [9/16] 0.0, 128
        %2104 = vxpose.xlu0.b32.cont [10/16] 0.0, 128
        %2105 = vxpose.xlu0.b32.cont [11/16] 0.0, 128
        %2106 = vxpose.xlu0.b32.cont [12/16] 0.0, 128
        %2107 = vxpose.xlu0.b32.cont [13/16] 0.0, 128
        %2108 = vxpose.xlu0.b32.cont [14/16] 0.0, 128
        %2109 = vxpose.xlu0.b32.cont [15/16] 0.0, 128
        %2110 = vxpose.xlu0.b32.end [16/16] 0.0, 128
        %v2111 = vpop.trf.xlu0
        %v2112 = vpop.trf.xlu0
        %v2113 = vpop.trf.xlu0
        %v2114 = vpop.trf.xlu0
        %v2115 = vpop.trf.xlu0
        %v2116 = vpop.trf.xlu0
        %v2117 = vpop.trf.xlu0
        %v2118 = vpop.trf.xlu0
        %v2119 = vpop.trf.xlu0
        %v2120 = vpop.trf.xlu0
        %v2121 = vpop.trf.xlu0
        %v2122 = vpop.trf.xlu0
        %v2123 = vpop.trf.xlu0
        %v2124 = vpop.trf.xlu0
        %v2125 = vpop.trf.xlu0
        %v2126 = vpop.trf.xlu0
        %v2127 = vld [vmem:[%s15] sm:$0xff]
        %v2128 = vld [vmem:[%s15 + $0x8] sm:$0xf]
        %v2129 = vld [vmem:[%s16] sm:$0x1]
        %v2131 = vperm.slane %v2129, 0
        %vm2133 = vcmask 97280
        %v2135 = vsel %vm2133, %v2111, 0
        %v2138 = vsel %vm2133, %v2112, 0
        %v2141 = vsel %vm2133, %v2113, 0
        %v2144 = vsel %vm1903, %v2128, 0
        %2146 = vmatpush.msra.mxu0 0.0
        %2147 = vmatpush.msra.mxu0 0.0
        %2148 = vmatpush.msra.mxu0 0.0
        %2149 = vmatpush.msra.mxu0 0.0
        %2150 = vmatpush.msra.mxu0 0.0
        %2151 = vmatpush.msra.mxu0 0.0
        %2152 = vmatpush.msra.mxu0 0.0
        %2153 = vmatpush.msra.mxu0 0.0
        %2154 = vmatpush.msra.mxu0 0.0
        %2155 = vmatpush.msra.mxu0 0.0
        %2156 = vmatpush.msra.mxu0 0.0
        %2157 = vmatpush.msra.mxu0 0.0
        %2158 = vmatpush.msra.mxu0 0.0
        %2159 = vmatpush.msra.mxu0 0.0
        %2160 = vmatpush.msra.mxu0 %v2144
        %2161 = vmatpush.msra.mxu0 %v2127
        %2162 = vmatmul.f32.gmra.mxu0 %v2135
        %v2163 = vpop.f32.mrf.mxu0
        %v2164 = vadd.f32 %v2131, %v2163
        %2165 = vmatmul.f32.gmra.mxu0 %v2138
        %v2166 = vpop.f32.mrf.mxu0
        %v2167 = vadd.f32 %v2131, %v2166
        %2168 = vmatmul.f32.gmra.mxu0 %v2141
        %v2169 = vpop.f32.mrf.mxu0
        %v2170 = vadd.f32 %v2131, %v2169
        %2171 = vdwg.mxu0
        %v2172 = vld [vmem:[%s17] sm:$0xff]
        %v2173 = vld [vmem:[%s17 + $0x8] sm:$0xff]
        %v2174 = vld [vmem:[%s17 + $0x10] sm:$0xff]
        %2176 = vset.pattern.permute.xlu0 0
        %2177 = vperm.xlu0 %2176, %v2172
        %v2178 = vpop.permute.xlu0 %2177
        %2181 = vset.pattern.permute.xlu0 0
        %2182 = vperm.xlu0 %2181, %v2173
        %v2183 = vpop.permute.xlu0 %2182
        %2186 = vset.pattern.permute.xlu0 0
        %2187 = vperm.xlu0 %2186, %v2174
        %v2188 = vpop.permute.xlu0 %2187
        %v2190 = vmul.f32 %v2164, %v2178
        %v2191 = vmul.f32 %v2167, %v2183
        %v2192 = vmul.f32 %v2170, %v2188
        %v2193 = vld [vmem:[%s18] sm:$0xff]
        %v2194 = vld [vmem:[%s18 + $0x8] sm:$0xff]
        %v2195 = vld [vmem:[%s18 + $0x10] sm:$0xff]
        %2197 = vset.pattern.permute.xlu0 0
        %2198 = vperm.xlu0 %2197, %v2193
        %v2199 = vpop.permute.xlu0 %2198
        %2202 = vset.pattern.permute.xlu0 0
        %2203 = vperm.xlu0 %2202, %v2194
        %v2204 = vpop.permute.xlu0 %2203
        %2207 = vset.pattern.permute.xlu0 0
        %2208 = vperm.xlu0 %2207, %v2195
        %v2209 = vpop.permute.xlu0 %2208
        %v2211 = vadd.f32 %v2190, %v2199
        %v2212 = vadd.f32 %v2191, %v2204
        %v2213 = vadd.f32 %v2192, %v2209
        %v2214 = vmax.f32 %v2211, 0.0
        %v2215 = vmax.f32 %v2212, 0.0
        %v2216 = vmax.f32 %v2213, 0.0
        %v2217 = vrcp.pop %v872
        %v2218 = vmul.f32 %v872, %v2217
        %v2219 = vsub.f32 1.0, %v2218
        %v2220 = vmul.f32 %v2217, %v2219
        %v2221 = vadd.f32 %v2217, %v2220
        %vm2222 = vweird.f32 %v872
        %vm2223 = vweird.f32 %v2217
        %vm2224 = vmor %vm2222, %vm2223
        %v2225 = vsel %vm2224, %v2217, %v2221
        %v2226 = vand.u32 2147483647, %v872
        %vm2227 = vcmp.eq.f32.partialorder %v2226, 8.507059e+37
        %v2228 = vand.u32 %v872, 2147483648
        %v2229 = vor.u32 1.1754944e-38, %v2228
        %v2230 = vsel %vm2227, %v2229, %v2225
        %v2231 = vmul.f32 %v831, %v2230
        %v2232 = vmul.f32 %v832, %v2230
        %v2233 = vmul.f32 %v833, %v2230
        %v2234 = vmul.f32 %v834, %v2230
        %v2235 = vmul.f32 %v835, %v2230
        %v2236 = vld [vmem:[%s7] sm:$0xf]
        %v2237 = vld [vmem:[%s8] sm:$0x1]
        %v2239 = vperm.slane %v2237, 0
        %v2246 = vrot.slane %v2231, 4
        %v2247 = vrot.slane %v2232, 4
        %v2248 = vsel %vm1903, %v2246, %v2247
        %v2249 = vrot.slane %v2233, 4
        %v2250 = vsel %vm1903, %v2247, %v2249
        %v2251 = vrot.slane %v2234, 4
        %v2252 = vsel %vm1903, %v2249, %v2251
        %v2253 = vrot.slane %v2235, 4
        %v2254 = vsel %vm1903, %v2251, %v2253
        %2255 = vrot.lane.b32.xlu0 %v2248, 127
        %v2256 = vpop.permute.xlu0 %2255
        %2257 = vrot.lane.b32.xlu0 %v2250, 127
        %v2258 = vpop.permute.xlu0 %2257
        %2259 = vrot.lane.b32.xlu0 %v2252, 127
        %v2260 = vpop.permute.xlu0 %2259
        %2261 = vrot.lane.b32.xlu0 %v2254, 127
        %v2262 = vpop.permute.xlu0 %2261
        %2263 = vrot.lane.b32.xlu0 %v2253, 127
        %v2264 = vpop.permute.xlu0 %2263
        %vm2265 = vcmask 31744
        %v2266 = vsel %vm2265, %v2256, 0
        %v2268 = vsel %vm2265, %v2258, 0
        %v2270 = vsel %vm2265, %v2260, 0
        %v2272 = vsel %vm2265, %v2262, 0
        %v2274 = vsel %vm2265, %v2264, 0
        %v2277 = vsel %vm1903, %v2236, 0
        %2279 = vmatpush.msra.mxu0 0.0
        %2280 = vmatpush.msra.mxu0 0.0
        %2281 = vmatpush.msra.mxu0 0.0
        %2282 = vmatpush.msra.mxu0 0.0
        %2283 = vmatpush.msra.mxu0 0.0
        %2284 = vmatpush.msra.mxu0 0.0
        %2285 = vmatpush.msra.mxu0 0.0
        %2286 = vmatpush.msra.mxu0 0.0
        %2287 = vmatpush.msra.mxu0 0.0
        %2288 = vmatpush.msra.mxu0 0.0
        %2289 = vmatpush.msra.mxu0 0.0
        %2290 = vmatpush.msra.mxu0 0.0
        %2291 = vmatpush.msra.mxu0 0.0
        %2292 = vmatpush.msra.mxu0 0.0
        %2293 = vmatpush.msra.mxu0 0.0
        %2294 = vmatpush.msra.mxu0 %v2277
        %2295 = vmatmul.f32.gmra.mxu0 %v2266
        %v2296 = vpop.f32.mrf.mxu0
        %v2297 = vadd.f32 %v2239, %v2296
        %2298 = vmatmul.f32.gmra.mxu0 %v2268
        %v2299 = vpop.f32.mrf.mxu0
        %v2300 = vadd.f32 %v2239, %v2299
        %2301 = vmatmul.f32.gmra.mxu0 %v2270
        %v2302 = vpop.f32.mrf.mxu0
        %v2303 = vadd.f32 %v2239, %v2302
        %2304 = vmatmul.f32.gmra.mxu0 %v2272
        %v2305 = vpop.f32.mrf.mxu0
        %v2306 = vadd.f32 %v2239, %v2305
        %2307 = vmatmul.f32.gmra.mxu0 %v2274
        %v2308 = vpop.f32.mrf.mxu0
        %v2309 = vadd.f32 %v2239, %v2308
        %2310 = vdwg.mxu0
        %v2311 = vmax.f32 %v2297, 0.0
        %v2312 = vmax.f32 %v2300, 0.0
        %v2313 = vmax.f32 %v2303, 0.0
        %v2314 = vmax.f32 %v2306, 0.0
        %v2315 = vmax.f32 %v2309, 0.0
        %2316 = vxpose.xlu0.b32.start [1/16] %v2311, 128
        %2317 = vxpose.xlu0.b32.cont [2/16] %v2312, 128
        %2318 = vxpose.xlu0.b32.cont [3/16] %v2313, 128
        %2319 = vxpose.xlu0.b32.cont [4/16] %v2314, 128
        %2320 = vxpose.xlu0.b32.cont [5/16] %v2315, 128
        %2321 = vxpose.xlu0.b32.cont [6/16] 0.0, 128
        %2322 = vxpose.xlu0.b32.cont [7/16] 0.0, 128
        %2323 = vxpose.xlu0.b32.cont [8/16] 0.0, 128
        %2324 = vxpose.xlu0.b32.cont [9/16] 0.0, 128
        %2325 = vxpose.xlu0.b32.cont [10/16] 0.0, 128
        %2326 = vxpose.xlu0.b32.cont [11/16] 0.0, 128
        %2327 = vxpose.xlu0.b32.cont [12/16] 0.0, 128
        %2328 = vxpose.xlu0.b32.cont [13/16] 0.0, 128
        %2329 = vxpose.xlu0.b32.cont [14/16] 0.0, 128
        %2330 = vxpose.xlu0.b32.cont [15/16] 0.0, 128
        %2331 = vxpose.xlu0.b32.end [16/16] 0.0, 128
        %v2332 = vpop.trf.xlu0
        %v2333 = vpop.trf.xlu0
        %v2334 = vpop.trf.xlu0
        %v2335 = vpop.trf.xlu0
        %v2336 = vpop.trf.xlu0
        %v2337 = vpop.trf.xlu0
        %v2338 = vpop.trf.xlu0
        %v2339 = vpop.trf.xlu0
        %v2340 = vpop.trf.xlu0
        %v2341 = vpop.trf.xlu0
        %v2342 = vpop.trf.xlu0
        %v2343 = vpop.trf.xlu0
        %v2344 = vpop.trf.xlu0
        %v2345 = vpop.trf.xlu0
        %v2346 = vpop.trf.xlu0
        %v2347 = vpop.trf.xlu0
        %v2348 = vld [vmem:[%s9] sm:$0xff]
        %v2349 = vld [vmem:[%s9 + $0x8] sm:$0xff]
        %v2350 = vld [vmem:[%s9 + $0x10] sm:$0xff]
        %v2351 = vld [vmem:[%s9 + $0x18] sm:$0xff]
        %v2352 = vld [vmem:[%s9 + $0x20] sm:$0xf]
        %v2353 = vld [vmem:[%s10] sm:$0x1]
        %v2355 = vperm.slane %v2353, 0
        %vm2357 = vcmask 293888
        %v2359 = vsel %vm2357, %v2332, 0
        %v2362 = vsel %vm2357, %v2333, 0
        %v2365 = vsel %vm1903, %v2352, 0
        %2367 = vmatpush.msra.mxu0 0.0
        %2368 = vmatpush.msra.mxu0 0.0
        %2369 = vmatpush.msra.mxu0 0.0
        %2370 = vmatpush.msra.mxu0 0.0
        %2371 = vmatpush.msra.mxu0 0.0
        %2372 = vmatpush.msra.mxu0 0.0
        %2373 = vmatpush.msra.mxu0 0.0
        %2374 = vmatpush.msra.mxu0 0.0
        %2375 = vmatpush.msra.mxu0 0.0
        %2376 = vmatpush.msra.mxu0 0.0
        %2377 = vmatpush.msra.mxu0 0.0
        %2378 = vmatpush.msra.mxu0 %v2365
        %2379 = vmatpush.msra.mxu0 %v2351
        %2380 = vmatpush.msra.mxu0 %v2350
        %2381 = vmatpush.msra.mxu0 %v2349
        %2382 = vmatpush.msra.mxu0 %v2348
        %2383 = vmatmul.f32.gmra.mxu0 %v2359
        %v2384 = vpop.f32.mrf.mxu0
        %v2385 = vadd.f32 %v2355, %v2384
        %2386 = vmatmul.f32.gmra.mxu0 %v2362
        %v2387 = vpop.f32.mrf.mxu0
        %v2388 = vadd.f32 %v2355, %v2387
        %2389 = vdwg.mxu0
        %v2390 = vmax.f32 %v2385, 0.0
        %v2391 = vmax.f32 %v2388, 0.0
        %2392 = vxpose.xlu0.b32.start [1/16] %v2390, 128
        %2393 = vxpose.xlu0.b32.cont [2/16] %v2391, 128
        %2394 = vxpose.xlu0.b32.cont [3/16] 0.0, 128
        %2395 = vxpose.xlu0.b32.cont [4/16] 0.0, 128
        %2396 = vxpose.xlu0.b32.cont [5/16] 0.0, 128
        %2397 = vxpose.xlu0.b32.cont [6/16] 0.0, 128
        %2398 = vxpose.xlu0.b32.cont [7/16] 0.0, 128
        %2399 = vxpose.xlu0.b32.cont [8/16] 0.0, 128
        %2400 = vxpose.xlu0.b32.cont [9/16] 0.0, 128
        %2401 = vxpose.xlu0.b32.cont [10/16] 0.0, 128
        %2402 = vxpose.xlu0.b32.cont [11/16] 0.0, 128
        %2403 = vxpose.xlu0.b32.cont [12/16] 0.0, 128
        %2404 = vxpose.xlu0.b32.cont [13/16] 0.0, 128
        %2405 = vxpose.xlu0.b32.cont [14/16] 0.0, 128
        %2406 = vxpose.xlu0.b32.cont [15/16] 0.0, 128
        %2407 = vxpose.xlu0.b32.end [16/16] 0.0, 128
        %v2408 = vpop.trf.xlu0
        %v2409 = vpop.trf.xlu0
        %v2410 = vpop.trf.xlu0
        %v2411 = vpop.trf.xlu0
        %v2412 = vpop.trf.xlu0
        %v2413 = vpop.trf.xlu0
        %v2414 = vpop.trf.xlu0
        %v2415 = vpop.trf.xlu0
        %v2416 = vpop.trf.xlu0
        %v2417 = vpop.trf.xlu0
        %v2418 = vpop.trf.xlu0
        %v2419 = vpop.trf.xlu0
        %v2420 = vpop.trf.xlu0
        %v2421 = vpop.trf.xlu0
        %v2422 = vpop.trf.xlu0
        %v2423 = vpop.trf.xlu0
        %v2424 = vld [vmem:[%s11] sm:$0xff]
        %v2425 = vld [vmem:[%s11 + $0x8] sm:$0xff]
        %v2426 = vld [vmem:[%s12] sm:$0x1]
        %v2428 = vperm.slane %v2426, 0
        %vm2430 = vcmask 130048
        %v2432 = vsel %vm2430, %v2408, 0
        %2434 = vmatpush.msra.mxu0 0.0
        %2435 = vmatpush.msra.mxu0 0.0
        %2436 = vmatpush.msra.mxu0 0.0
        %2437 = vmatpush.msra.mxu0 0.0
        %2438 = vmatpush.msra.mxu0 0.0
        %2439 = vmatpush.msra.mxu0 0.0
        %2440 = vmatpush.msra.mxu0 0.0
        %2441 = vmatpush.msra.mxu0 0.0
        %2442 = vmatpush.msra.mxu0 0.0
        %2443 = vmatpush.msra.mxu0 0.0
        %2444 = vmatpush.msra.mxu0 0.0
        %2445 = vmatpush.msra.mxu0 0.0
        %2446 = vmatpush.msra.mxu0 0.0
        %2447 = vmatpush.msra.mxu0 0.0
        %2448 = vmatpush.msra.mxu0 %v2425
        %2449 = vmatpush.msra.mxu0 %v2424
        %2450 = vmatmul.f32.gmra.mxu0 %v2432
        %v2451 = vpop.f32.mrf.mxu0
        %v2452 = vadd.f32 %v2428, %v2451
        %2453 = vdwg.mxu0
        %v2454 = vld [vmem:[%s13] sm:$0xff]
        %2456 = vset.pattern.permute.xlu0 0
        %2457 = vperm.xlu0 %2456, %v2454
        %v2458 = vpop.permute.xlu0 %2457
        %v2460 = vmul.f32 %v2452, %v2458
        %v2461 = vld [vmem:[%s14] sm:$0xff]
        %2463 = vset.pattern.permute.xlu0 0
        %2464 = vperm.xlu0 %2463, %v2461
        %v2465 = vpop.permute.xlu0 %2464
        %v2467 = vadd.f32 %v2460, %v2465
        %v2468 = vmax.f32 %v2467, 0.0
        %2469 = vxpose.xlu0.b32.start [1/16] %v2468, 128
        %2470 = vxpose.xlu0.b32.cont [2/16] 0.0, 128
        %2471 = vxpose.xlu0.b32.cont [3/16] 0.0, 128
        %2472 = vxpose.xlu0.b32.cont [4/16] 0.0, 128
        %2473 = vxpose.xlu0.b32.cont [5/16] 0.0, 128
        %2474 = vxpose.xlu0.b32.cont [6/16] 0.0, 128
        %2475 = vxpose.xlu0.b32.cont [7/16] 0.0, 128
        %2476 = vxpose.xlu0.b32.cont [8/16] 0.0, 128
        %2477 = vxpose.xlu0.b32.cont [9/16] 0.0, 128
        %2478 = vxpose.xlu0.b32.cont [10/16] 0.0, 128
        %2479 = vxpose.xlu0.b32.cont [11/16] 0.0, 128
        %2480 = vxpose.xlu0.b32.cont [12/16] 0.0, 128
        %2481 = vxpose.xlu0.b32.cont [13/16] 0.0, 128
        %2482 = vxpose.xlu0.b32.cont [14/16] 0.0, 128
        %2483 = vxpose.xlu0.b32.cont [15/16] 0.0, 128
        %2484 = vxpose.xlu0.b32.end [16/16] 0.0, 128
        %v2485 = vpop.trf.xlu0
        %v2486 = vpop.trf.xlu0
        %v2487 = vpop.trf.xlu0
        %v2488 = vpop.trf.xlu0
        %v2489 = vpop.trf.xlu0
        %v2490 = vpop.trf.xlu0
        %v2491 = vpop.trf.xlu0
        %v2492 = vpop.trf.xlu0
        %v2493 = vpop.trf.xlu0
        %v2494 = vpop.trf.xlu0
        %v2495 = vpop.trf.xlu0
        %v2496 = vpop.trf.xlu0
        %v2497 = vpop.trf.xlu0
        %v2498 = vpop.trf.xlu0
        %v2499 = vpop.trf.xlu0
        %v2500 = vpop.trf.xlu0
        %vm2501 = vcmask 64512
        %2502 = vst.msk [vmem:[#allocation4] sm:$0xff] %vm2501, %v2214
        %2503 = vst.msk [vmem:[#allocation4 + $0x8] sm:$0xff] %vm2501, %v2215
        %2504 = vst.msk [vmem:[#allocation4 + $0x10] sm:$0xff] %vm2501, %v2216
        %2505 = vst.msk [vmem:[#allocation4 + $0x18] sm:$0xff] %vm2501, %v2485
        %v2506 = vld [vmem:[#allocation4] sm:$0xff]
        %v2507 = vld [vmem:[#allocation4 + $0x8] sm:$0xff]
        %v2508 = vld [vmem:[#allocation4 + $0x10] sm:$0xff]
        %v2509 = vld [vmem:[#allocation4 + $0x18] sm:$0xff]
        %v2510 = vld [vmem:[%s19] sm:$0xff]
        %v2511 = vld [vmem:[%s20] sm:$0x1]
        %v2513 = vperm.slane %v2511, 0
        %v2516 = vsel %vm2501, %v2506, 0
        %v2519 = vsel %vm2501, %v2507, 0
        %v2522 = vsel %vm2501, %v2508, 0
        %v2525 = vsel %vm2501, %v2509, 0
        %2527 = vmatpush.msra.mxu0 0.0
        %2528 = vmatpush.msra.mxu0 0.0
        %2529 = vmatpush.msra.mxu0 0.0
        %2530 = vmatpush.msra.mxu0 0.0
        %2531 = vmatpush.msra.mxu0 0.0
        %2532 = vmatpush.msra.mxu0 0.0
        %2533 = vmatpush.msra.mxu0 0.0
        %2534 = vmatpush.msra.mxu0 0.0
        %2535 = vmatpush.msra.mxu0 0.0
        %2536 = vmatpush.msra.mxu0 0.0
        %2537 = vmatpush.msra.mxu0 0.0
        %2538 = vmatpush.msra.mxu0 0.0
        %2539 = vmatpush.msra.mxu0 0.0
        %2540 = vmatpush.msra.mxu0 0.0
        %2541 = vmatpush.msra.mxu0 0.0
        %2542 = vmatpush.msra.mxu0 %v2510
        %2543 = vmatmul.f32.gmra.mxu0 %v2516
        %v2544 = vpop.f32.mrf.mxu0
        %v2545 = vadd.f32 %v2513, %v2544
        %2546 = vmatmul.f32.gmra.mxu0 %v2519
        %v2547 = vpop.f32.mrf.mxu0
        %v2548 = vadd.f32 %v2513, %v2547
        %2549 = vmatmul.f32.gmra.mxu0 %v2522
        %v2550 = vpop.f32.mrf.mxu0
        %v2551 = vadd.f32 %v2513, %v2550
        %2552 = vmatmul.f32.gmra.mxu0 %v2525
        %v2553 = vpop.f32.mrf.mxu0
        %v2554 = vadd.f32 %v2513, %v2553
        %2555 = vdwg.mxu0
        %v2556 = vld [vmem:[%s21] sm:$0xff]
        %v2557 = vld [vmem:[%s21 + $0x8] sm:$0xff]
        %v2558 = vld [vmem:[%s21 + $0x10] sm:$0xff]
        %v2559 = vld [vmem:[%s21 + $0x18] sm:$0xff]
        %2561 = vset.pattern.permute.xlu0 0
        %2562 = vperm.xlu0 %2561, %v2556
        %v2563 = vpop.permute.xlu0 %2562
        %2566 = vset.pattern.permute.xlu0 0
        %2567 = vperm.xlu0 %2566, %v2557
        %v2568 = vpop.permute.xlu0 %2567
        %2571 = vset.pattern.permute.xlu0 0
        %2572 = vperm.xlu0 %2571, %v2558
        %v2573 = vpop.permute.xlu0 %2572
        %2576 = vset.pattern.permute.xlu0 0
        %2577 = vperm.xlu0 %2576, %v2559
        %v2578 = vpop.permute.xlu0 %2577
        %v2580 = vmul.f32 %v2545, %v2563
        %v2581 = vmul.f32 %v2548, %v2568
        %v2582 = vmul.f32 %v2551, %v2573
        %v2583 = vmul.f32 %v2554, %v2578
        %v2584 = vld [vmem:[%s22] sm:$0xff]
        %v2585 = vld [vmem:[%s22 + $0x8] sm:$0xff]
        %v2586 = vld [vmem:[%s22 + $0x10] sm:$0xff]
        %v2587 = vld [vmem:[%s22 + $0x18] sm:$0xff]
        %2589 = vset.pattern.permute.xlu0 0
        %2590 = vperm.xlu0 %2589, %v2584
        %v2591 = vpop.permute.xlu0 %2590
        %2594 = vset.pattern.permute.xlu0 0
        %2595 = vperm.xlu0 %2594, %v2585
        %v2596 = vpop.permute.xlu0 %2595
        %2599 = vset.pattern.permute.xlu0 0
        %2600 = vperm.xlu0 %2599, %v2586
        %v2601 = vpop.permute.xlu0 %2600
        %2604 = vset.pattern.permute.xlu0 0
        %2605 = vperm.xlu0 %2604, %v2587
        %v2606 = vpop.permute.xlu0 %2605
        %v2608 = vadd.f32 %v2580, %v2591
        %v2609 = vadd.f32 %v2581, %v2596
        %v2610 = vadd.f32 %v2582, %v2601
        %v2611 = vadd.f32 %v2583, %v2606
        %v2612 = vmax.f32 %v2608, 0.0
        %v2613 = vmax.f32 %v2609, 0.0
        %v2614 = vmax.f32 %v2610, 0.0
        %v2615 = vmax.f32 %v2611, 0.0
        %2616 = vxpose.xlu0.b32.start [1/16] %v2612, 128
        %2617 = vxpose.xlu0.b32.cont [2/16] %v2613, 128
        %2618 = vxpose.xlu0.b32.cont [3/16] %v2614, 128
        %2619 = vxpose.xlu0.b32.cont [4/16] %v2615, 128
        %2620 = vxpose.xlu0.b32.cont [5/16] 0.0, 128
        %2621 = vxpose.xlu0.b32.cont [6/16] 0.0, 128
        %2622 = vxpose.xlu0.b32.cont [7/16] 0.0, 128
        %2623 = vxpose.xlu0.b32.cont [8/16] 0.0, 128
        %2624 = vxpose.xlu0.b32.cont [9/16] 0.0, 128
        %2625 = vxpose.xlu0.b32.cont [10/16] 0.0, 128
        %2626 = vxpose.xlu0.b32.cont [11/16] 0.0, 128
        %2627 = vxpose.xlu0.b32.cont [12/16] 0.0, 128
        %2628 = vxpose.xlu0.b32.cont [13/16] 0.0, 128
        %2629 = vxpose.xlu0.b32.cont [14/16] 0.0, 128
        %2630 = vxpose.xlu0.b32.cont [15/16] 0.0, 128
        %2631 = vxpose.xlu0.b32.end [16/16] 0.0, 128
        %v2632 = vpop.trf.xlu0
        %v2633 = vpop.trf.xlu0
        %v2634 = vpop.trf.xlu0
        %v2635 = vpop.trf.xlu0
        %v2636 = vpop.trf.xlu0
        %v2637 = vpop.trf.xlu0
        %v2638 = vpop.trf.xlu0
        %v2639 = vpop.trf.xlu0
        %v2640 = vpop.trf.xlu0
        %v2641 = vpop.trf.xlu0
        %v2642 = vpop.trf.xlu0
        %v2643 = vpop.trf.xlu0
        %v2644 = vpop.trf.xlu0
        %v2645 = vpop.trf.xlu0
        %v2646 = vpop.trf.xlu0
        %v2647 = vpop.trf.xlu0
        %v2648 = vld [vmem:[%s23] sm:$0xff]
        %v2649 = vld [vmem:[%s23 + $0x8] sm:$0xff]
        %v2650 = vld [vmem:[%s23 + $0x10] sm:$0xff]
        %v2651 = vld [vmem:[%s23 + $0x18] sm:$0xff]
        %v2652 = vld [vmem:[%s24] sm:$0x1]
        %v2654 = vperm.slane %v2652, 0
        %vm2656 = vcmask 261120
        %v2658 = vsel %vm2656, %v2632, 0
        %v2661 = vsel %vm2656, %v2633, 0
        %2663 = vmatpush.msra.mxu0 0.0
        %2664 = vmatpush.msra.mxu0 0.0
        %2665 = vmatpush.msra.mxu0 0.0
        %2666 = vmatpush.msra.mxu0 0.0
        %2667 = vmatpush.msra.mxu0 0.0
        %2668 = vmatpush.msra.mxu0 0.0
        %2669 = vmatpush.msra.mxu0 0.0
        %2670 = vmatpush.msra.mxu0 0.0
        %2671 = vmatpush.msra.mxu0 0.0
        %2672 = vmatpush.msra.mxu0 0.0
        %2673 = vmatpush.msra.mxu0 0.0
        %2674 = vmatpush.msra.mxu0 0.0
        %2675 = vmatpush.msra.mxu0 %v2651
        %2676 = vmatpush.msra.mxu0 %v2650
        %2677 = vmatpush.msra.mxu0 %v2649
        %2678 = vmatpush.msra.mxu0 %v2648
        %2679 = vmatmul.f32.gmra.mxu0 %v2658
        %v2680 = vpop.f32.mrf.mxu0
        %v2681 = vadd.f32 %v2654, %v2680
        %2682 = vmatmul.f32.gmra.mxu0 %v2661
        %v2683 = vpop.f32.mrf.mxu0
        %v2684 = vadd.f32 %v2654, %v2683
        %2685 = vdwg.mxu0
        %v2686 = vmul.f32 %v2681, %v872
        %v2687 = vmul.f32 %v2684, %v872
        %v2688 = vadd.f32 %v2686, %v829
        %v2689 = vadd.f32 %v2687, %v829
        %2690 = vst.msk [vmem:[%s797] sm:$0xff] %vm804, %v2688
        %vm2691 = vcmask 35840
        %2692 = vst.msk [vmem:[%s797 + $0x8] sm:$0xf] %vm2691, %v2689
        %p2693 = scmp.lt.s32.totalorder %s39, 1
        %s2694 = scalar_select %p2693, %s39, 1
        %s2695 = smul.addr %s2694, 2
        %s2696 = smul.addr %s2695, 8
        %s2697 = scalar_lea.vmem %s25, %s2696
        // Predicated region
        $region125: #{light_time_forward.1} parent=119 // pred_check
          %p2698 = pneg %p592
        $region126: #{light_time_forward.1} parent=119 // pred_check_branch
          %2700 = sbr.rel (%p2698) target = $region128
        $region127: #{light_time_forward.1} parent=119 // pred_region
          _
        $region128: #{light_time_forward.1} parent=119 // pred_fallthru
          _
      $region120: #{light_time_forward.1} parent=5 // pred_fallthru
        _
      %p2701 = scmp.le.s32.totalorder 2, %s34
      // Predicated region
      $region129: #{light_time_forward.1} parent=5 // pred_check
        %p2702 = pneg %p2701
      $region130: #{light_time_forward.1} parent=5 // pred_check_branch
        %2704 = sbr.rel (%p2702) target = $region132
      $region131: #{light_time_forward.1} parent=5 // pred_region
        %s2705 = ssub.s32 %s34, 2
        // Predicated region
        $region133: #{light_time_forward.1} parent=131 // pred_check
          %p2706 = pneg %p598
        $region134: #{light_time_forward.1} parent=131 // pred_check_branch
          %2708 = sbr.rel (%p2706) target = $region136
        $region135: #{light_time_forward.1} parent=131 // pred_region
          %p2709 = scmp.lt.s32.totalorder %s40, 1
          %s2710 = scalar_select %p2709, %s40, 1
          %s2711 = smul.addr %s2710, 2
          %s2712 = smul.addr %s2711, 8
          %s2713 = scalar_lea.vmem %s25, %s2712
        $region136: #{light_time_forward.1} parent=131 // pred_fallthru
          _
      $region132: #{light_time_forward.1} parent=5 // pred_fallthru
        _
    $region6: #{light_time_forward.1} parent=1 // loop_footer
      %s38 = sadd.s32 1, %s34
    $region7: #{light_time_forward.1} parent=1 // loop_footer_branch
      %33 = sbr.rel target = $region3
    $region8: #{light_time_forward.1} parent=1 // loop_exit
      _
    %2714 = vsyncpa [#allocation7], 1
    %s2715 = scalar_lea.sflag [#allocation7], 1
    %2716 = vsyncpa %s2715, 1

</llo_original>
